<compile_context>
chip_gen: v7x
topology: tpu7x:2x2x1
jax: 0.10.0
libtpu: 0.0.40
codegen_flags: <defaults>
</compile_context>

<pallas_src>
import jax
import jax.numpy as jnp
from jax import lax
from jax.experimental import pallas as pl
from jax.experimental.pallas import tpu as pltpu

S, E, H, T = 8, 32, 16, 5            # seq_len, embedding_dim, hidden_dim//2, tagset_size
HD = 2 * H                           # hidden_dim = 32 (also the fused fwd|bwd gate width)
G8 = 8 * H                           # 4 gates * 2 directions * H = 128 lanes
START, STOP = 3, 4                   # tag_to_ix['<START>'], tag_to_ix['<STOP>']
NEG = -10000.0

_VMEM = pl.BlockSpec(memory_space=pltpu.MemorySpace.VMEM)


def bilstm_crf_kernel(x_ref, w0_ref, w1_ref, whh0_ref, whh1_ref,
                      b0_ref, b1_ref, wt_ref, bt_ref, trans_ref, transT_ref,
                      path_ref, score_ref):
    f32, bf16 = jnp.float32, jnp.bfloat16

    # ------------------------- hoisted loads (read once) ------------------------------
    x_cat = x_ref[...].astype(bf16)          # (S, 2E) = [x | x reversed]
    whh0 = whh0_ref[...]                     # (HD, G8) bf16, block-diagonal fwd/bwd
    whh1 = whh1_ref[...]                     # (HD, G8) bf16
    trans = trans_ref[...]                   # (T, T) f32: trans[next, prev]
    transT = transT_ref[...]                 # (T, T) f32: trans[next, prev] transposed

    # Constant row/lane selection masks for register accumulation (fold at compile time).
    def masks_for(width):
        rows = lax.broadcasted_iota(jnp.int32, (S, width), 0)
        lanes = lax.broadcasted_iota(jnp.int32, (S, width), 1)
        ms = []
        for i in range(S):
            j = S - 1 - i
            if width == HD:      # time-ordered output:   row i <- hf_i, row j <- hb_i
                m = ((rows == i) & (lanes < H)) | ((rows == j) & (lanes >= H))
            else:                # [out | out reversed]:  lanes 0:2H fwd-order, 2H:4H rev
                m = (((rows == i) & ((lanes < H) | (lanes >= 3 * H))) |
                     ((rows == j) & (lanes >= H) & (lanes < 3 * H)))
            ms.append(m)
        return ms

    def run_layer(pre, whh_bd, width, masks):
        # pre: (S, G8) f32 — row i holds the fwd pre-activation for time i in the fwd
        # gate lanes and the bwd pre-activation for time S-1-i in the bwd gate lanes.
        # Gate lanes: [i (2H) | f (2H) | g (2H) | o (2H)], each as [fwd H | bwd H].
        h = jnp.zeros((1, HD), f32)          # [h_fwd | h_bwd]
        c = jnp.zeros((1, HD), f32)
        acc = jnp.zeros((S, width), f32)
        for i in range(S):
            # ONE fused (1,2H)x(2H,8H) recurrent matmul: both directions, all gates.
            z = pre[i:i + 1, :] + jnp.dot(h.astype(bf16), whh_bd,
                                          preferred_element_type=f32)      # (1, G8)
            sg = jax.nn.sigmoid(z)           # one batched sigmoid over all gate lanes
            tg = jnp.tanh(z)                 # one batched tanh (only g-gate lanes used)
            c = sg[:, HD:2 * HD] * c + sg[:, 0:HD] * tg[:, 2 * HD:3 * HD]
            h = sg[:, 3 * HD:4 * HD] * jnp.tanh(c)
            hrep = h if width == HD else jnp.concatenate([h, h], axis=1)
            acc = jnp.where(masks[i], hrep, acc)     # register accumulation, no stores
        return acc

    # ------------------------- layer 0 -------------------------------------------------
    pre0 = jnp.dot(x_cat, w0_ref[...], preferred_element_type=f32) + b0_ref[...]   # (S,G8)
    m0 = run_layer(pre0, whh0, 2 * HD, masks_for(2 * HD))   # (S,4H) = [out0 | out0 reversed]

    # ------------------------- layer 1 -------------------------------------------------
    pre1 = jnp.dot(m0.astype(bf16), w1_ref[...], preferred_element_type=f32) + b1_ref[...]
    out1 = run_layer(pre1, whh1, HD, masks_for(HD))         # (S, 2H), time ordered

    # ------------------------- hidden2tag ---------------------------------------------
    feats = (jnp.dot(out1.astype(bf16), wt_ref[...], preferred_element_type=f32)
             + bt_ref[...])                                  # (S, T) f32

    # ---------------- Viterbi forward: alternating row/column orientation -------------
    lane_TT = lax.broadcasted_iota(jnp.int32, (T, T), 1)
    sub_TT = lax.broadcasted_iota(jnp.int32, (T, T), 0)
    eye_TT = lane_TT == sub_TT
    lane_1T = lax.broadcasted_iota(jnp.int32, (1, T), 1)
    sub_T1 = lax.broadcasted_iota(jnp.int32, (T, 1), 0)
    lane_1S = lax.broadcasted_iota(jnp.int32, (1, S), 1)
    lane_TT_f = lane_TT.astype(f32)
    sub_TT_f = sub_TT.astype(f32)
    lane_1T_f = lane_1T.astype(f32)
    Tf = float(T)

    # Column-form emission scores needed at even steps (independent of fv -> off chain).
    featcols = {t: jnp.sum(jnp.where(eye_TT, feats[t:t + 1, :], 0.0),
                           axis=1, keepdims=True) for t in range(0, S, 2)}

    fv = jnp.where(lane_1T == START, 0.0, NEG).astype(f32)   # row (1,T), lane = tag
    bps = []
    for t in range(S):
        if t % 2 == 0:
            # fv is a row (lanes = prev): reduce over lanes, result is a column.
            ntv = fv + trans                                          # (T,T)[next, prev]
            m_c = jnp.max(ntv, axis=1, keepdims=True)                 # (T, 1)
            bp = jnp.min(jnp.where(ntv == m_c, lane_TT_f, Tf),
                         axis=1, keepdims=True).astype(jnp.int32)     # (T, 1) first-argmax
            fv = m_c + featcols[t]                                    # column (T, 1)
            bps.append((bp, False))                                   # column oriented
        else:
            # fv is a column (sublanes = prev): reduce over sublanes, result is a row.
            ntvT = fv + transT                                        # (T,T)[prev, next]
            m_r = jnp.max(ntvT, axis=0, keepdims=True)                # (1, T)
            bp = jnp.min(jnp.where(ntvT == m_r, sub_TT_f, Tf),
                         axis=0, keepdims=True).astype(jnp.int32)     # (1, T)
            fv = m_r + feats[t:t + 1, :]                              # row (1, T)
            bps.append((bp, True))                                    # row oriented

    # S is even -> fv ends as a row.
    term = fv + trans[STOP:STOP + 1, :]                               # (1, T)
    score = jnp.max(term, axis=1, keepdims=True)                      # (1, 1) = path score
    best = jnp.min(jnp.where(term == score, lane_1T_f, Tf),
                   axis=1, keepdims=True).astype(jnp.int32)           # (1, 1)

    # ---------------- Viterbi backtrack fully in-kernel (one-hot index chasing) -------
    path = jnp.where(lane_1S == (S - 1), best, 0)                     # (1, S) int32
    cur = best
    for t in range(S - 1, 0, -1):
        bp, is_row = bps[t]
        if is_row:
            prev = jnp.sum(jnp.where(lane_1T == cur, bp, 0), axis=1, keepdims=True)
        else:
            prev = jnp.sum(jnp.where(sub_T1 == cur, bp, 0), axis=0, keepdims=True)
        path = jnp.where(lane_1S == (t - 1), prev, path)
        cur = prev

    path_ref[...] = path
    score_ref[...] = score


def pack_params(wih_l, whh_l, bih_l, bhh_l, wtag, btag, trans):
    """One-time packing of PyTorch-layout LSTM/CRF weights (hoisted out of per-call jit).

    Gate lanes are ordered [i_f,i_b | f_f,f_b | g_f,g_b | o_f,o_b] so each fused gate is
    one contiguous 2H slice aligned with the concatenated [fwd|bwd] h/c state, and the
    fwd/bwd weight blocks are laid out block-diagonally so one matmul serves both
    directions.
    """
    bf16 = jnp.bfloat16

    def pack_dir_pair(wf, wb):
        # wf/wb: PyTorch (4H, in) weight for fwd/bwd direction -> (2*in, 8H) block-diag.
        wfT, wbT = wf.T, wb.T                                  # (in, 4H), gate cols i,f,g,o
        zf = jnp.zeros((wfT.shape[0], H), jnp.float32)
        zb = jnp.zeros((wbT.shape[0], H), jnp.float32)
        top = jnp.concatenate([blk for g in range(4)
                               for blk in (wfT[:, g * H:(g + 1) * H], zf)], axis=1)
        bot = jnp.concatenate([blk for g in range(4)
                               for blk in (zb, wbT[:, g * H:(g + 1) * H])], axis=1)
        return jnp.concatenate([top, bot], axis=0)             # (2*in, 8H)

    def pack_bias_pair(bf, bb):                                # (4H,),(4H,) -> (1, 8H)
        return jnp.concatenate([blk for g in range(4)
                                for blk in (bf[g * H:(g + 1) * H],
                                            bb[g * H:(g + 1) * H])])[None, :]

    w0 = pack_dir_pair(wih_l[0], wih_l[1]).astype(bf16)        # (2E, 8H)
    w1 = pack_dir_pair(wih_l[2], wih_l[3]).astype(bf16)        # (4H, 8H)
    whh0 = pack_dir_pair(whh_l[0], whh_l[1]).astype(bf16)      # (2H, 8H)
    whh1 = pack_dir_pair(whh_l[2], whh_l[3]).astype(bf16)      # (2H, 8H)
    b0 = pack_bias_pair(bih_l[0] + bhh_l[0], bih_l[1] + bhh_l[1]).astype(jnp.float32)
    b1 = pack_bias_pair(bih_l[2] + bhh_l[2], bih_l[3] + bhh_l[3]).astype(jnp.float32)
    wt = wtag.T.astype(bf16)                                   # (2H, T)
    bt = btag[None, :].astype(jnp.float32)                     # (1, T)
    return (w0, w1, whh0, whh1, b0, b1, wt, bt,
            trans.astype(jnp.float32), trans.T.astype(jnp.float32))


@jax.jit
def bilstm_crf_forward(x, packed):
    """Equivalent of BiLSTM_CRF.forward(sentence) -> (path_score, best_path).

    x      : (S, 1, E) sentence embeddings (seq-major, batch=1), as nn.LSTM expects
    packed : output of pack_params(...) (weights pre-packed once, outside the hot path)
    """
    x2 = x.reshape(S, E)
    x_cat = jnp.concatenate([x2, x2[::-1]], axis=1)            # (S, 2E): fwd | reversed
    path2, score2 = pl.pallas_call(
        bilstm_crf_kernel,
        out_shape=(jax.ShapeDtypeStruct((1, S), jnp.int32),    # best path (tags)
                   jax.ShapeDtypeStruct((1, 1), jnp.float32)), # path score
        in_specs=[_VMEM] * 11,
        out_specs=(_VMEM, _VMEM),
    )(x_cat, *packed)
    return score2[0, 0], path2[0]


if __name__ == "__main__":
    key = jax.random.PRNGKey(0)
    ks = jax.random.split(key, 20)
    x = jax.random.normal(ks[0], (S, 1, E), jnp.float32)   # pssm: (seq_len, 1, embedding_dim)

    s_lstm = 1.0 / (H ** 0.5)
    in_dims = (E, E, HD, HD)        # layer-0 fwd/bwd see E; layer-1 fwd/bwd see 2H
    wih_l = tuple(jax.random.normal(ks[1 + d], (4 * H, in_dims[d]), jnp.float32) * s_lstm
                  for d in range(4))
    whh_l = tuple(jax.random.normal(ks[5 + d], (4 * H, H), jnp.float32) * s_lstm
                  for d in range(4))
    bih_l = tuple(jax.random.normal(ks[9 + d], (4 * H,), jnp.float32) * s_lstm
                  for d in range(4))
    bhh_l = tuple(jax.random.normal(ks[13 + d], (4 * H,), jnp.float32) * s_lstm
                  for d in range(4))
    wtag = jax.random.normal(ks[17], (T, HD), jnp.float32) * (1.0 / (HD ** 0.5))
    btag = jax.random.normal(ks[18], (T,), jnp.float32) * 0.1
    trans = jax.random.normal(ks[19], (T, T), jnp.float32)
    trans = trans.at[START, :].set(NEG)     # never transition to START
    trans = trans.at[:, STOP].set(NEG)      # never transition from STOP

    packed = pack_params(wih_l, whh_l, bih_l, bhh_l, wtag, btag, trans)
    score, path = bilstm_crf_forward(x, packed)
    score = jax.block_until_ready(score)
    path = jax.block_until_ready(path)

    assert path.shape == (S,)
    assert bool(jnp.isfinite(score))
    assert bool(jnp.all((path >= 0) & (path < T)))
    print("KERNEL_OK")
</pallas_src>

<mosaic_0001>
module attributes {stable_mosaic.version = 11 : i64} {
  func.func @bilstm_crf_kernel(%arg0: memref<8x64xf32, #tpu.memory_space<vmem>>, %arg1: memref<64x128xbf16, #tpu.memory_space<vmem>>, %arg2: memref<64x128xbf16, #tpu.memory_space<vmem>>, %arg3: memref<32x128xbf16, #tpu.memory_space<vmem>>, %arg4: memref<32x128xbf16, #tpu.memory_space<vmem>>, %arg5: memref<1x128xf32, #tpu.memory_space<vmem>>, %arg6: memref<1x128xf32, #tpu.memory_space<vmem>>, %arg7: memref<32x5xbf16, #tpu.memory_space<vmem>>, %arg8: memref<1x5xf32, #tpu.memory_space<vmem>>, %arg9: memref<5x5xf32, #tpu.memory_space<vmem>>, %arg10: memref<5x5xf32, #tpu.memory_space<vmem>>, %arg11: memref<1x8xi32, #tpu.memory_space<vmem>>, %arg12: memref<1x1xf32, #tpu.memory_space<vmem>>) attributes {dimension_semantics = [], scalar_prefetch = 0 : i64, scratch_operands = 0 : i64, tpu.core_type = #tpu.core_type<tc>} {
    %c0 = arith.constant 0 : index
    %c0_0 = arith.constant 0 : index
    %0 = vector.load %arg0[%c0, %c0_0] : memref<8x64xf32, #tpu.memory_space<vmem>>, vector<8x64xf32>
    %1 = arith.truncf %0 : vector<8x64xf32> to vector<8x64xbf16>
    %c0_1 = arith.constant 0 : index
    %c0_2 = arith.constant 0 : index
    %2 = vector.load %arg3[%c0_1, %c0_2] : memref<32x128xbf16, #tpu.memory_space<vmem>>, vector<32x128xbf16>
    %c0_3 = arith.constant 0 : index
    %c0_4 = arith.constant 0 : index
    %3 = vector.load %arg4[%c0_3, %c0_4] : memref<32x128xbf16, #tpu.memory_space<vmem>>, vector<32x128xbf16>
    %c0_5 = arith.constant 0 : index
    %c0_6 = arith.constant 0 : index
    %4 = vector.load %arg9[%c0_5, %c0_6] : memref<5x5xf32, #tpu.memory_space<vmem>>, vector<5x5xf32>
    %c0_7 = arith.constant 0 : index
    %c0_8 = arith.constant 0 : index
    %5 = vector.load %arg10[%c0_7, %c0_8] : memref<5x5xf32, #tpu.memory_space<vmem>>, vector<5x5xf32>
    %c0_9 = arith.constant 0 : index
    %c0_10 = arith.constant 0 : index
    %6 = vector.load %arg1[%c0_9, %c0_10] : memref<64x128xbf16, #tpu.memory_space<vmem>>, vector<64x128xbf16>
    %cst = arith.constant dense<0.000000e+00> : vector<8x128xf32>
    %7 = tpu.matmul %1, %6, %cst {dimension_numbers = #tpu.dot_dimension_numbers<[1], [0], [0], [1], [0, 0, 1, 1], [], []>} : vector<8x64xbf16>, vector<64x128xbf16>, vector<8x128xf32> -> vector<8x128xf32>
    %c0_11 = arith.constant 0 : index
    %c0_12 = arith.constant 0 : index
    %8 = vector.load %arg5[%c0_11, %c0_12] : memref<1x128xf32, #tpu.memory_space<vmem>>, vector<1x128xf32>
    %9 = vector.broadcast %8 : vector<1x128xf32> to vector<8x128xf32>
    %10 = arith.addf %7, %9 : vector<8x128xf32>
    %11 = tpu.iota {dimensions = array<i32: 0>} : vector<8x64xi32>
    %12 = tpu.iota {dimensions = array<i32: 1>} : vector<8x64xi32>
    %c0_i32 = arith.constant 0 : i32
    %13 = vector.broadcast %c0_i32 : i32 to vector<8x64xi32>
    %14 = arith.cmpi eq, %11, %13 : vector<8x64xi32>
    %c16_i32 = arith.constant 16 : i32
    %15 = vector.broadcast %c16_i32 : i32 to vector<8x64xi32>
    %16 = arith.cmpi slt, %12, %15 : vector<8x64xi32>
    %c48_i32 = arith.constant 48 : i32
    %17 = vector.broadcast %c48_i32 : i32 to vector<8x64xi32>
    %18 = arith.cmpi sge, %12, %17 : vector<8x64xi32>
    %19 = arith.ori %16, %18 : vector<8x64xi1>
    %20 = arith.andi %14, %19 : vector<8x64xi1>
    %c7_i32 = arith.constant 7 : i32
    %21 = vector.broadcast %c7_i32 : i32 to vector<8x64xi32>
    %22 = arith.cmpi eq, %11, %21 : vector<8x64xi32>
    %c16_i32_13 = arith.constant 16 : i32
    %23 = vector.broadcast %c16_i32_13 : i32 to vector<8x64xi32>
    %24 = arith.cmpi sge, %12, %23 : vector<8x64xi32>
    %25 = arith.andi %22, %24 : vector<8x64xi1>
    %c48_i32_14 = arith.constant 48 : i32
    %26 = vector.broadcast %c48_i32_14 : i32 to vector<8x64xi32>
    %27 = arith.cmpi slt, %12, %26 : vector<8x64xi32>
    %28 = arith.andi %25, %27 : vector<8x64xi1>
    %29 = arith.ori %20, %28 : vector<8x64xi1>
    %c1_i32 = arith.constant 1 : i32
    %30 = vector.broadcast %c1_i32 : i32 to vector<8x64xi32>
    %31 = arith.cmpi eq, %11, %30 : vector<8x64xi32>
    %c16_i32_15 = arith.constant 16 : i32
    %32 = vector.broadcast %c16_i32_15 : i32 to vector<8x64xi32>
    %33 = arith.cmpi slt, %12, %32 : vector<8x64xi32>
    %c48_i32_16 = arith.constant 48 : i32
    %34 = vector.broadcast %c48_i32_16 : i32 to vector<8x64xi32>
    %35 = arith.cmpi sge, %12, %34 : vector<8x64xi32>
    %36 = arith.ori %33, %35 : vector<8x64xi1>
    %37 = arith.andi %31, %36 : vector<8x64xi1>
    %c6_i32 = arith.constant 6 : i32
    %38 = vector.broadcast %c6_i32 : i32 to vector<8x64xi32>
    %39 = arith.cmpi eq, %11, %38 : vector<8x64xi32>
    %c16_i32_17 = arith.constant 16 : i32
    %40 = vector.broadcast %c16_i32_17 : i32 to vector<8x64xi32>
    %41 = arith.cmpi sge, %12, %40 : vector<8x64xi32>
    %42 = arith.andi %39, %41 : vector<8x64xi1>
    %c48_i32_18 = arith.constant 48 : i32
    %43 = vector.broadcast %c48_i32_18 : i32 to vector<8x64xi32>
    %44 = arith.cmpi slt, %12, %43 : vector<8x64xi32>
    %45 = arith.andi %42, %44 : vector<8x64xi1>
    %46 = arith.ori %37, %45 : vector<8x64xi1>
    %c2_i32 = arith.constant 2 : i32
    %47 = vector.broadcast %c2_i32 : i32 to vector<8x64xi32>
    %48 = arith.cmpi eq, %11, %47 : vector<8x64xi32>
    %c16_i32_19 = arith.constant 16 : i32
    %49 = vector.broadcast %c16_i32_19 : i32 to vector<8x64xi32>
    %50 = arith.cmpi slt, %12, %49 : vector<8x64xi32>
    %c48_i32_20 = arith.constant 48 : i32
    %51 = vector.broadcast %c48_i32_20 : i32 to vector<8x64xi32>
    %52 = arith.cmpi sge, %12, %51 : vector<8x64xi32>
    %53 = arith.ori %50, %52 : vector<8x64xi1>
    %54 = arith.andi %48, %53 : vector<8x64xi1>
    %c5_i32 = arith.constant 5 : i32
    %55 = vector.broadcast %c5_i32 : i32 to vector<8x64xi32>
    %56 = arith.cmpi eq, %11, %55 : vector<8x64xi32>
    %c16_i32_21 = arith.constant 16 : i32
    %57 = vector.broadcast %c16_i32_21 : i32 to vector<8x64xi32>
    %58 = arith.cmpi sge, %12, %57 : vector<8x64xi32>
    %59 = arith.andi %56, %58 : vector<8x64xi1>
    %c48_i32_22 = arith.constant 48 : i32
    %60 = vector.broadcast %c48_i32_22 : i32 to vector<8x64xi32>
    %61 = arith.cmpi slt, %12, %60 : vector<8x64xi32>
    %62 = arith.andi %59, %61 : vector<8x64xi1>
    %63 = arith.ori %54, %62 : vector<8x64xi1>
    %c3_i32 = arith.constant 3 : i32
    %64 = vector.broadcast %c3_i32 : i32 to vector<8x64xi32>
    %65 = arith.cmpi eq, %11, %64 : vector<8x64xi32>
    %c16_i32_23 = arith.constant 16 : i32
    %66 = vector.broadcast %c16_i32_23 : i32 to vector<8x64xi32>
    %67 = arith.cmpi slt, %12, %66 : vector<8x64xi32>
    %c48_i32_24 = arith.constant 48 : i32
    %68 = vector.broadcast %c48_i32_24 : i32 to vector<8x64xi32>
    %69 = arith.cmpi sge, %12, %68 : vector<8x64xi32>
    %70 = arith.ori %67, %69 : vector<8x64xi1>
    %71 = arith.andi %65, %70 : vector<8x64xi1>
    %c4_i32 = arith.constant 4 : i32
    %72 = vector.broadcast %c4_i32 : i32 to vector<8x64xi32>
    %73 = arith.cmpi eq, %11, %72 : vector<8x64xi32>
    %c16_i32_25 = arith.constant 16 : i32
    %74 = vector.broadcast %c16_i32_25 : i32 to vector<8x64xi32>
    %75 = arith.cmpi sge, %12, %74 : vector<8x64xi32>
    %76 = arith.andi %73, %75 : vector<8x64xi1>
    %c48_i32_26 = arith.constant 48 : i32
    %77 = vector.broadcast %c48_i32_26 : i32 to vector<8x64xi32>
    %78 = arith.cmpi slt, %12, %77 : vector<8x64xi32>
    %79 = arith.andi %76, %78 : vector<8x64xi1>
    %80 = arith.ori %71, %79 : vector<8x64xi1>
    %c4_i32_27 = arith.constant 4 : i32
    %81 = vector.broadcast %c4_i32_27 : i32 to vector<8x64xi32>
    %82 = arith.cmpi eq, %11, %81 : vector<8x64xi32>
    %c16_i32_28 = arith.constant 16 : i32
    %83 = vector.broadcast %c16_i32_28 : i32 to vector<8x64xi32>
    %84 = arith.cmpi slt, %12, %83 : vector<8x64xi32>
    %c48_i32_29 = arith.constant 48 : i32
    %85 = vector.broadcast %c48_i32_29 : i32 to vector<8x64xi32>
    %86 = arith.cmpi sge, %12, %85 : vector<8x64xi32>
    %87 = arith.ori %84, %86 : vector<8x64xi1>
    %88 = arith.andi %82, %87 : vector<8x64xi1>
    %c3_i32_30 = arith.constant 3 : i32
    %89 = vector.broadcast %c3_i32_30 : i32 to vector<8x64xi32>
    %90 = arith.cmpi eq, %11, %89 : vector<8x64xi32>
    %c16_i32_31 = arith.constant 16 : i32
    %91 = vector.broadcast %c16_i32_31 : i32 to vector<8x64xi32>
    %92 = arith.cmpi sge, %12, %91 : vector<8x64xi32>
    %93 = arith.andi %90, %92 : vector<8x64xi1>
    %c48_i32_32 = arith.constant 48 : i32
    %94 = vector.broadcast %c48_i32_32 : i32 to vector<8x64xi32>
    %95 = arith.cmpi slt, %12, %94 : vector<8x64xi32>
    %96 = arith.andi %93, %95 : vector<8x64xi1>
    %97 = arith.ori %88, %96 : vector<8x64xi1>
    %c5_i32_33 = arith.constant 5 : i32
    %98 = vector.broadcast %c5_i32_33 : i32 to vector<8x64xi32>
    %99 = arith.cmpi eq, %11, %98 : vector<8x64xi32>
    %c16_i32_34 = arith.constant 16 : i32
    %100 = vector.broadcast %c16_i32_34 : i32 to vector<8x64xi32>
    %101 = arith.cmpi slt, %12, %100 : vector<8x64xi32>
    %c48_i32_35 = arith.constant 48 : i32
    %102 = vector.broadcast %c48_i32_35 : i32 to vector<8x64xi32>
    %103 = arith.cmpi sge, %12, %102 : vector<8x64xi32>
    %104 = arith.ori %101, %103 : vector<8x64xi1>
    %105 = arith.andi %99, %104 : vector<8x64xi1>
    %c2_i32_36 = arith.constant 2 : i32
    %106 = vector.broadcast %c2_i32_36 : i32 to vector<8x64xi32>
    %107 = arith.cmpi eq, %11, %106 : vector<8x64xi32>
    %c16_i32_37 = arith.constant 16 : i32
    %108 = vector.broadcast %c16_i32_37 : i32 to vector<8x64xi32>
    %109 = arith.cmpi sge, %12, %108 : vector<8x64xi32>
    %110 = arith.andi %107, %109 : vector<8x64xi1>
    %c48_i32_38 = arith.constant 48 : i32
    %111 = vector.broadcast %c48_i32_38 : i32 to vector<8x64xi32>
    %112 = arith.cmpi slt, %12, %111 : vector<8x64xi32>
    %113 = arith.andi %110, %112 : vector<8x64xi1>
    %114 = arith.ori %105, %113 : vector<8x64xi1>
    %c6_i32_39 = arith.constant 6 : i32
    %115 = vector.broadcast %c6_i32_39 : i32 to vector<8x64xi32>
    %116 = arith.cmpi eq, %11, %115 : vector<8x64xi32>
    %c16_i32_40 = arith.constant 16 : i32
    %117 = vector.broadcast %c16_i32_40 : i32 to vector<8x64xi32>
    %118 = arith.cmpi slt, %12, %117 : vector<8x64xi32>
    %c48_i32_41 = arith.constant 48 : i32
    %119 = vector.broadcast %c48_i32_41 : i32 to vector<8x64xi32>
    %120 = arith.cmpi sge, %12, %119 : vector<8x64xi32>
    %121 = arith.ori %118, %120 : vector<8x64xi1>
    %122 = arith.andi %116, %121 : vector<8x64xi1>
    %c1_i32_42 = arith.constant 1 : i32
    %123 = vector.broadcast %c1_i32_42 : i32 to vector<8x64xi32>
    %124 = arith.cmpi eq, %11, %123 : vector<8x64xi32>
    %c16_i32_43 = arith.constant 16 : i32
    %125 = vector.broadcast %c16_i32_43 : i32 to vector<8x64xi32>
    %126 = arith.cmpi sge, %12, %125 : vector<8x64xi32>
    %127 = arith.andi %124, %126 : vector<8x64xi1>
    %c48_i32_44 = arith.constant 48 : i32
    %128 = vector.broadcast %c48_i32_44 : i32 to vector<8x64xi32>
    %129 = arith.cmpi slt, %12, %128 : vector<8x64xi32>
    %130 = arith.andi %127, %129 : vector<8x64xi1>
    %131 = arith.ori %122, %130 : vector<8x64xi1>
    %c7_i32_45 = arith.constant 7 : i32
    %132 = vector.broadcast %c7_i32_45 : i32 to vector<8x64xi32>
    %133 = arith.cmpi eq, %11, %132 : vector<8x64xi32>
    %c16_i32_46 = arith.constant 16 : i32
    %134 = vector.broadcast %c16_i32_46 : i32 to vector<8x64xi32>
    %135 = arith.cmpi slt, %12, %134 : vector<8x64xi32>
    %c48_i32_47 = arith.constant 48 : i32
    %136 = vector.broadcast %c48_i32_47 : i32 to vector<8x64xi32>
    %137 = arith.cmpi sge, %12, %136 : vector<8x64xi32>
    %138 = arith.ori %135, %137 : vector<8x64xi1>
    %139 = arith.andi %133, %138 : vector<8x64xi1>
    %c0_i32_48 = arith.constant 0 : i32
    %140 = vector.broadcast %c0_i32_48 : i32 to vector<8x64xi32>
    %141 = arith.cmpi eq, %11, %140 : vector<8x64xi32>
    %c16_i32_49 = arith.constant 16 : i32
    %142 = vector.broadcast %c16_i32_49 : i32 to vector<8x64xi32>
    %143 = arith.cmpi sge, %12, %142 : vector<8x64xi32>
    %144 = arith.andi %141, %143 : vector<8x64xi1>
    %c48_i32_50 = arith.constant 48 : i32
    %145 = vector.broadcast %c48_i32_50 : i32 to vector<8x64xi32>
    %146 = arith.cmpi slt, %12, %145 : vector<8x64xi32>
    %147 = arith.andi %144, %146 : vector<8x64xi1>
    %148 = arith.ori %139, %147 : vector<8x64xi1>
    %cst_51 = arith.constant 0.000000e+00 : f32
    %149 = vector.broadcast %cst_51 : f32 to vector<1x32xf32>
    %cst_52 = arith.constant 0.000000e+00 : f32
    %150 = vector.broadcast %cst_52 : f32 to vector<1x32xf32>
    %cst_53 = arith.constant 0.000000e+00 : f32
    %151 = vector.broadcast %cst_53 : f32 to vector<8x64xf32>
    %152 = vector.extract_strided_slice %10 {offsets = [0, 0], sizes = [1, 128], strides = [1, 1]} : vector<8x128xf32> to vector<1x128xf32>
    %153 = arith.truncf %149 : vector<1x32xf32> to vector<1x32xbf16>
    %cst_54 = arith.constant dense<0.000000e+00> : vector<1x128xf32>
    %154 = tpu.matmul %153, %2, %cst_54 {dimension_numbers = #tpu.dot_dimension_numbers<[1], [0], [0], [1], [0, 0, 1, 1], [], []>} : vector<1x32xbf16>, vector<32x128xbf16>, vector<1x128xf32> -> vector<1x128xf32>
    %155 = arith.addf %152, %154 : vector<1x128xf32>
    %156 = arith.negf %155 : vector<1x128xf32>
    %157 = math.exp %156 : vector<1x128xf32>
    %cst_55 = arith.constant 1.000000e+00 : f32
    %158 = vector.broadcast %cst_55 : f32 to vector<1x128xf32>
    %159 = arith.addf %158, %157 : vector<1x128xf32>
    %160 = arith.divf %158, %159 : vector<1x128xf32>
    %161 = math.tanh %155 : vector<1x128xf32>
    %162 = vector.extract_strided_slice %160 {offsets = [0, 32], sizes = [1, 32], strides = [1, 1]} : vector<1x128xf32> to vector<1x32xf32>
    %163 = arith.mulf %162, %150 : vector<1x32xf32>
    %164 = vector.extract_strided_slice %160 {offsets = [0, 0], sizes = [1, 32], strides = [1, 1]} : vector<1x128xf32> to vector<1x32xf32>
    %165 = vector.extract_strided_slice %161 {offsets = [0, 64], sizes = [1, 32], strides = [1, 1]} : vector<1x128xf32> to vector<1x32xf32>
    %166 = arith.mulf %164, %165 : vector<1x32xf32>
    %167 = arith.addf %163, %166 : vector<1x32xf32>
    %168 = vector.extract_strided_slice %160 {offsets = [0, 96], sizes = [1, 32], strides = [1, 1]} : vector<1x128xf32> to vector<1x32xf32>
    %169 = math.tanh %167 : vector<1x32xf32>
    %170 = arith.mulf %168, %169 : vector<1x32xf32>
    %171 = tpu.concatenate %170, %170 in 1 : vector<1x32xf32>, vector<1x32xf32> -> vector<1x64xf32>
    %172 = vector.shape_cast %171 : vector<1x64xf32> to vector<1x64xf32>
    %173 = vector.broadcast %172 : vector<1x64xf32> to vector<8x64xf32>
    %174 = arith.select %29, %173, %151 : vector<8x64xi1>, vector<8x64xf32>
    %175 = vector.extract_strided_slice %10 {offsets = [1, 0], sizes = [1, 128], strides = [1, 1]} : vector<8x128xf32> to vector<1x128xf32>
    %176 = arith.truncf %170 : vector<1x32xf32> to vector<1x32xbf16>
    %cst_56 = arith.constant dense<0.000000e+00> : vector<1x128xf32>
    %177 = tpu.matmul %176, %2, %cst_56 {dimension_numbers = #tpu.dot_dimension_numbers<[1], [0], [0], [1], [0, 0, 1, 1], [], []>} : vector<1x32xbf16>, vector<32x128xbf16>, vector<1x128xf32> -> vector<1x128xf32>
    %178 = arith.addf %175, %177 : vector<1x128xf32>
    %179 = arith.negf %178 : vector<1x128xf32>
    %180 = math.exp %179 : vector<1x128xf32>
    %cst_57 = arith.constant 1.000000e+00 : f32
    %181 = vector.broadcast %cst_57 : f32 to vector<1x128xf32>
    %182 = arith.addf %181, %180 : vector<1x128xf32>
    %183 = arith.divf %181, %182 : vector<1x128xf32>
    %184 = math.tanh %178 : vector<1x128xf32>
    %185 = vector.extract_strided_slice %183 {offsets = [0, 32], sizes = [1, 32], strides = [1, 1]} : vector<1x128xf32> to vector<1x32xf32>
    %186 = arith.mulf %185, %167 : vector<1x32xf32>
    %187 = vector.extract_strided_slice %183 {offsets = [0, 0], sizes = [1, 32], strides = [1, 1]} : vector<1x128xf32> to vector<1x32xf32>
    %188 = vector.extract_strided_slice %184 {offsets = [0, 64], sizes = [1, 32], strides = [1, 1]} : vector<1x128xf32> to vector<1x32xf32>
    %189 = arith.mulf %187, %188 : vector<1x32xf32>
    %190 = arith.addf %186, %189 : vector<1x32xf32>
    %191 = vector.extract_strided_slice %183 {offsets = [0, 96], sizes = [1, 32], strides = [1, 1]} : vector<1x128xf32> to vector<1x32xf32>
    %192 = math.tanh %190 : vector<1x32xf32>
    %193 = arith.mulf %191, %192 : vector<1x32xf32>
    %194 = tpu.concatenate %193, %193 in 1 : vector<1x32xf32>, vector<1x32xf32> -> vector<1x64xf32>
    %195 = vector.shape_cast %194 : vector<1x64xf32> to vector<1x64xf32>
    %196 = vector.broadcast %195 : vector<1x64xf32> to vector<8x64xf32>
    %197 = arith.select %46, %196, %174 : vector<8x64xi1>, vector<8x64xf32>
    %198 = vector.extract_strided_slice %10 {offsets = [2, 0], sizes = [1, 128], strides = [1, 1]} : vector<8x128xf32> to vector<1x128xf32>
    %199 = arith.truncf %193 : vector<1x32xf32> to vector<1x32xbf16>
    %cst_58 = arith.constant dense<0.000000e+00> : vector<1x128xf32>
    %200 = tpu.matmul %199, %2, %cst_58 {dimension_numbers = #tpu.dot_dimension_numbers<[1], [0], [0], [1], [0, 0, 1, 1], [], []>} : vector<1x32xbf16>, vector<32x128xbf16>, vector<1x128xf32> -> vector<1x128xf32>
    %201 = arith.addf %198, %200 : vector<1x128xf32>
    %202 = arith.negf %201 : vector<1x128xf32>
    %203 = math.exp %202 : vector<1x128xf32>
    %cst_59 = arith.constant 1.000000e+00 : f32
    %204 = vector.broadcast %cst_59 : f32 to vector<1x128xf32>
    %205 = arith.addf %204, %203 : vector<1x128xf32>
    %206 = arith.divf %204, %205 : vector<1x128xf32>
    %207 = math.tanh %201 : vector<1x128xf32>
    %208 = vector.extract_strided_slice %206 {offsets = [0, 32], sizes = [1, 32], strides = [1, 1]} : vector<1x128xf32> to vector<1x32xf32>
    %209 = arith.mulf %208, %190 : vector<1x32xf32>
    %210 = vector.extract_strided_slice %206 {offsets = [0, 0], sizes = [1, 32], strides = [1, 1]} : vector<1x128xf32> to vector<1x32xf32>
    %211 = vector.extract_strided_slice %207 {offsets = [0, 64], sizes = [1, 32], strides = [1, 1]} : vector<1x128xf32> to vector<1x32xf32>
    %212 = arith.mulf %210, %211 : vector<1x32xf32>
    %213 = arith.addf %209, %212 : vector<1x32xf32>
    %214 = vector.extract_strided_slice %206 {offsets = [0, 96], sizes = [1, 32], strides = [1, 1]} : vector<1x128xf32> to vector<1x32xf32>
    %215 = math.tanh %213 : vector<1x32xf32>
    %216 = arith.mulf %214, %215 : vector<1x32xf32>
    %217 = tpu.concatenate %216, %216 in 1 : vector<1x32xf32>, vector<1x32xf32> -> vector<1x64xf32>
    %218 = vector.shape_cast %217 : vector<1x64xf32> to vector<1x64xf32>
    %219 = vector.broadcast %218 : vector<1x64xf32> to vector<8x64xf32>
    %220 = arith.select %63, %219, %197 : vector<8x64xi1>, vector<8x64xf32>
    %221 = vector.extract_strided_slice %10 {offsets = [3, 0], sizes = [1, 128], strides = [1, 1]} : vector<8x128xf32> to vector<1x128xf32>
    %222 = arith.truncf %216 : vector<1x32xf32> to vector<1x32xbf16>
    %cst_60 = arith.constant dense<0.000000e+00> : vector<1x128xf32>
    %223 = tpu.matmul %222, %2, %cst_60 {dimension_numbers = #tpu.dot_dimension_numbers<[1], [0], [0], [1], [0, 0, 1, 1], [], []>} : vector<1x32xbf16>, vector<32x128xbf16>, vector<1x128xf32> -> vector<1x128xf32>
    %224 = arith.addf %221, %223 : vector<1x128xf32>
    %225 = arith.negf %224 : vector<1x128xf32>
    %226 = math.exp %225 : vector<1x128xf32>
    %cst_61 = arith.constant 1.000000e+00 : f32
    %227 = vector.broadcast %cst_61 : f32 to vector<1x128xf32>
    %228 = arith.addf %227, %226 : vector<1x128xf32>
    %229 = arith.divf %227, %228 : vector<1x128xf32>
    %230 = math.tanh %224 : vector<1x128xf32>
    %231 = vector.extract_strided_slice %229 {offsets = [0, 32], sizes = [1, 32], strides = [1, 1]} : vector<1x128xf32> to vector<1x32xf32>
    %232 = arith.mulf %231, %213 : vector<1x32xf32>
    %233 = vector.extract_strided_slice %229 {offsets = [0, 0], sizes = [1, 32], strides = [1, 1]} : vector<1x128xf32> to vector<1x32xf32>
    %234 = vector.extract_strided_slice %230 {offsets = [0, 64], sizes = [1, 32], strides = [1, 1]} : vector<1x128xf32> to vector<1x32xf32>
    %235 = arith.mulf %233, %234 : vector<1x32xf32>
    %236 = arith.addf %232, %235 : vector<1x32xf32>
    %237 = vector.extract_strided_slice %229 {offsets = [0, 96], sizes = [1, 32], strides = [1, 1]} : vector<1x128xf32> to vector<1x32xf32>
    %238 = math.tanh %236 : vector<1x32xf32>
    %239 = arith.mulf %237, %238 : vector<1x32xf32>
    %240 = tpu.concatenate %239, %239 in 1 : vector<1x32xf32>, vector<1x32xf32> -> vector<1x64xf32>
    %241 = vector.shape_cast %240 : vector<1x64xf32> to vector<1x64xf32>
    %242 = vector.broadcast %241 : vector<1x64xf32> to vector<8x64xf32>
    %243 = arith.select %80, %242, %220 : vector<8x64xi1>, vector<8x64xf32>
    %244 = vector.extract_strided_slice %10 {offsets = [4, 0], sizes = [1, 128], strides = [1, 1]} : vector<8x128xf32> to vector<1x128xf32>
    %245 = arith.truncf %239 : vector<1x32xf32> to vector<1x32xbf16>
    %cst_62 = arith.constant dense<0.000000e+00> : vector<1x128xf32>
    %246 = tpu.matmul %245, %2, %cst_62 {dimension_numbers = #tpu.dot_dimension_numbers<[1], [0], [0], [1], [0, 0, 1, 1], [], []>} : vector<1x32xbf16>, vector<32x128xbf16>, vector<1x128xf32> -> vector<1x128xf32>
    %247 = arith.addf %244, %246 : vector<1x128xf32>
    %248 = arith.negf %247 : vector<1x128xf32>
    %249 = math.exp %248 : vector<1x128xf32>
    %cst_63 = arith.constant 1.000000e+00 : f32
    %250 = vector.broadcast %cst_63 : f32 to vector<1x128xf32>
    %251 = arith.addf %250, %249 : vector<1x128xf32>
    %252 = arith.divf %250, %251 : vector<1x128xf32>
    %253 = math.tanh %247 : vector<1x128xf32>
    %254 = vector.extract_strided_slice %252 {offsets = [0, 32], sizes = [1, 32], strides = [1, 1]} : vector<1x128xf32> to vector<1x32xf32>
    %255 = arith.mulf %254, %236 : vector<1x32xf32>
    %256 = vector.extract_strided_slice %252 {offsets = [0, 0], sizes = [1, 32], strides = [1, 1]} : vector<1x128xf32> to vector<1x32xf32>
    %257 = vector.extract_strided_slice %253 {offsets = [0, 64], sizes = [1, 32], strides = [1, 1]} : vector<1x128xf32> to vector<1x32xf32>
    %258 = arith.mulf %256, %257 : vector<1x32xf32>
    %259 = arith.addf %255, %258 : vector<1x32xf32>
    %260 = vector.extract_strided_slice %252 {offsets = [0, 96], sizes = [1, 32], strides = [1, 1]} : vector<1x128xf32> to vector<1x32xf32>
    %261 = math.tanh %259 : vector<1x32xf32>
    %262 = arith.mulf %260, %261 : vector<1x32xf32>
    %263 = tpu.concatenate %262, %262 in 1 : vector<1x32xf32>, vector<1x32xf32> -> vector<1x64xf32>
    %264 = vector.shape_cast %263 : vector<1x64xf32> to vector<1x64xf32>
    %265 = vector.broadcast %264 : vector<1x64xf32> to vector<8x64xf32>
    %266 = arith.select %97, %265, %243 : vector<8x64xi1>, vector<8x64xf32>
    %267 = vector.extract_strided_slice %10 {offsets = [5, 0], sizes = [1, 128], strides = [1, 1]} : vector<8x128xf32> to vector<1x128xf32>
    %268 = arith.truncf %262 : vector<1x32xf32> to vector<1x32xbf16>
    %cst_64 = arith.constant dense<0.000000e+00> : vector<1x128xf32>
    %269 = tpu.matmul %268, %2, %cst_64 {dimension_numbers = #tpu.dot_dimension_numbers<[1], [0], [0], [1], [0, 0, 1, 1], [], []>} : vector<1x32xbf16>, vector<32x128xbf16>, vector<1x128xf32> -> vector<1x128xf32>
    %270 = arith.addf %267, %269 : vector<1x128xf32>
    %271 = arith.negf %270 : vector<1x128xf32>
    %272 = math.exp %271 : vector<1x128xf32>
    %cst_65 = arith.constant 1.000000e+00 : f32
    %273 = vector.broadcast %cst_65 : f32 to vector<1x128xf32>
    %274 = arith.addf %273, %272 : vector<1x128xf32>
    %275 = arith.divf %273, %274 : vector<1x128xf32>
    %276 = math.tanh %270 : vector<1x128xf32>
    %277 = vector.extract_strided_slice %275 {offsets = [0, 32], sizes = [1, 32], strides = [1, 1]} : vector<1x128xf32> to vector<1x32xf32>
    %278 = arith.mulf %277, %259 : vector<1x32xf32>
    %279 = vector.extract_strided_slice %275 {offsets = [0, 0], sizes = [1, 32], strides = [1, 1]} : vector<1x128xf32> to vector<1x32xf32>
    %280 = vector.extract_strided_slice %276 {offsets = [0, 64], sizes = [1, 32], strides = [1, 1]} : vector<1x128xf32> to vector<1x32xf32>
    %281 = arith.mulf %279, %280 : vector<1x32xf32>
    %282 = arith.addf %278, %281 : vector<1x32xf32>
    %283 = vector.extract_strided_slice %275 {offsets = [0, 96], sizes = [1, 32], strides = [1, 1]} : vector<1x128xf32> to vector<1x32xf32>
    %284 = math.tanh %282 : vector<1x32xf32>
    %285 = arith.mulf %283, %284 : vector<1x32xf32>
    %286 = tpu.concatenate %285, %285 in 1 : vector<1x32xf32>, vector<1x32xf32> -> vector<1x64xf32>
    %287 = vector.shape_cast %286 : vector<1x64xf32> to vector<1x64xf32>
    %288 = vector.broadcast %287 : vector<1x64xf32> to vector<8x64xf32>
    %289 = arith.select %114, %288, %266 : vector<8x64xi1>, vector<8x64xf32>
    %290 = vector.extract_strided_slice %10 {offsets = [6, 0], sizes = [1, 128], strides = [1, 1]} : vector<8x128xf32> to vector<1x128xf32>
    %291 = arith.truncf %285 : vector<1x32xf32> to vector<1x32xbf16>
    %cst_66 = arith.constant dense<0.000000e+00> : vector<1x128xf32>
    %292 = tpu.matmul %291, %2, %cst_66 {dimension_numbers = #tpu.dot_dimension_numbers<[1], [0], [0], [1], [0, 0, 1, 1], [], []>} : vector<1x32xbf16>, vector<32x128xbf16>, vector<1x128xf32> -> vector<1x128xf32>
    %293 = arith.addf %290, %292 : vector<1x128xf32>
    %294 = arith.negf %293 : vector<1x128xf32>
    %295 = math.exp %294 : vector<1x128xf32>
    %cst_67 = arith.constant 1.000000e+00 : f32
    %296 = vector.broadcast %cst_67 : f32 to vector<1x128xf32>
    %297 = arith.addf %296, %295 : vector<1x128xf32>
    %298 = arith.divf %296, %297 : vector<1x128xf32>
    %299 = math.tanh %293 : vector<1x128xf32>
    %300 = vector.extract_strided_slice %298 {offsets = [0, 32], sizes = [1, 32], strides = [1, 1]} : vector<1x128xf32> to vector<1x32xf32>
    %301 = arith.mulf %300, %282 : vector<1x32xf32>
    %302 = vector.extract_strided_slice %298 {offsets = [0, 0], sizes = [1, 32], strides = [1, 1]} : vector<1x128xf32> to vector<1x32xf32>
    %303 = vector.extract_strided_slice %299 {offsets = [0, 64], sizes = [1, 32], strides = [1, 1]} : vector<1x128xf32> to vector<1x32xf32>
    %304 = arith.mulf %302, %303 : vector<1x32xf32>
    %305 = arith.addf %301, %304 : vector<1x32xf32>
    %306 = vector.extract_strided_slice %298 {offsets = [0, 96], sizes = [1, 32], strides = [1, 1]} : vector<1x128xf32> to vector<1x32xf32>
    %307 = math.tanh %305 : vector<1x32xf32>
    %308 = arith.mulf %306, %307 : vector<1x32xf32>
    %309 = tpu.concatenate %308, %308 in 1 : vector<1x32xf32>, vector<1x32xf32> -> vector<1x64xf32>
    %310 = vector.shape_cast %309 : vector<1x64xf32> to vector<1x64xf32>
    %311 = vector.broadcast %310 : vector<1x64xf32> to vector<8x64xf32>
    %312 = arith.select %131, %311, %289 : vector<8x64xi1>, vector<8x64xf32>
    %313 = vector.extract_strided_slice %10 {offsets = [7, 0], sizes = [1, 128], strides = [1, 1]} : vector<8x128xf32> to vector<1x128xf32>
    %314 = arith.truncf %308 : vector<1x32xf32> to vector<1x32xbf16>
    %cst_68 = arith.constant dense<0.000000e+00> : vector<1x128xf32>
    %315 = tpu.matmul %314, %2, %cst_68 {dimension_numbers = #tpu.dot_dimension_numbers<[1], [0], [0], [1], [0, 0, 1, 1], [], []>} : vector<1x32xbf16>, vector<32x128xbf16>, vector<1x128xf32> -> vector<1x128xf32>
    %316 = arith.addf %313, %315 : vector<1x128xf32>
    %317 = arith.negf %316 : vector<1x128xf32>
    %318 = math.exp %317 : vector<1x128xf32>
    %cst_69 = arith.constant 1.000000e+00 : f32
    %319 = vector.broadcast %cst_69 : f32 to vector<1x128xf32>
    %320 = arith.addf %319, %318 : vector<1x128xf32>
    %321 = arith.divf %319, %320 : vector<1x128xf32>
    %322 = math.tanh %316 : vector<1x128xf32>
    %323 = vector.extract_strided_slice %321 {offsets = [0, 32], sizes = [1, 32], strides = [1, 1]} : vector<1x128xf32> to vector<1x32xf32>
    %324 = arith.mulf %323, %305 : vector<1x32xf32>
    %325 = vector.extract_strided_slice %321 {offsets = [0, 0], sizes = [1, 32], strides = [1, 1]} : vector<1x128xf32> to vector<1x32xf32>
    %326 = vector.extract_strided_slice %322 {offsets = [0, 64], sizes = [1, 32], strides = [1, 1]} : vector<1x128xf32> to vector<1x32xf32>
    %327 = arith.mulf %325, %326 : vector<1x32xf32>
    %328 = arith.addf %324, %327 : vector<1x32xf32>
    %329 = vector.extract_strided_slice %321 {offsets = [0, 96], sizes = [1, 32], strides = [1, 1]} : vector<1x128xf32> to vector<1x32xf32>
    %330 = math.tanh %328 : vector<1x32xf32>
    %331 = arith.mulf %329, %330 : vector<1x32xf32>
    %332 = tpu.concatenate %331, %331 in 1 : vector<1x32xf32>, vector<1x32xf32> -> vector<1x64xf32>
    %333 = vector.shape_cast %332 : vector<1x64xf32> to vector<1x64xf32>
    %334 = vector.broadcast %333 : vector<1x64xf32> to vector<8x64xf32>
    %335 = arith.select %148, %334, %312 : vector<8x64xi1>, vector<8x64xf32>
    %336 = arith.truncf %335 : vector<8x64xf32> to vector<8x64xbf16>
    %c0_70 = arith.constant 0 : index
    %c0_71 = arith.constant 0 : index
    %337 = vector.load %arg2[%c0_70, %c0_71] : memref<64x128xbf16, #tpu.memory_space<vmem>>, vector<64x128xbf16>
    %cst_72 = arith.constant dense<0.000000e+00> : vector<8x128xf32>
    %338 = tpu.matmul %336, %337, %cst_72 {dimension_numbers = #tpu.dot_dimension_numbers<[1], [0], [0], [1], [0, 0, 1, 1], [], []>} : vector<8x64xbf16>, vector<64x128xbf16>, vector<8x128xf32> -> vector<8x128xf32>
    %c0_73 = arith.constant 0 : index
    %c0_74 = arith.constant 0 : index
    %339 = vector.load %arg6[%c0_73, %c0_74] : memref<1x128xf32, #tpu.memory_space<vmem>>, vector<1x128xf32>
    %340 = vector.broadcast %339 : vector<1x128xf32> to vector<8x128xf32>
    %341 = arith.addf %338, %340 : vector<8x128xf32>
    %342 = tpu.iota {dimensions = array<i32: 0>} : vector<8x32xi32>
    %343 = tpu.iota {dimensions = array<i32: 1>} : vector<8x32xi32>
    %c0_i32_75 = arith.constant 0 : i32
    %344 = vector.broadcast %c0_i32_75 : i32 to vector<8x32xi32>
    %345 = arith.cmpi eq, %342, %344 : vector<8x32xi32>
    %c16_i32_76 = arith.constant 16 : i32
    %346 = vector.broadcast %c16_i32_76 : i32 to vector<8x32xi32>
    %347 = arith.cmpi slt, %343, %346 : vector<8x32xi32>
    %348 = arith.andi %345, %347 : vector<8x32xi1>
    %c7_i32_77 = arith.constant 7 : i32
    %349 = vector.broadcast %c7_i32_77 : i32 to vector<8x32xi32>
    %350 = arith.cmpi eq, %342, %349 : vector<8x32xi32>
    %c16_i32_78 = arith.constant 16 : i32
    %351 = vector.broadcast %c16_i32_78 : i32 to vector<8x32xi32>
    %352 = arith.cmpi sge, %343, %351 : vector<8x32xi32>
    %353 = arith.andi %350, %352 : vector<8x32xi1>
    %354 = arith.ori %348, %353 : vector<8x32xi1>
    %c1_i32_79 = arith.constant 1 : i32
    %355 = vector.broadcast %c1_i32_79 : i32 to vector<8x32xi32>
    %356 = arith.cmpi eq, %342, %355 : vector<8x32xi32>
    %c16_i32_80 = arith.constant 16 : i32
    %357 = vector.broadcast %c16_i32_80 : i32 to vector<8x32xi32>
    %358 = arith.cmpi slt, %343, %357 : vector<8x32xi32>
    %359 = arith.andi %356, %358 : vector<8x32xi1>
    %c6_i32_81 = arith.constant 6 : i32
    %360 = vector.broadcast %c6_i32_81 : i32 to vector<8x32xi32>
    %361 = arith.cmpi eq, %342, %360 : vector<8x32xi32>
    %c16_i32_82 = arith.constant 16 : i32
    %362 = vector.broadcast %c16_i32_82 : i32 to vector<8x32xi32>
    %363 = arith.cmpi sge, %343, %362 : vector<8x32xi32>
    %364 = arith.andi %361, %363 : vector<8x32xi1>
    %365 = arith.ori %359, %364 : vector<8x32xi1>
    %c2_i32_83 = arith.constant 2 : i32
    %366 = vector.broadcast %c2_i32_83 : i32 to vector<8x32xi32>
    %367 = arith.cmpi eq, %342, %366 : vector<8x32xi32>
    %c16_i32_84 = arith.constant 16 : i32
    %368 = vector.broadcast %c16_i32_84 : i32 to vector<8x32xi32>
    %369 = arith.cmpi slt, %343, %368 : vector<8x32xi32>
    %370 = arith.andi %367, %369 : vector<8x32xi1>
    %c5_i32_85 = arith.constant 5 : i32
    %371 = vector.broadcast %c5_i32_85 : i32 to vector<8x32xi32>
    %372 = arith.cmpi eq, %342, %371 : vector<8x32xi32>
    %c16_i32_86 = arith.constant 16 : i32
    %373 = vector.broadcast %c16_i32_86 : i32 to vector<8x32xi32>
    %374 = arith.cmpi sge, %343, %373 : vector<8x32xi32>
    %375 = arith.andi %372, %374 : vector<8x32xi1>
    %376 = arith.ori %370, %375 : vector<8x32xi1>
    %c3_i32_87 = arith.constant 3 : i32
    %377 = vector.broadcast %c3_i32_87 : i32 to vector<8x32xi32>
    %378 = arith.cmpi eq, %342, %377 : vector<8x32xi32>
    %c16_i32_88 = arith.constant 16 : i32
    %379 = vector.broadcast %c16_i32_88 : i32 to vector<8x32xi32>
    %380 = arith.cmpi slt, %343, %379 : vector<8x32xi32>
    %381 = arith.andi %378, %380 : vector<8x32xi1>
    %c4_i32_89 = arith.constant 4 : i32
    %382 = vector.broadcast %c4_i32_89 : i32 to vector<8x32xi32>
    %383 = arith.cmpi eq, %342, %382 : vector<8x32xi32>
    %c16_i32_90 = arith.constant 16 : i32
    %384 = vector.broadcast %c16_i32_90 : i32 to vector<8x32xi32>
    %385 = arith.cmpi sge, %343, %384 : vector<8x32xi32>
    %386 = arith.andi %383, %385 : vector<8x32xi1>
    %387 = arith.ori %381, %386 : vector<8x32xi1>
    %c4_i32_91 = arith.constant 4 : i32
    %388 = vector.broadcast %c4_i32_91 : i32 to vector<8x32xi32>
    %389 = arith.cmpi eq, %342, %388 : vector<8x32xi32>
    %c16_i32_92 = arith.constant 16 : i32
    %390 = vector.broadcast %c16_i32_92 : i32 to vector<8x32xi32>
    %391 = arith.cmpi slt, %343, %390 : vector<8x32xi32>
    %392 = arith.andi %389, %391 : vector<8x32xi1>
    %c3_i32_93 = arith.constant 3 : i32
    %393 = vector.broadcast %c3_i32_93 : i32 to vector<8x32xi32>
    %394 = arith.cmpi eq, %342, %393 : vector<8x32xi32>
    %c16_i32_94 = arith.constant 16 : i32
    %395 = vector.broadcast %c16_i32_94 : i32 to vector<8x32xi32>
    %396 = arith.cmpi sge, %343, %395 : vector<8x32xi32>
    %397 = arith.andi %394, %396 : vector<8x32xi1>
    %398 = arith.ori %392, %397 : vector<8x32xi1>
    %c5_i32_95 = arith.constant 5 : i32
    %399 = vector.broadcast %c5_i32_95 : i32 to vector<8x32xi32>
    %400 = arith.cmpi eq, %342, %399 : vector<8x32xi32>
    %c16_i32_96 = arith.constant 16 : i32
    %401 = vector.broadcast %c16_i32_96 : i32 to vector<8x32xi32>
    %402 = arith.cmpi slt, %343, %401 : vector<8x32xi32>
    %403 = arith.andi %400, %402 : vector<8x32xi1>
    %c2_i32_97 = arith.constant 2 : i32
    %404 = vector.broadcast %c2_i32_97 : i32 to vector<8x32xi32>
    %405 = arith.cmpi eq, %342, %404 : vector<8x32xi32>
    %c16_i32_98 = arith.constant 16 : i32
    %406 = vector.broadcast %c16_i32_98 : i32 to vector<8x32xi32>
    %407 = arith.cmpi sge, %343, %406 : vector<8x32xi32>
    %408 = arith.andi %405, %407 : vector<8x32xi1>
    %409 = arith.ori %403, %408 : vector<8x32xi1>
    %c6_i32_99 = arith.constant 6 : i32
    %410 = vector.broadcast %c6_i32_99 : i32 to vector<8x32xi32>
    %411 = arith.cmpi eq, %342, %410 : vector<8x32xi32>
    %c16_i32_100 = arith.constant 16 : i32
    %412 = vector.broadcast %c16_i32_100 : i32 to vector<8x32xi32>
    %413 = arith.cmpi slt, %343, %412 : vector<8x32xi32>
    %414 = arith.andi %411, %413 : vector<8x32xi1>
    %c1_i32_101 = arith.constant 1 : i32
    %415 = vector.broadcast %c1_i32_101 : i32 to vector<8x32xi32>
    %416 = arith.cmpi eq, %342, %415 : vector<8x32xi32>
    %c16_i32_102 = arith.constant 16 : i32
    %417 = vector.broadcast %c16_i32_102 : i32 to vector<8x32xi32>
    %418 = arith.cmpi sge, %343, %417 : vector<8x32xi32>
    %419 = arith.andi %416, %418 : vector<8x32xi1>
    %420 = arith.ori %414, %419 : vector<8x32xi1>
    %c7_i32_103 = arith.constant 7 : i32
    %421 = vector.broadcast %c7_i32_103 : i32 to vector<8x32xi32>
    %422 = arith.cmpi eq, %342, %421 : vector<8x32xi32>
    %c16_i32_104 = arith.constant 16 : i32
    %423 = vector.broadcast %c16_i32_104 : i32 to vector<8x32xi32>
    %424 = arith.cmpi slt, %343, %423 : vector<8x32xi32>
    %425 = arith.andi %422, %424 : vector<8x32xi1>
    %c0_i32_105 = arith.constant 0 : i32
    %426 = vector.broadcast %c0_i32_105 : i32 to vector<8x32xi32>
    %427 = arith.cmpi eq, %342, %426 : vector<8x32xi32>
    %c16_i32_106 = arith.constant 16 : i32
    %428 = vector.broadcast %c16_i32_106 : i32 to vector<8x32xi32>
    %429 = arith.cmpi sge, %343, %428 : vector<8x32xi32>
    %430 = arith.andi %427, %429 : vector<8x32xi1>
    %431 = arith.ori %425, %430 : vector<8x32xi1>
    %cst_107 = arith.constant 0.000000e+00 : f32
    %432 = vector.broadcast %cst_107 : f32 to vector<1x32xf32>
    %cst_108 = arith.constant 0.000000e+00 : f32
    %433 = vector.broadcast %cst_108 : f32 to vector<1x32xf32>
    %cst_109 = arith.constant 0.000000e+00 : f32
    %434 = vector.broadcast %cst_109 : f32 to vector<8x32xf32>
    %435 = vector.extract_strided_slice %341 {offsets = [0, 0], sizes = [1, 128], strides = [1, 1]} : vector<8x128xf32> to vector<1x128xf32>
    %436 = arith.truncf %432 : vector<1x32xf32> to vector<1x32xbf16>
    %cst_110 = arith.constant dense<0.000000e+00> : vector<1x128xf32>
    %437 = tpu.matmul %436, %3, %cst_110 {dimension_numbers = #tpu.dot_dimension_numbers<[1], [0], [0], [1], [0, 0, 1, 1], [], []>} : vector<1x32xbf16>, vector<32x128xbf16>, vector<1x128xf32> -> vector<1x128xf32>
    %438 = arith.addf %435, %437 : vector<1x128xf32>
    %439 = arith.negf %438 : vector<1x128xf32>
    %440 = math.exp %439 : vector<1x128xf32>
    %cst_111 = arith.constant 1.000000e+00 : f32
    %441 = vector.broadcast %cst_111 : f32 to vector<1x128xf32>
    %442 = arith.addf %441, %440 : vector<1x128xf32>
    %443 = arith.divf %441, %442 : vector<1x128xf32>
    %444 = math.tanh %438 : vector<1x128xf32>
    %445 = vector.extract_strided_slice %443 {offsets = [0, 32], sizes = [1, 32], strides = [1, 1]} : vector<1x128xf32> to vector<1x32xf32>
    %446 = arith.mulf %445, %433 : vector<1x32xf32>
    %447 = vector.extract_strided_slice %443 {offsets = [0, 0], sizes = [1, 32], strides = [1, 1]} : vector<1x128xf32> to vector<1x32xf32>
    %448 = vector.extract_strided_slice %444 {offsets = [0, 64], sizes = [1, 32], strides = [1, 1]} : vector<1x128xf32> to vector<1x32xf32>
    %449 = arith.mulf %447, %448 : vector<1x32xf32>
    %450 = arith.addf %446, %449 : vector<1x32xf32>
    %451 = vector.extract_strided_slice %443 {offsets = [0, 96], sizes = [1, 32], strides = [1, 1]} : vector<1x128xf32> to vector<1x32xf32>
    %452 = math.tanh %450 : vector<1x32xf32>
    %453 = arith.mulf %451, %452 : vector<1x32xf32>
    %454 = vector.shape_cast %453 : vector<1x32xf32> to vector<1x32xf32>
    %455 = vector.broadcast %454 : vector<1x32xf32> to vector<8x32xf32>
    %456 = arith.select %354, %455, %434 : vector<8x32xi1>, vector<8x32xf32>
    %457 = vector.extract_strided_slice %341 {offsets = [1, 0], sizes = [1, 128], strides = [1, 1]} : vector<8x128xf32> to vector<1x128xf32>
    %458 = arith.truncf %453 : vector<1x32xf32> to vector<1x32xbf16>
    %cst_112 = arith.constant dense<0.000000e+00> : vector<1x128xf32>
    %459 = tpu.matmul %458, %3, %cst_112 {dimension_numbers = #tpu.dot_dimension_numbers<[1], [0], [0], [1], [0, 0, 1, 1], [], []>} : vector<1x32xbf16>, vector<32x128xbf16>, vector<1x128xf32> -> vector<1x128xf32>
    %460 = arith.addf %457, %459 : vector<1x128xf32>
    %461 = arith.negf %460 : vector<1x128xf32>
    %462 = math.exp %461 : vector<1x128xf32>
    %cst_113 = arith.constant 1.000000e+00 : f32
    %463 = vector.broadcast %cst_113 : f32 to vector<1x128xf32>
    %464 = arith.addf %463, %462 : vector<1x128xf32>
    %465 = arith.divf %463, %464 : vector<1x128xf32>
    %466 = math.tanh %460 : vector<1x128xf32>
    %467 = vector.extract_strided_slice %465 {offsets = [0, 32], sizes = [1, 32], strides = [1, 1]} : vector<1x128xf32> to vector<1x32xf32>
    %468 = arith.mulf %467, %450 : vector<1x32xf32>
    %469 = vector.extract_strided_slice %465 {offsets = [0, 0], sizes = [1, 32], strides = [1, 1]} : vector<1x128xf32> to vector<1x32xf32>
    %470 = vector.extract_strided_slice %466 {offsets = [0, 64], sizes = [1, 32], strides = [1, 1]} : vector<1x128xf32> to vector<1x32xf32>
    %471 = arith.mulf %469, %470 : vector<1x32xf32>
    %472 = arith.addf %468, %471 : vector<1x32xf32>
    %473 = vector.extract_strided_slice %465 {offsets = [0, 96], sizes = [1, 32], strides = [1, 1]} : vector<1x128xf32> to vector<1x32xf32>
    %474 = math.tanh %472 : vector<1x32xf32>
    %475 = arith.mulf %473, %474 : vector<1x32xf32>
    %476 = vector.shape_cast %475 : vector<1x32xf32> to vector<1x32xf32>
    %477 = vector.broadcast %476 : vector<1x32xf32> to vector<8x32xf32>
    %478 = arith.select %365, %477, %456 : vector<8x32xi1>, vector<8x32xf32>
    %479 = vector.extract_strided_slice %341 {offsets = [2, 0], sizes = [1, 128], strides = [1, 1]} : vector<8x128xf32> to vector<1x128xf32>
    %480 = arith.truncf %475 : vector<1x32xf32> to vector<1x32xbf16>
    %cst_114 = arith.constant dense<0.000000e+00> : vector<1x128xf32>
    %481 = tpu.matmul %480, %3, %cst_114 {dimension_numbers = #tpu.dot_dimension_numbers<[1], [0], [0], [1], [0, 0, 1, 1], [], []>} : vector<1x32xbf16>, vector<32x128xbf16>, vector<1x128xf32> -> vector<1x128xf32>
    %482 = arith.addf %479, %481 : vector<1x128xf32>
    %483 = arith.negf %482 : vector<1x128xf32>
    %484 = math.exp %483 : vector<1x128xf32>
    %cst_115 = arith.constant 1.000000e+00 : f32
    %485 = vector.broadcast %cst_115 : f32 to vector<1x128xf32>
    %486 = arith.addf %485, %484 : vector<1x128xf32>
    %487 = arith.divf %485, %486 : vector<1x128xf32>
    %488 = math.tanh %482 : vector<1x128xf32>
    %489 = vector.extract_strided_slice %487 {offsets = [0, 32], sizes = [1, 32], strides = [1, 1]} : vector<1x128xf32> to vector<1x32xf32>
    %490 = arith.mulf %489, %472 : vector<1x32xf32>
    %491 = vector.extract_strided_slice %487 {offsets = [0, 0], sizes = [1, 32], strides = [1, 1]} : vector<1x128xf32> to vector<1x32xf32>
    %492 = vector.extract_strided_slice %488 {offsets = [0, 64], sizes = [1, 32], strides = [1, 1]} : vector<1x128xf32> to vector<1x32xf32>
    %493 = arith.mulf %491, %492 : vector<1x32xf32>
    %494 = arith.addf %490, %493 : vector<1x32xf32>
    %495 = vector.extract_strided_slice %487 {offsets = [0, 96], sizes = [1, 32], strides = [1, 1]} : vector<1x128xf32> to vector<1x32xf32>
    %496 = math.tanh %494 : vector<1x32xf32>
    %497 = arith.mulf %495, %496 : vector<1x32xf32>
    %498 = vector.shape_cast %497 : vector<1x32xf32> to vector<1x32xf32>
    %499 = vector.broadcast %498 : vector<1x32xf32> to vector<8x32xf32>
    %500 = arith.select %376, %499, %478 : vector<8x32xi1>, vector<8x32xf32>
    %501 = vector.extract_strided_slice %341 {offsets = [3, 0], sizes = [1, 128], strides = [1, 1]} : vector<8x128xf32> to vector<1x128xf32>
    %502 = arith.truncf %497 : vector<1x32xf32> to vector<1x32xbf16>
    %cst_116 = arith.constant dense<0.000000e+00> : vector<1x128xf32>
    %503 = tpu.matmul %502, %3, %cst_116 {dimension_numbers = #tpu.dot_dimension_numbers<[1], [0], [0], [1], [0, 0, 1, 1], [], []>} : vector<1x32xbf16>, vector<32x128xbf16>, vector<1x128xf32> -> vector<1x128xf32>
    %504 = arith.addf %501, %503 : vector<1x128xf32>
    %505 = arith.negf %504 : vector<1x128xf32>
    %506 = math.exp %505 : vector<1x128xf32>
    %cst_117 = arith.constant 1.000000e+00 : f32
    %507 = vector.broadcast %cst_117 : f32 to vector<1x128xf32>
    %508 = arith.addf %507, %506 : vector<1x128xf32>
    %509 = arith.divf %507, %508 : vector<1x128xf32>
    %510 = math.tanh %504 : vector<1x128xf32>
    %511 = vector.extract_strided_slice %509 {offsets = [0, 32], sizes = [1, 32], strides = [1, 1]} : vector<1x128xf32> to vector<1x32xf32>
    %512 = arith.mulf %511, %494 : vector<1x32xf32>
    %513 = vector.extract_strided_slice %509 {offsets = [0, 0], sizes = [1, 32], strides = [1, 1]} : vector<1x128xf32> to vector<1x32xf32>
    %514 = vector.extract_strided_slice %510 {offsets = [0, 64], sizes = [1, 32], strides = [1, 1]} : vector<1x128xf32> to vector<1x32xf32>
    %515 = arith.mulf %513, %514 : vector<1x32xf32>
    %516 = arith.addf %512, %515 : vector<1x32xf32>
    %517 = vector.extract_strided_slice %509 {offsets = [0, 96], sizes = [1, 32], strides = [1, 1]} : vector<1x128xf32> to vector<1x32xf32>
    %518 = math.tanh %516 : vector<1x32xf32>
    %519 = arith.mulf %517, %518 : vector<1x32xf32>
    %520 = vector.shape_cast %519 : vector<1x32xf32> to vector<1x32xf32>
    %521 = vector.broadcast %520 : vector<1x32xf32> to vector<8x32xf32>
    %522 = arith.select %387, %521, %500 : vector<8x32xi1>, vector<8x32xf32>
    %523 = vector.extract_strided_slice %341 {offsets = [4, 0], sizes = [1, 128], strides = [1, 1]} : vector<8x128xf32> to vector<1x128xf32>
    %524 = arith.truncf %519 : vector<1x32xf32> to vector<1x32xbf16>
    %cst_118 = arith.constant dense<0.000000e+00> : vector<1x128xf32>
    %525 = tpu.matmul %524, %3, %cst_118 {dimension_numbers = #tpu.dot_dimension_numbers<[1], [0], [0], [1], [0, 0, 1, 1], [], []>} : vector<1x32xbf16>, vector<32x128xbf16>, vector<1x128xf32> -> vector<1x128xf32>
    %526 = arith.addf %523, %525 : vector<1x128xf32>
    %527 = arith.negf %526 : vector<1x128xf32>
    %528 = math.exp %527 : vector<1x128xf32>
    %cst_119 = arith.constant 1.000000e+00 : f32
    %529 = vector.broadcast %cst_119 : f32 to vector<1x128xf32>
    %530 = arith.addf %529, %528 : vector<1x128xf32>
    %531 = arith.divf %529, %530 : vector<1x128xf32>
    %532 = math.tanh %526 : vector<1x128xf32>
    %533 = vector.extract_strided_slice %531 {offsets = [0, 32], sizes = [1, 32], strides = [1, 1]} : vector<1x128xf32> to vector<1x32xf32>
    %534 = arith.mulf %533, %516 : vector<1x32xf32>
    %535 = vector.extract_strided_slice %531 {offsets = [0, 0], sizes = [1, 32], strides = [1, 1]} : vector<1x128xf32> to vector<1x32xf32>
    %536 = vector.extract_strided_slice %532 {offsets = [0, 64], sizes = [1, 32], strides = [1, 1]} : vector<1x128xf32> to vector<1x32xf32>
    %537 = arith.mulf %535, %536 : vector<1x32xf32>
    %538 = arith.addf %534, %537 : vector<1x32xf32>
    %539 = vector.extract_strided_slice %531 {offsets = [0, 96], sizes = [1, 32], strides = [1, 1]} : vector<1x128xf32> to vector<1x32xf32>
    %540 = math.tanh %538 : vector<1x32xf32>
    %541 = arith.mulf %539, %540 : vector<1x32xf32>
    %542 = vector.shape_cast %541 : vector<1x32xf32> to vector<1x32xf32>
    %543 = vector.broadcast %542 : vector<1x32xf32> to vector<8x32xf32>
    %544 = arith.select %398, %543, %522 : vector<8x32xi1>, vector<8x32xf32>
    %545 = vector.extract_strided_slice %341 {offsets = [5, 0], sizes = [1, 128], strides = [1, 1]} : vector<8x128xf32> to vector<1x128xf32>
    %546 = arith.truncf %541 : vector<1x32xf32> to vector<1x32xbf16>
    %cst_120 = arith.constant dense<0.000000e+00> : vector<1x128xf32>
    %547 = tpu.matmul %546, %3, %cst_120 {dimension_numbers = #tpu.dot_dimension_numbers<[1], [0], [0], [1], [0, 0, 1, 1], [], []>} : vector<1x32xbf16>, vector<32x128xbf16>, vector<1x128xf32> -> vector<1x128xf32>
    %548 = arith.addf %545, %547 : vector<1x128xf32>
    %549 = arith.negf %548 : vector<1x128xf32>
    %550 = math.exp %549 : vector<1x128xf32>
    %cst_121 = arith.constant 1.000000e+00 : f32
    %551 = vector.broadcast %cst_121 : f32 to vector<1x128xf32>
    %552 = arith.addf %551, %550 : vector<1x128xf32>
    %553 = arith.divf %551, %552 : vector<1x128xf32>
    %554 = math.tanh %548 : vector<1x128xf32>
    %555 = vector.extract_strided_slice %553 {offsets = [0, 32], sizes = [1, 32], strides = [1, 1]} : vector<1x128xf32> to vector<1x32xf32>
    %556 = arith.mulf %555, %538 : vector<1x32xf32>
    %557 = vector.extract_strided_slice %553 {offsets = [0, 0], sizes = [1, 32], strides = [1, 1]} : vector<1x128xf32> to vector<1x32xf32>
    %558 = vector.extract_strided_slice %554 {offsets = [0, 64], sizes = [1, 32], strides = [1, 1]} : vector<1x128xf32> to vector<1x32xf32>
    %559 = arith.mulf %557, %558 : vector<1x32xf32>
    %560 = arith.addf %556, %559 : vector<1x32xf32>
    %561 = vector.extract_strided_slice %553 {offsets = [0, 96], sizes = [1, 32], strides = [1, 1]} : vector<1x128xf32> to vector<1x32xf32>
    %562 = math.tanh %560 : vector<1x32xf32>
    %563 = arith.mulf %561, %562 : vector<1x32xf32>
    %564 = vector.shape_cast %563 : vector<1x32xf32> to vector<1x32xf32>
    %565 = vector.broadcast %564 : vector<1x32xf32> to vector<8x32xf32>
    %566 = arith.select %409, %565, %544 : vector<8x32xi1>, vector<8x32xf32>
    %567 = vector.extract_strided_slice %341 {offsets = [6, 0], sizes = [1, 128], strides = [1, 1]} : vector<8x128xf32> to vector<1x128xf32>
    %568 = arith.truncf %563 : vector<1x32xf32> to vector<1x32xbf16>
    %cst_122 = arith.constant dense<0.000000e+00> : vector<1x128xf32>
    %569 = tpu.matmul %568, %3, %cst_122 {dimension_numbers = #tpu.dot_dimension_numbers<[1], [0], [0], [1], [0, 0, 1, 1], [], []>} : vector<1x32xbf16>, vector<32x128xbf16>, vector<1x128xf32> -> vector<1x128xf32>
    %570 = arith.addf %567, %569 : vector<1x128xf32>
    %571 = arith.negf %570 : vector<1x128xf32>
    %572 = math.exp %571 : vector<1x128xf32>
    %cst_123 = arith.constant 1.000000e+00 : f32
    %573 = vector.broadcast %cst_123 : f32 to vector<1x128xf32>
    %574 = arith.addf %573, %572 : vector<1x128xf32>
    %575 = arith.divf %573, %574 : vector<1x128xf32>
    %576 = math.tanh %570 : vector<1x128xf32>
    %577 = vector.extract_strided_slice %575 {offsets = [0, 32], sizes = [1, 32], strides = [1, 1]} : vector<1x128xf32> to vector<1x32xf32>
    %578 = arith.mulf %577, %560 : vector<1x32xf32>
    %579 = vector.extract_strided_slice %575 {offsets = [0, 0], sizes = [1, 32], strides = [1, 1]} : vector<1x128xf32> to vector<1x32xf32>
    %580 = vector.extract_strided_slice %576 {offsets = [0, 64], sizes = [1, 32], strides = [1, 1]} : vector<1x128xf32> to vector<1x32xf32>
    %581 = arith.mulf %579, %580 : vector<1x32xf32>
    %582 = arith.addf %578, %581 : vector<1x32xf32>
    %583 = vector.extract_strided_slice %575 {offsets = [0, 96], sizes = [1, 32], strides = [1, 1]} : vector<1x128xf32> to vector<1x32xf32>
    %584 = math.tanh %582 : vector<1x32xf32>
    %585 = arith.mulf %583, %584 : vector<1x32xf32>
    %586 = vector.shape_cast %585 : vector<1x32xf32> to vector<1x32xf32>
    %587 = vector.broadcast %586 : vector<1x32xf32> to vector<8x32xf32>
    %588 = arith.select %420, %587, %566 : vector<8x32xi1>, vector<8x32xf32>
    %589 = vector.extract_strided_slice %341 {offsets = [7, 0], sizes = [1, 128], strides = [1, 1]} : vector<8x128xf32> to vector<1x128xf32>
    %590 = arith.truncf %585 : vector<1x32xf32> to vector<1x32xbf16>
    %cst_124 = arith.constant dense<0.000000e+00> : vector<1x128xf32>
    %591 = tpu.matmul %590, %3, %cst_124 {dimension_numbers = #tpu.dot_dimension_numbers<[1], [0], [0], [1], [0, 0, 1, 1], [], []>} : vector<1x32xbf16>, vector<32x128xbf16>, vector<1x128xf32> -> vector<1x128xf32>
    %592 = arith.addf %589, %591 : vector<1x128xf32>
    %593 = arith.negf %592 : vector<1x128xf32>
    %594 = math.exp %593 : vector<1x128xf32>
    %cst_125 = arith.constant 1.000000e+00 : f32
    %595 = vector.broadcast %cst_125 : f32 to vector<1x128xf32>
    %596 = arith.addf %595, %594 : vector<1x128xf32>
    %597 = arith.divf %595, %596 : vector<1x128xf32>
    %598 = math.tanh %592 : vector<1x128xf32>
    %599 = vector.extract_strided_slice %597 {offsets = [0, 32], sizes = [1, 32], strides = [1, 1]} : vector<1x128xf32> to vector<1x32xf32>
    %600 = arith.mulf %599, %582 : vector<1x32xf32>
    %601 = vector.extract_strided_slice %597 {offsets = [0, 0], sizes = [1, 32], strides = [1, 1]} : vector<1x128xf32> to vector<1x32xf32>
    %602 = vector.extract_strided_slice %598 {offsets = [0, 64], sizes = [1, 32], strides = [1, 1]} : vector<1x128xf32> to vector<1x32xf32>
    %603 = arith.mulf %601, %602 : vector<1x32xf32>
    %604 = arith.addf %600, %603 : vector<1x32xf32>
    %605 = vector.extract_strided_slice %597 {offsets = [0, 96], sizes = [1, 32], strides = [1, 1]} : vector<1x128xf32> to vector<1x32xf32>
    %606 = math.tanh %604 : vector<1x32xf32>
    %607 = arith.mulf %605, %606 : vector<1x32xf32>
    %608 = vector.shape_cast %607 : vector<1x32xf32> to vector<1x32xf32>
    %609 = vector.broadcast %608 : vector<1x32xf32> to vector<8x32xf32>
    %610 = arith.select %431, %609, %588 : vector<8x32xi1>, vector<8x32xf32>
    %611 = arith.truncf %610 : vector<8x32xf32> to vector<8x32xbf16>
    %c0_126 = arith.constant 0 : index
    %c0_127 = arith.constant 0 : index
    %612 = vector.load %arg7[%c0_126, %c0_127] : memref<32x5xbf16, #tpu.memory_space<vmem>>, vector<32x5xbf16>
    %cst_128 = arith.constant dense<0.000000e+00> : vector<8x5xf32>
    %613 = tpu.matmul %611, %612, %cst_128 {dimension_numbers = #tpu.dot_dimension_numbers<[1], [0], [0], [1], [0, 0, 1, 1], [], []>} : vector<8x32xbf16>, vector<32x5xbf16>, vector<8x5xf32> -> vector<8x5xf32>
    %c0_129 = arith.constant 0 : index
    %c0_130 = arith.constant 0 : index
    %614 = vector.load %arg8[%c0_129, %c0_130] : memref<1x5xf32, #tpu.memory_space<vmem>>, vector<1x5xf32>
    %615 = vector.broadcast %614 : vector<1x5xf32> to vector<8x5xf32>
    %616 = arith.addf %613, %615 : vector<8x5xf32>
    %617 = tpu.iota {dimensions = array<i32: 1>} : vector<5x5xi32>
    %618 = tpu.iota {dimensions = array<i32: 0>} : vector<5x5xi32>
    %619 = arith.cmpi eq, %617, %618 : vector<5x5xi32>
    %620 = tpu.iota {dimensions = array<i32: 1>} : vector<1x5xi32>
    %621 = tpu.iota {dimensions = array<i32: 0>} : vector<5x1xi32>
    %622 = tpu.iota {dimensions = array<i32: 1>} : vector<1x8xi32>
    %623 = arith.sitofp %617 : vector<5x5xi32> to vector<5x5xf32>
    %624 = arith.sitofp %618 : vector<5x5xi32> to vector<5x5xf32>
    %625 = arith.sitofp %620 : vector<1x5xi32> to vector<1x5xf32>
    %626 = vector.extract_strided_slice %616 {offsets = [0, 0], sizes = [1, 5], strides = [1, 1]} : vector<8x5xf32> to vector<1x5xf32>
    %cst_131 = arith.constant 0.000000e+00 : f32
    %627 = vector.shape_cast %626 : vector<1x5xf32> to vector<1x5xf32>
    %628 = vector.broadcast %627 : vector<1x5xf32> to vector<5x5xf32>
    %629 = vector.broadcast %cst_131 : f32 to vector<5x5xf32>
    %630 = arith.select %619, %628, %629 : vector<5x5xi1>, vector<5x5xf32>
    %cst_132 = arith.constant dense<0.000000e+00> : vector<5xf32>
    %631 = vector.multi_reduction <add>, %630, %cst_132 [1] : vector<5x5xf32> to vector<5xf32>
    %632 = vector.shape_cast %631 : vector<5xf32> to vector<5x1xf32>
    %633 = vector.extract_strided_slice %616 {offsets = [2, 0], sizes = [1, 5], strides = [1, 1]} : vector<8x5xf32> to vector<1x5xf32>
    %cst_133 = arith.constant 0.000000e+00 : f32
    %634 = vector.shape_cast %633 : vector<1x5xf32> to vector<1x5xf32>
    %635 = vector.broadcast %634 : vector<1x5xf32> to vector<5x5xf32>
    %636 = vector.broadcast %cst_133 : f32 to vector<5x5xf32>
    %637 = arith.select %619, %635, %636 : vector<5x5xi1>, vector<5x5xf32>
    %cst_134 = arith.constant dense<0.000000e+00> : vector<5xf32>
    %638 = vector.multi_reduction <add>, %637, %cst_134 [1] : vector<5x5xf32> to vector<5xf32>
    %639 = vector.shape_cast %638 : vector<5xf32> to vector<5x1xf32>
    %640 = vector.extract_strided_slice %616 {offsets = [4, 0], sizes = [1, 5], strides = [1, 1]} : vector<8x5xf32> to vector<1x5xf32>
    %cst_135 = arith.constant 0.000000e+00 : f32
    %641 = vector.shape_cast %640 : vector<1x5xf32> to vector<1x5xf32>
    %642 = vector.broadcast %641 : vector<1x5xf32> to vector<5x5xf32>
    %643 = vector.broadcast %cst_135 : f32 to vector<5x5xf32>
    %644 = arith.select %619, %642, %643 : vector<5x5xi1>, vector<5x5xf32>
    %cst_136 = arith.constant dense<0.000000e+00> : vector<5xf32>
    %645 = vector.multi_reduction <add>, %644, %cst_136 [1] : vector<5x5xf32> to vector<5xf32>
    %646 = vector.shape_cast %645 : vector<5xf32> to vector<5x1xf32>
    %647 = vector.extract_strided_slice %616 {offsets = [6, 0], sizes = [1, 5], strides = [1, 1]} : vector<8x5xf32> to vector<1x5xf32>
    %cst_137 = arith.constant 0.000000e+00 : f32
    %648 = vector.shape_cast %647 : vector<1x5xf32> to vector<1x5xf32>
    %649 = vector.broadcast %648 : vector<1x5xf32> to vector<5x5xf32>
    %650 = vector.broadcast %cst_137 : f32 to vector<5x5xf32>
    %651 = arith.select %619, %649, %650 : vector<5x5xi1>, vector<5x5xf32>
    %cst_138 = arith.constant dense<0.000000e+00> : vector<5xf32>
    %652 = vector.multi_reduction <add>, %651, %cst_138 [1] : vector<5x5xf32> to vector<5xf32>
    %653 = vector.shape_cast %652 : vector<5xf32> to vector<5x1xf32>
    %c3_i32_139 = arith.constant 3 : i32
    %654 = vector.broadcast %c3_i32_139 : i32 to vector<1x5xi32>
    %655 = arith.cmpi eq, %620, %654 : vector<1x5xi32>
    %cst_140 = arith.constant 0.000000e+00 : f32
    %cst_141 = arith.constant -1.000000e+04 : f32
    %656 = vector.broadcast %cst_140 : f32 to vector<1x5xf32>
    %657 = vector.broadcast %cst_141 : f32 to vector<1x5xf32>
    %658 = arith.select %655, %656, %657 : vector<1x5xi1>, vector<1x5xf32>
    %659 = vector.broadcast %658 : vector<1x5xf32> to vector<5x5xf32>
    %660 = arith.addf %659, %4 : vector<5x5xf32>
    %cst_142 = arith.constant dense<0xFF800000> : vector<5xf32>
    %661 = vector.multi_reduction <maximumf>, %660, %cst_142 [1] : vector<5x5xf32> to vector<5xf32>
    %662 = vector.shape_cast %661 : vector<5xf32> to vector<5x1xf32>
    %663 = arith.addf %662, %632 : vector<5x1xf32>
    %664 = vector.broadcast %663 : vector<5x1xf32> to vector<5x5xf32>
    %665 = arith.addf %664, %5 : vector<5x5xf32>
    %cst_143 = arith.constant dense<0xFF800000> : vector<5xf32>
    %666 = vector.multi_reduction <maximumf>, %665, %cst_143 [0] : vector<5x5xf32> to vector<5xf32>
    %667 = vector.shape_cast %666 : vector<5xf32> to vector<1x5xf32>
    %668 = vector.broadcast %667 : vector<1x5xf32> to vector<5x5xf32>
    %669 = arith.cmpf oeq, %665, %668 : vector<5x5xf32>
    %cst_144 = arith.constant 5.000000e+00 : f32
    %670 = vector.broadcast %cst_144 : f32 to vector<5x5xf32>
    %671 = arith.select %669, %624, %670 : vector<5x5xi1>, vector<5x5xf32>
    %cst_145 = arith.constant dense<0x7F800000> : vector<5xf32>
    %672 = vector.multi_reduction <minimumf>, %671, %cst_145 [0] : vector<5x5xf32> to vector<5xf32>
    %673 = vector.shape_cast %672 : vector<5xf32> to vector<1x5xf32>
    %674 = arith.fptosi %673 : vector<1x5xf32> to vector<1x5xi32>
    %675 = vector.extract_strided_slice %616 {offsets = [1, 0], sizes = [1, 5], strides = [1, 1]} : vector<8x5xf32> to vector<1x5xf32>
    %676 = arith.addf %667, %675 : vector<1x5xf32>
    %677 = vector.broadcast %676 : vector<1x5xf32> to vector<5x5xf32>
    %678 = arith.addf %677, %4 : vector<5x5xf32>
    %cst_146 = arith.constant dense<0xFF800000> : vector<5xf32>
    %679 = vector.multi_reduction <maximumf>, %678, %cst_146 [1] : vector<5x5xf32> to vector<5xf32>
    %680 = vector.shape_cast %679 : vector<5xf32> to vector<5x1xf32>
    %681 = vector.broadcast %680 : vector<5x1xf32> to vector<5x5xf32>
    %682 = arith.cmpf oeq, %678, %681 : vector<5x5xf32>
    %cst_147 = arith.constant 5.000000e+00 : f32
    %683 = vector.broadcast %cst_147 : f32 to vector<5x5xf32>
    %684 = arith.select %682, %623, %683 : vector<5x5xi1>, vector<5x5xf32>
    %cst_148 = arith.constant dense<0x7F800000> : vector<5xf32>
    %685 = vector.multi_reduction <minimumf>, %684, %cst_148 [1] : vector<5x5xf32> to vector<5xf32>
    %686 = vector.shape_cast %685 : vector<5xf32> to vector<5x1xf32>
    %687 = arith.fptosi %686 : vector<5x1xf32> to vector<5x1xi32>
    %688 = arith.addf %680, %639 : vector<5x1xf32>
    %689 = vector.broadcast %688 : vector<5x1xf32> to vector<5x5xf32>
    %690 = arith.addf %689, %5 : vector<5x5xf32>
    %cst_149 = arith.constant dense<0xFF800000> : vector<5xf32>
    %691 = vector.multi_reduction <maximumf>, %690, %cst_149 [0] : vector<5x5xf32> to vector<5xf32>
    %692 = vector.shape_cast %691 : vector<5xf32> to vector<1x5xf32>
    %693 = vector.broadcast %692 : vector<1x5xf32> to vector<5x5xf32>
    %694 = arith.cmpf oeq, %690, %693 : vector<5x5xf32>
    %cst_150 = arith.constant 5.000000e+00 : f32
    %695 = vector.broadcast %cst_150 : f32 to vector<5x5xf32>
    %696 = arith.select %694, %624, %695 : vector<5x5xi1>, vector<5x5xf32>
    %cst_151 = arith.constant dense<0x7F800000> : vector<5xf32>
    %697 = vector.multi_reduction <minimumf>, %696, %cst_151 [0] : vector<5x5xf32> to vector<5xf32>
    %698 = vector.shape_cast %697 : vector<5xf32> to vector<1x5xf32>
    %699 = arith.fptosi %698 : vector<1x5xf32> to vector<1x5xi32>
    %700 = vector.extract_strided_slice %616 {offsets = [3, 0], sizes = [1, 5], strides = [1, 1]} : vector<8x5xf32> to vector<1x5xf32>
    %701 = arith.addf %692, %700 : vector<1x5xf32>
    %702 = vector.broadcast %701 : vector<1x5xf32> to vector<5x5xf32>
    %703 = arith.addf %702, %4 : vector<5x5xf32>
    %cst_152 = arith.constant dense<0xFF800000> : vector<5xf32>
    %704 = vector.multi_reduction <maximumf>, %703, %cst_152 [1] : vector<5x5xf32> to vector<5xf32>
    %705 = vector.shape_cast %704 : vector<5xf32> to vector<5x1xf32>
    %706 = vector.broadcast %705 : vector<5x1xf32> to vector<5x5xf32>
    %707 = arith.cmpf oeq, %703, %706 : vector<5x5xf32>
    %cst_153 = arith.constant 5.000000e+00 : f32
    %708 = vector.broadcast %cst_153 : f32 to vector<5x5xf32>
    %709 = arith.select %707, %623, %708 : vector<5x5xi1>, vector<5x5xf32>
    %cst_154 = arith.constant dense<0x7F800000> : vector<5xf32>
    %710 = vector.multi_reduction <minimumf>, %709, %cst_154 [1] : vector<5x5xf32> to vector<5xf32>
    %711 = vector.shape_cast %710 : vector<5xf32> to vector<5x1xf32>
    %712 = arith.fptosi %711 : vector<5x1xf32> to vector<5x1xi32>
    %713 = arith.addf %705, %646 : vector<5x1xf32>
    %714 = vector.broadcast %713 : vector<5x1xf32> to vector<5x5xf32>
    %715 = arith.addf %714, %5 : vector<5x5xf32>
    %cst_155 = arith.constant dense<0xFF800000> : vector<5xf32>
    %716 = vector.multi_reduction <maximumf>, %715, %cst_155 [0] : vector<5x5xf32> to vector<5xf32>
    %717 = vector.shape_cast %716 : vector<5xf32> to vector<1x5xf32>
    %718 = vector.broadcast %717 : vector<1x5xf32> to vector<5x5xf32>
    %719 = arith.cmpf oeq, %715, %718 : vector<5x5xf32>
    %cst_156 = arith.constant 5.000000e+00 : f32
    %720 = vector.broadcast %cst_156 : f32 to vector<5x5xf32>
    %721 = arith.select %719, %624, %720 : vector<5x5xi1>, vector<5x5xf32>
    %cst_157 = arith.constant dense<0x7F800000> : vector<5xf32>
    %722 = vector.multi_reduction <minimumf>, %721, %cst_157 [0] : vector<5x5xf32> to vector<5xf32>
    %723 = vector.shape_cast %722 : vector<5xf32> to vector<1x5xf32>
    %724 = arith.fptosi %723 : vector<1x5xf32> to vector<1x5xi32>
    %725 = vector.extract_strided_slice %616 {offsets = [5, 0], sizes = [1, 5], strides = [1, 1]} : vector<8x5xf32> to vector<1x5xf32>
    %726 = arith.addf %717, %725 : vector<1x5xf32>
    %727 = vector.broadcast %726 : vector<1x5xf32> to vector<5x5xf32>
    %728 = arith.addf %727, %4 : vector<5x5xf32>
    %cst_158 = arith.constant dense<0xFF800000> : vector<5xf32>
    %729 = vector.multi_reduction <maximumf>, %728, %cst_158 [1] : vector<5x5xf32> to vector<5xf32>
    %730 = vector.shape_cast %729 : vector<5xf32> to vector<5x1xf32>
    %731 = vector.broadcast %730 : vector<5x1xf32> to vector<5x5xf32>
    %732 = arith.cmpf oeq, %728, %731 : vector<5x5xf32>
    %cst_159 = arith.constant 5.000000e+00 : f32
    %733 = vector.broadcast %cst_159 : f32 to vector<5x5xf32>
    %734 = arith.select %732, %623, %733 : vector<5x5xi1>, vector<5x5xf32>
    %cst_160 = arith.constant dense<0x7F800000> : vector<5xf32>
    %735 = vector.multi_reduction <minimumf>, %734, %cst_160 [1] : vector<5x5xf32> to vector<5xf32>
    %736 = vector.shape_cast %735 : vector<5xf32> to vector<5x1xf32>
    %737 = arith.fptosi %736 : vector<5x1xf32> to vector<5x1xi32>
    %738 = arith.addf %730, %653 : vector<5x1xf32>
    %739 = vector.broadcast %738 : vector<5x1xf32> to vector<5x5xf32>
    %740 = arith.addf %739, %5 : vector<5x5xf32>
    %cst_161 = arith.constant dense<0xFF800000> : vector<5xf32>
    %741 = vector.multi_reduction <maximumf>, %740, %cst_161 [0] : vector<5x5xf32> to vector<5xf32>
    %742 = vector.shape_cast %741 : vector<5xf32> to vector<1x5xf32>
    %743 = vector.broadcast %742 : vector<1x5xf32> to vector<5x5xf32>
    %744 = arith.cmpf oeq, %740, %743 : vector<5x5xf32>
    %cst_162 = arith.constant 5.000000e+00 : f32
    %745 = vector.broadcast %cst_162 : f32 to vector<5x5xf32>
    %746 = arith.select %744, %624, %745 : vector<5x5xi1>, vector<5x5xf32>
    %cst_163 = arith.constant dense<0x7F800000> : vector<5xf32>
    %747 = vector.multi_reduction <minimumf>, %746, %cst_163 [0] : vector<5x5xf32> to vector<5xf32>
    %748 = vector.shape_cast %747 : vector<5xf32> to vector<1x5xf32>
    %749 = arith.fptosi %748 : vector<1x5xf32> to vector<1x5xi32>
    %750 = vector.extract_strided_slice %616 {offsets = [7, 0], sizes = [1, 5], strides = [1, 1]} : vector<8x5xf32> to vector<1x5xf32>
    %751 = arith.addf %742, %750 : vector<1x5xf32>
    %752 = vector.extract_strided_slice %4 {offsets = [4, 0], sizes = [1, 5], strides = [1, 1]} : vector<5x5xf32> to vector<1x5xf32>
    %753 = arith.addf %751, %752 : vector<1x5xf32>
    %cst_164 = arith.constant dense<0xFF800000> : vector<1xf32>
    %754 = vector.multi_reduction <maximumf>, %753, %cst_164 [1] : vector<1x5xf32> to vector<1xf32>
    %755 = vector.shape_cast %754 : vector<1xf32> to vector<1x1xf32>
    %756 = vector.broadcast %755 : vector<1x1xf32> to vector<1x5xf32>
    %757 = arith.cmpf oeq, %753, %756 : vector<1x5xf32>
    %cst_165 = arith.constant 5.000000e+00 : f32
    %758 = vector.broadcast %cst_165 : f32 to vector<1x5xf32>
    %759 = arith.select %757, %625, %758 : vector<1x5xi1>, vector<1x5xf32>
    %cst_166 = arith.constant dense<0x7F800000> : vector<1xf32>
    %760 = vector.multi_reduction <minimumf>, %759, %cst_166 [1] : vector<1x5xf32> to vector<1xf32>
    %761 = vector.shape_cast %760 : vector<1xf32> to vector<1x1xf32>
    %762 = arith.fptosi %761 : vector<1x1xf32> to vector<1x1xi32>
    %c7_i32_167 = arith.constant 7 : i32
    %763 = vector.broadcast %c7_i32_167 : i32 to vector<1x8xi32>
    %764 = arith.cmpi eq, %622, %763 : vector<1x8xi32>
    %c0_i32_168 = arith.constant 0 : i32
    %765 = vector.shape_cast %762 : vector<1x1xi32> to vector<1x1xi32>
    %766 = vector.broadcast %765 : vector<1x1xi32> to vector<1x8xi32>
    %767 = vector.broadcast %c0_i32_168 : i32 to vector<1x8xi32>
    %768 = arith.select %764, %766, %767 : vector<1x8xi1>, vector<1x8xi32>
    %769 = vector.broadcast %762 : vector<1x1xi32> to vector<1x5xi32>
    %770 = arith.cmpi eq, %620, %769 : vector<1x5xi32>
    %c0_i32_169 = arith.constant 0 : i32
    %771 = vector.broadcast %c0_i32_169 : i32 to vector<1x5xi32>
    %772 = arith.select %770, %749, %771 : vector<1x5xi1>, vector<1x5xi32>
    %cst_170 = arith.constant dense<0> : vector<1xi32>
    %773 = vector.multi_reduction <add>, %772, %cst_170 [1] : vector<1x5xi32> to vector<1xi32>
    %774 = vector.shape_cast %773 : vector<1xi32> to vector<1x1xi32>
    %c6_i32_171 = arith.constant 6 : i32
    %775 = vector.broadcast %c6_i32_171 : i32 to vector<1x8xi32>
    %776 = arith.cmpi eq, %622, %775 : vector<1x8xi32>
    %777 = vector.shape_cast %774 : vector<1x1xi32> to vector<1x1xi32>
    %778 = vector.broadcast %777 : vector<1x1xi32> to vector<1x8xi32>
    %779 = arith.select %776, %778, %768 : vector<1x8xi1>, vector<1x8xi32>
    %780 = vector.broadcast %774 : vector<1x1xi32> to vector<5x1xi32>
    %781 = arith.cmpi eq, %621, %780 : vector<5x1xi32>
    %c0_i32_172 = arith.constant 0 : i32
    %782 = vector.broadcast %c0_i32_172 : i32 to vector<5x1xi32>
    %783 = arith.select %781, %737, %782 : vector<5x1xi1>, vector<5x1xi32>
    %cst_173 = arith.constant dense<0> : vector<1xi32>
    %784 = vector.multi_reduction <add>, %783, %cst_173 [0] : vector<5x1xi32> to vector<1xi32>
    %785 = vector.shape_cast %784 : vector<1xi32> to vector<1x1xi32>
    %c5_i32_174 = arith.constant 5 : i32
    %786 = vector.broadcast %c5_i32_174 : i32 to vector<1x8xi32>
    %787 = arith.cmpi eq, %622, %786 : vector<1x8xi32>
    %788 = vector.shape_cast %785 : vector<1x1xi32> to vector<1x1xi32>
    %789 = vector.broadcast %788 : vector<1x1xi32> to vector<1x8xi32>
    %790 = arith.select %787, %789, %779 : vector<1x8xi1>, vector<1x8xi32>
    %791 = vector.broadcast %785 : vector<1x1xi32> to vector<1x5xi32>
    %792 = arith.cmpi eq, %620, %791 : vector<1x5xi32>
    %c0_i32_175 = arith.constant 0 : i32
    %793 = vector.broadcast %c0_i32_175 : i32 to vector<1x5xi32>
    %794 = arith.select %792, %724, %793 : vector<1x5xi1>, vector<1x5xi32>
    %cst_176 = arith.constant dense<0> : vector<1xi32>
    %795 = vector.multi_reduction <add>, %794, %cst_176 [1] : vector<1x5xi32> to vector<1xi32>
    %796 = vector.shape_cast %795 : vector<1xi32> to vector<1x1xi32>
    %c4_i32_177 = arith.constant 4 : i32
    %797 = vector.broadcast %c4_i32_177 : i32 to vector<1x8xi32>
    %798 = arith.cmpi eq, %622, %797 : vector<1x8xi32>
    %799 = vector.shape_cast %796 : vector<1x1xi32> to vector<1x1xi32>
    %800 = vector.broadcast %799 : vector<1x1xi32> to vector<1x8xi32>
    %801 = arith.select %798, %800, %790 : vector<1x8xi1>, vector<1x8xi32>
    %802 = vector.broadcast %796 : vector<1x1xi32> to vector<5x1xi32>
    %803 = arith.cmpi eq, %621, %802 : vector<5x1xi32>
    %c0_i32_178 = arith.constant 0 : i32
    %804 = vector.broadcast %c0_i32_178 : i32 to vector<5x1xi32>
    %805 = arith.select %803, %712, %804 : vector<5x1xi1>, vector<5x1xi32>
    %cst_179 = arith.constant dense<0> : vector<1xi32>
    %806 = vector.multi_reduction <add>, %805, %cst_179 [0] : vector<5x1xi32> to vector<1xi32>
    %807 = vector.shape_cast %806 : vector<1xi32> to vector<1x1xi32>
    %c3_i32_180 = arith.constant 3 : i32
    %808 = vector.broadcast %c3_i32_180 : i32 to vector<1x8xi32>
    %809 = arith.cmpi eq, %622, %808 : vector<1x8xi32>
    %810 = vector.shape_cast %807 : vector<1x1xi32> to vector<1x1xi32>
    %811 = vector.broadcast %810 : vector<1x1xi32> to vector<1x8xi32>
    %812 = arith.select %809, %811, %801 : vector<1x8xi1>, vector<1x8xi32>
    %813 = vector.broadcast %807 : vector<1x1xi32> to vector<1x5xi32>
    %814 = arith.cmpi eq, %620, %813 : vector<1x5xi32>
    %c0_i32_181 = arith.constant 0 : i32
    %815 = vector.broadcast %c0_i32_181 : i32 to vector<1x5xi32>
    %816 = arith.select %814, %699, %815 : vector<1x5xi1>, vector<1x5xi32>
    %cst_182 = arith.constant dense<0> : vector<1xi32>
    %817 = vector.multi_reduction <add>, %816, %cst_182 [1] : vector<1x5xi32> to vector<1xi32>
    %818 = vector.shape_cast %817 : vector<1xi32> to vector<1x1xi32>
    %c2_i32_183 = arith.constant 2 : i32
    %819 = vector.broadcast %c2_i32_183 : i32 to vector<1x8xi32>
    %820 = arith.cmpi eq, %622, %819 : vector<1x8xi32>
    %821 = vector.shape_cast %818 : vector<1x1xi32> to vector<1x1xi32>
    %822 = vector.broadcast %821 : vector<1x1xi32> to vector<1x8xi32>
    %823 = arith.select %820, %822, %812 : vector<1x8xi1>, vector<1x8xi32>
    %824 = vector.broadcast %818 : vector<1x1xi32> to vector<5x1xi32>
    %825 = arith.cmpi eq, %621, %824 : vector<5x1xi32>
    %c0_i32_184 = arith.constant 0 : i32
    %826 = vector.broadcast %c0_i32_184 : i32 to vector<5x1xi32>
    %827 = arith.select %825, %687, %826 : vector<5x1xi1>, vector<5x1xi32>
    %cst_185 = arith.constant dense<0> : vector<1xi32>
    %828 = vector.multi_reduction <add>, %827, %cst_185 [0] : vector<5x1xi32> to vector<1xi32>
    %829 = vector.shape_cast %828 : vector<1xi32> to vector<1x1xi32>
    %c1_i32_186 = arith.constant 1 : i32
    %830 = vector.broadcast %c1_i32_186 : i32 to vector<1x8xi32>
    %831 = arith.cmpi eq, %622, %830 : vector<1x8xi32>
    %832 = vector.shape_cast %829 : vector<1x1xi32> to vector<1x1xi32>
    %833 = vector.broadcast %832 : vector<1x1xi32> to vector<1x8xi32>
    %834 = arith.select %831, %833, %823 : vector<1x8xi1>, vector<1x8xi32>
    %835 = vector.broadcast %829 : vector<1x1xi32> to vector<1x5xi32>
    %836 = arith.cmpi eq, %620, %835 : vector<1x5xi32>
    %c0_i32_187 = arith.constant 0 : i32
    %837 = vector.broadcast %c0_i32_187 : i32 to vector<1x5xi32>
    %838 = arith.select %836, %674, %837 : vector<1x5xi1>, vector<1x5xi32>
    %cst_188 = arith.constant dense<0> : vector<1xi32>
    %839 = vector.multi_reduction <add>, %838, %cst_188 [1] : vector<1x5xi32> to vector<1xi32>
    %840 = vector.shape_cast %839 : vector<1xi32> to vector<1x1xi32>
    %c0_i32_189 = arith.constant 0 : i32
    %841 = vector.broadcast %c0_i32_189 : i32 to vector<1x8xi32>
    %842 = arith.cmpi eq, %622, %841 : vector<1x8xi32>
    %843 = vector.shape_cast %840 : vector<1x1xi32> to vector<1x1xi32>
    %844 = vector.broadcast %843 : vector<1x1xi32> to vector<1x8xi32>
    %845 = arith.select %842, %844, %834 : vector<1x8xi1>, vector<1x8xi32>
    %c0_190 = arith.constant 0 : index
    %c0_191 = arith.constant 0 : index
    %846 = vector.load %arg11[%c0_190, %c0_191] : memref<1x8xi32, #tpu.memory_space<vmem>>, vector<1x8xi32>
    tpu.vector_store %arg11[%c0_190, %c0_191], %845 {strides = array<i32>} : memref<1x8xi32, #tpu.memory_space<vmem>>, vector<1x8xi32>,
    %c0_192 = arith.constant 0 : index
    %c0_193 = arith.constant 0 : index
    %847 = vector.load %arg12[%c0_192, %c0_193] : memref<1x1xf32, #tpu.memory_space<vmem>>, vector<1x1xf32>
    tpu.vector_store %arg12[%c0_192, %c0_193], %755 {strides = array<i32>} : memref<1x1xf32, #tpu.memory_space<vmem>>, vector<1x1xf32>,
    return
  }
}

</mosaic_0001>

<llo_original>
// kernel: bilstm_crf_forward.1
$region0: #{bilstm_crf_forward.1}
  #allocation0 [shape = 'u32[]', space=smem, size = 0x4, offset = 0x4, fixed_abs, tag = 'smem constant byte address 0x4 - core index']
  #allocation1 [shape = 'u32[144,128]{1,0:T(1,128)}', space=vmem, size = 0x12000, scoped, tag = 'internal scratch']
  %s0 = inlined_call_operand.vmem [shape: f32[8,64], index: 0, kind: input, shape index: {}]
  %s1 = inlined_call_operand.vmem [shape: bf16[64,128], index: 1, kind: input, shape index: {}]
  %s2 = inlined_call_operand.vmem [shape: bf16[64,128], index: 2, kind: input, shape index: {}]
  %s3 = inlined_call_operand.hbm [shape: bf16[32,128], index: 3, kind: input, shape index: {}]
  %s4 = inlined_call_operand.hbm [shape: bf16[32,128], index: 4, kind: input, shape index: {}]
  %s5 = inlined_call_operand.vmem [shape: f32[1,128], index: 5, kind: input, shape index: {}]
  %s6 = inlined_call_operand.vmem [shape: f32[1,128], index: 6, kind: input, shape index: {}]
  %s7 = inlined_call_operand.vmem [shape: bf16[32,5], index: 7, kind: input, shape index: {}]
  %s8 = inlined_call_operand.vmem [shape: f32[1,5], index: 8, kind: input, shape index: {}]
  %s9 = inlined_call_operand.vmem [shape: f32[5,5], index: 9, kind: input, shape index: {}]
  %s10 = inlined_call_operand.vmem [shape: f32[5,5], index: 10, kind: input, shape index: {}]
  %s11 = inlined_call_operand.hbm [shape: s32[1,8], index: 11, kind: output, shape index: {0}]
  %s12 = inlined_call_operand.hbm [shape: f32[1,1], index: 12, kind: output, shape index: {1}]
  %13 = xla_tuple %s11, %s12
  %s14 = sld [smem:[#allocation0]]
  $region70: #{bilstm_crf_forward.1} parent=0
    _
  %s16 = ssub.s32 1, %s14
  %s17 = scalar_select 0, %s16, %s14
  $region1: #{bilstm_crf_forward.1} parent=0
    #allocation2 [shape = 'u8[8192]{0}', space=vmem, size = 0x2000, scoped, tag = 'input window, operand 3, single buffered']
    #allocation3 [shape = 's32[1]{0}', space=sflag, size = 0x4, scoped, tag = 'scoped memory for bilstm_crf_forward.1']
    #allocation4 [shape = 's32[1]{0}', space=sflag, size = 0x4, scoped, tag = 'scoped memory for bilstm_crf_forward.1']
    #allocation5 [shape = 'u8[8192]{0}', space=vmem, size = 0x2000, scoped, tag = 'input window, operand 4, single buffered']
    #allocation6 [shape = 's32[1]{0}', space=sflag, size = 0x4, scoped, tag = 'scoped memory for bilstm_crf_forward.1']
    #allocation7 [shape = 'u8[512]{0}', space=vmem, size = 0x400, scoped, tag = 'output window, operand 0, single buffered']
    #allocation8 [shape = 'u8[512]{0}', space=vmem, size = 0x400, scoped, tag = 'output window, operand 1, single buffered']
    #allocation9 [shape = 's32[1]{0}', space=sflag, size = 0x4, scoped, tag = 'scoped memory for bilstm_crf_forward.1']
    %18 = vsyncpa [#allocation3], 0
    %19 = vsyncpa [#allocation6], 0
    %20 = vsyncpa [#allocation4], 0
    %21 = vsyncpa [#allocation9], 0
    // Predicated region
    $region2: #{bilstm_crf_forward.1} parent=1 // pred_check
      _
    $region3: #{bilstm_crf_forward.1} parent=1 // pred_check_branch
      %23 = sbr.rel (0) target = $region5
    $region4: #{bilstm_crf_forward.1} parent=1 // pred_region
      _
    $region5: #{bilstm_crf_forward.1} parent=1 // pred_fallthru
      _
    // Predicated region
    $region6: #{bilstm_crf_forward.1} parent=1 // pred_check
      _
    $region7: #{bilstm_crf_forward.1} parent=1 // pred_check_branch
      %25 = sbr.rel (0) target = $region9
    $region8: #{bilstm_crf_forward.1} parent=1 // pred_region
      _
    $region9: #{bilstm_crf_forward.1} parent=1 // pred_fallthru
      _
    // Predicated region
    $region10: #{bilstm_crf_forward.1} parent=1 // pred_check
      _
    $region11: #{bilstm_crf_forward.1} parent=1 // pred_check_branch
      %27 = sbr.rel (0) target = $region13
    $region12: #{bilstm_crf_forward.1} parent=1 // pred_region
      _
    $region13: #{bilstm_crf_forward.1} parent=1 // pred_fallthru
      _
    // Predicated region
    $region14: #{bilstm_crf_forward.1} parent=1 // pred_check
      _
    $region15: #{bilstm_crf_forward.1} parent=1 // pred_check_branch
      %29 = sbr.rel (0) target = $region17
    $region16: #{bilstm_crf_forward.1} parent=1 // pred_region
      %s31 = ssub.s32 256, 256
      %32 = vsyncadd [#allocation3], %s31
      %s33 = sshll.u32 [#allocation2], 4
      %s34 = int_to_ptr.vmem [resolvable:$true] %s33
      %39 = dma.hbm_to_vmem [thread:$0]  %s3, 256, %s34, [#allocation3], 64, 64, 4
    $region17: #{bilstm_crf_forward.1} parent=1 // pred_fallthru
      _
    // Predicated region
    $region18: #{bilstm_crf_forward.1} parent=1 // pred_check
      _
    $region19: #{bilstm_crf_forward.1} parent=1 // pred_check_branch
      %41 = sbr.rel (0) target = $region21
    $region20: #{bilstm_crf_forward.1} parent=1 // pred_region
      %s43 = ssub.s32 256, 256
      %44 = vsyncadd [#allocation6], %s43
      %s45 = sshll.u32 [#allocation5], 4
      %s46 = int_to_ptr.vmem [resolvable:$true] %s45
      %51 = dma.hbm_to_vmem [thread:$0]  %s4, 256, %s46, [#allocation6], 64, 64, 4
    $region21: #{bilstm_crf_forward.1} parent=1 // pred_fallthru
      _
    // Predicated region
    $region22: #{bilstm_crf_forward.1} parent=1 // pred_check
      _
    $region23: #{bilstm_crf_forward.1} parent=1 // pred_check_branch
      %53 = sbr.rel (0) target = $region25
    $region24: #{bilstm_crf_forward.1} parent=1 // pred_region
      _
    $region25: #{bilstm_crf_forward.1} parent=1 // pred_fallthru
      _
    // Predicated region
    $region26: #{bilstm_crf_forward.1} parent=1 // pred_check
      _
    $region27: #{bilstm_crf_forward.1} parent=1 // pred_check_branch
      %55 = sbr.rel (0) target = $region29
    $region28: #{bilstm_crf_forward.1} parent=1 // pred_region
      _
    $region29: #{bilstm_crf_forward.1} parent=1 // pred_fallthru
      _
    // Predicated region
    $region30: #{bilstm_crf_forward.1} parent=1 // pred_check
      _
    $region31: #{bilstm_crf_forward.1} parent=1 // pred_check_branch
      %57 = sbr.rel (0) target = $region33
    $region32: #{bilstm_crf_forward.1} parent=1 // pred_region
      _
    $region33: #{bilstm_crf_forward.1} parent=1 // pred_fallthru
      _
    // Predicated region
    $region34: #{bilstm_crf_forward.1} parent=1 // pred_check
      _
    $region35: #{bilstm_crf_forward.1} parent=1 // pred_check_branch
      %59 = sbr.rel (0) target = $region37
    $region36: #{bilstm_crf_forward.1} parent=1 // pred_region
      _
    $region37: #{bilstm_crf_forward.1} parent=1 // pred_fallthru
      _
    // Predicated region
    $region38: #{bilstm_crf_forward.1} parent=1 // pred_check
      _
    $region39: #{bilstm_crf_forward.1} parent=1 // pred_check_branch
      %61 = sbr.rel (0) target = $region41
    $region40: #{bilstm_crf_forward.1} parent=1 // pred_region
      _
    $region41: #{bilstm_crf_forward.1} parent=1 // pred_fallthru
      _
    // Predicated region
    $region42: #{bilstm_crf_forward.1} parent=1 // pred_check
      _
    $region43: #{bilstm_crf_forward.1} parent=1 // pred_check_branch
      %63 = sbr.rel (0) target = $region45
    $region44: #{bilstm_crf_forward.1} parent=1 // pred_region
      _
    $region45: #{bilstm_crf_forward.1} parent=1 // pred_fallthru
      _
    // Predicated region
    $region46: #{bilstm_crf_forward.1} parent=1 // pred_check
      _
    $region47: #{bilstm_crf_forward.1} parent=1 // pred_check_branch
      %65 = sbr.rel (0) target = $region49
    $region48: #{bilstm_crf_forward.1} parent=1 // pred_region
      %66 = dma.done [#allocation3], 256
    $region49: #{bilstm_crf_forward.1} parent=1 // pred_fallthru
      _
    // Predicated region
    $region50: #{bilstm_crf_forward.1} parent=1 // pred_check
      _
    $region51: #{bilstm_crf_forward.1} parent=1 // pred_check_branch
      %68 = sbr.rel (0) target = $region53
    $region52: #{bilstm_crf_forward.1} parent=1 // pred_region
      %69 = dma.done [#allocation6], 256
    $region53: #{bilstm_crf_forward.1} parent=1 // pred_fallthru
      _
    %v71 = vld [vmem:[%s0] sm:$0xff]
    %v72 = vpack.c.bf16 %v71, %v71
    %v73 = vld [vmem:[#allocation2] sm:$0xf]
    %v74 = vld [vmem:[#allocation2 + $0x4] sm:$0xf]
    %v75 = vld [vmem:[#allocation2 + $0x8] sm:$0xf]
    %v76 = vld [vmem:[#allocation2 + $0xc] sm:$0xf]
    %v77 = vld [vmem:[#allocation5] sm:$0xf]
    %v78 = vld [vmem:[#allocation5 + $0x4] sm:$0xf]
    %v79 = vld [vmem:[#allocation5 + $0x8] sm:$0xf]
    %v80 = vld [vmem:[#allocation5 + $0xc] sm:$0xf]
    %v81 = vld [vmem:[%s9] sm:$0x1f]
    %v82 = vld [vmem:[%s10] sm:$0x1f]
    %v83 = vld [vmem:[%s1] sm:$0xf]
    %v84 = vld [vmem:[%s1 + $0x4] sm:$0xf]
    %v85 = vld [vmem:[%s1 + $0x8] sm:$0xf]
    %v86 = vld [vmem:[%s1 + $0xc] sm:$0xf]
    %v87 = vld [vmem:[%s1 + $0x10] sm:$0xf]
    %v88 = vld [vmem:[%s1 + $0x14] sm:$0xf]
    %v89 = vld [vmem:[%s1 + $0x18] sm:$0xf]
    %v90 = vld [vmem:[%s1 + $0x1c] sm:$0xf]
    %v91 = vld [vmem:[%s5] sm:$0x1]
    %v93 = vlaneseq
    %v94 = vshrl.u32 %v93, 7
    %v95 = vsub.s32 0, %v94
    %v96 = vrot.slane %v91, %v95
    %v106 = vunpack.c.l.b16 %v83
    %v107 = vunpack.c.l.b16 %v84
    %v108 = vunpack.c.l.b16 %v85
    %v109 = vunpack.c.l.b16 %v86
    %v110 = vunpack.c.l.b16 %v87
    %v111 = vunpack.c.l.b16 %v88
    %v112 = vunpack.c.l.b16 %v89
    %v113 = vunpack.c.l.b16 %v90
    %v114 = vpack.c.b16 %v107, %v106
    %v115 = vpack.c.b16 %v109, %v108
    %v116 = vpack.c.b16 %v111, %v110
    %v117 = vpack.c.b16 %v113, %v112
    %vm122 = vcmask 523264
    %v124 = vsel %vm122, %v72, 0
    %126 = vmatprep.subr.bf16.mxu0 0
    %127 = vmatpush1.bf16.msra.mxu0 %v114
    %128 = vmatprep.subr.bf16.mxu0 0
    %129 = vmatpush1.bf16.msra.mxu0 %v115
    %130 = vmatprep.subr.bf16.mxu0 0
    %131 = vmatpush1.bf16.msra.mxu0 %v116
    %132 = vmatprep.subr.bf16.mxu0 0
    %133 = vmatpush1.bf16.msra.mxu0 %v117
    %134 = vmatprep.subr.bf16.mxu0 0
    %135 = vmatpush1.bf16.msra.mxu0 0
    %136 = vmatprep.subr.bf16.mxu0 0
    %137 = vmatpush1.bf16.msra.mxu0 0
    %138 = vmatprep.subr.bf16.mxu0 0
    %139 = vmatpush1.bf16.msra.mxu0 0
    %140 = vmatprep.subr.bf16.mxu0 0
    %141 = vmatpush1.bf16.msra.mxu0 0
    %142 = vmatprep.subr.bf16.mxu0 0
    %143 = vmatpush1.bf16.msra.mxu0 0
    %144 = vmatprep.subr.bf16.mxu0 0
    %145 = vmatpush1.bf16.msra.mxu0 0
    %146 = vmatprep.subr.bf16.mxu0 0
    %147 = vmatpush1.bf16.msra.mxu0 0
    %148 = vmatprep.subr.bf16.mxu0 0
    %149 = vmatpush1.bf16.msra.mxu0 0
    %150 = vmatprep.subr.bf16.mxu0 0
    %151 = vmatpush1.bf16.msra.mxu0 0
    %152 = vmatprep.subr.bf16.mxu0 0
    %153 = vmatpush1.bf16.msra.mxu0 0
    %154 = vmatprep.subr.bf16.mxu0 0
    %155 = vmatpush1.bf16.msra.mxu0 0
    %156 = vmatprep.subr.bf16.mxu0 0
    %157 = vmatpush1.bf16.msra.mxu0 0
    %158 = vmatprep.mubr.bf16.mxu0 0
    %159 = vmatmul.mubr.bf16.gmra.mrb[0].mxu0 %v124
    %v160 = vpop.f32.mrb[0].mxu0
    %v161 = vadd.f32 %v96, %v160
    %v162 = vpop.f32.mrb[0].mxu0
    %v163 = vpop.f32.mrb[0].mxu0
    %v164 = vpop.f32.mrb[0].mxu0
    %165 = vdwg.mxu0
    %v166 = vlaneseq
    %v167 = vshrl.u32 %v166, 7
    %v168 = vlaneseq
    %v169 = vand.u32 %v168, 127
    %vm170 = vcmp.eq.s32.totalorder %v167, 0
    %vm171 = vcmp.lt.s32.totalorder %v169, 16
    %vm172 = vcmp.ge.s32.totalorder %v169, 48
    %vm173 = vmor %vm171, %vm172
    %vm174 = vmand %vm170, %vm173
    %vm175 = vcmp.eq.s32.totalorder %v167, 7
    %vm176 = vcmp.ge.s32.totalorder %v169, 16
    %vm177 = vmand %vm175, %vm176
    %vm178 = vcmp.lt.s32.totalorder %v169, 48
    %vm179 = vmand %vm177, %vm178
    %vm180 = vmor %vm174, %vm179
    %vm181 = vcmp.eq.s32.totalorder %v167, 1
    %vm182 = vmand %vm181, %vm173
    %vm183 = vcmp.eq.s32.totalorder %v167, 6
    %vm184 = vmand %vm183, %vm176
    %vm185 = vmand %vm184, %vm178
    %vm186 = vmor %vm182, %vm185
    %vm187 = vcmp.eq.s32.totalorder %v167, 2
    %vm188 = vmand %vm187, %vm173
    %vm189 = vcmp.eq.s32.totalorder %v167, 5
    %vm190 = vmand %vm189, %vm176
    %vm191 = vmand %vm190, %vm178
    %vm192 = vmor %vm188, %vm191
    %vm193 = vcmp.eq.s32.totalorder %v167, 3
    %vm194 = vmand %vm193, %vm173
    %vm195 = vcmp.eq.s32.totalorder %v167, 4
    %vm196 = vmand %vm195, %vm176
    %vm197 = vmand %vm196, %vm178
    %vm198 = vmor %vm194, %vm197
    %vm199 = vmand %vm195, %vm173
    %vm200 = vmand %vm193, %vm176
    %vm201 = vmand %vm200, %vm178
    %vm202 = vmor %vm199, %vm201
    %vm203 = vmand %vm189, %vm173
    %vm204 = vmand %vm187, %vm176
    %vm205 = vmand %vm204, %vm178
    %vm206 = vmor %vm203, %vm205
    %vm207 = vmand %vm183, %vm173
    %vm208 = vmand %vm181, %vm176
    %vm209 = vmand %vm208, %vm178
    %vm210 = vmor %vm207, %vm209
    %vm211 = vmand %vm175, %vm173
    %vm212 = vmand %vm170, %vm176
    %vm213 = vmand %vm212, %vm178
    %vm214 = vmor %vm211, %vm213
    %v219 = vunpack.c.l.b16 %v73
    %v220 = vunpack.c.l.b16 %v74
    %v221 = vunpack.c.l.b16 %v75
    %v222 = vunpack.c.l.b16 %v76
    %v223 = vpack.c.b16 %v220, %v219
    %v224 = vpack.c.b16 %v222, %v221
    %vm227 = vcmask 261120
    %v229 = vsel %vm227, 0, 0
    %231 = vmatprep.subr.bf16.mxu0 0
    %232 = vmatpush1.bf16.msra.mxu0 %v223
    %233 = vmatprep.subr.bf16.mxu0 0
    %234 = vmatpush1.bf16.msra.mxu0 %v224
    %235 = vmatprep.subr.bf16.mxu0 0
    %236 = vmatpush1.bf16.msra.mxu0 0
    %237 = vmatprep.subr.bf16.mxu0 0
    %238 = vmatpush1.bf16.msra.mxu0 0
    %239 = vmatprep.subr.bf16.mxu0 0
    %240 = vmatpush1.bf16.msra.mxu0 0
    %241 = vmatprep.subr.bf16.mxu0 0
    %242 = vmatpush1.bf16.msra.mxu0 0
    %243 = vmatprep.subr.bf16.mxu0 0
    %244 = vmatpush1.bf16.msra.mxu0 0
    %245 = vmatprep.subr.bf16.mxu0 0
    %246 = vmatpush1.bf16.msra.mxu0 0
    %247 = vmatprep.subr.bf16.mxu0 0
    %248 = vmatpush1.bf16.msra.mxu0 0
    %249 = vmatprep.subr.bf16.mxu0 0
    %250 = vmatpush1.bf16.msra.mxu0 0
    %251 = vmatprep.subr.bf16.mxu0 0
    %252 = vmatpush1.bf16.msra.mxu0 0
    %253 = vmatprep.subr.bf16.mxu0 0
    %254 = vmatpush1.bf16.msra.mxu0 0
    %255 = vmatprep.subr.bf16.mxu0 0
    %256 = vmatpush1.bf16.msra.mxu0 0
    %257 = vmatprep.subr.bf16.mxu0 0
    %258 = vmatpush1.bf16.msra.mxu0 0
    %259 = vmatprep.subr.bf16.mxu0 0
    %260 = vmatpush1.bf16.msra.mxu0 0
    %261 = vmatprep.subr.bf16.mxu0 0
    %262 = vmatpush1.bf16.msra.mxu0 0
    %263 = vmatprep.mubr.bf16.mxu0 0
    %264 = vmatmul.mubr.bf16.gmra.mrb[0].mxu0 %v229
    %v265 = vpop.f32.mrb[0].mxu0
    %v266 = vadd.f32 0.0, %v265
    %v267 = vpop.f32.mrb[0].mxu0
    %v268 = vpop.f32.mrb[0].mxu0
    %v269 = vpop.f32.mrb[0].mxu0
    %270 = vdwg.mxu0
    %v271 = vadd.f32 %v161, %v266
    %v272 = vxor.u32 %v271, 2147483648
    %v273 = vmul.f32 %v272, 1.442695
    %v274 = vpow.pop %v273
    %v275 = vadd.f32 %v274, 1.0
    %v276 = vrcp.pop %v275
    %v277 = vmul.f32 1.0, %v276
    %v278 = vtanh.pop %v271
    %v279 = vmul.f32 %v277, 0.0
    %281 = vrot.lane.b32.xlu0 %v278, 64
    %v282 = vpop.permute.xlu0 %281
    %v284 = vmul.f32 %v277, %v282
    %286 = vrot.lane.b32.xlu0 %v284, 32
    %v287 = vpop.permute.xlu0 %286
    %v289 = vadd.f32 %v279, %v287
    %v290 = vtanh.pop %v289
    %292 = vrot.lane.b32.xlu0 %v290, 64
    %v293 = vpop.permute.xlu0 %292
    %v295 = vmul.f32 %v277, %v293
    %297 = vrot.lane.b32.xlu0 %v295, 32
    %v298 = vpop.permute.xlu0 %297
    %300 = vrot.lane.b32.xlu0 %v295, 64
    %v301 = vpop.permute.xlu0 %300
    %v303 = vsel %vm227, %v298, %v301
    %v304 = vlaneseq
    %v305 = vshrl.u32 %v304, 7
    %v306 = vsub.s32 0, %v305
    %v307 = vrot.slane %v303, %v306
    %v308 = vsel %vm180, %v307, 0.0
    %v309 = vpack.c.bf16 %v295, %v295
    %311 = vrot.lane.b32.xlu0 %v309, 32
    %v312 = vpop.permute.xlu0 %311
    %v314 = vsel %vm227, %v312, 0
    %316 = vmatprep.subr.bf16.mxu0 0
    %317 = vmatpush1.bf16.msra.mxu0 %v223
    %318 = vmatprep.subr.bf16.mxu0 0
    %319 = vmatpush1.bf16.msra.mxu0 %v224
    %320 = vmatprep.subr.bf16.mxu0 0
    %321 = vmatpush1.bf16.msra.mxu0 0
    %322 = vmatprep.subr.bf16.mxu0 0
    %323 = vmatpush1.bf16.msra.mxu0 0
    %324 = vmatprep.subr.bf16.mxu0 0
    %325 = vmatpush1.bf16.msra.mxu0 0
    %326 = vmatprep.subr.bf16.mxu0 0
    %327 = vmatpush1.bf16.msra.mxu0 0
    %328 = vmatprep.subr.bf16.mxu0 0
    %329 = vmatpush1.bf16.msra.mxu0 0
    %330 = vmatprep.subr.bf16.mxu0 0
    %331 = vmatpush1.bf16.msra.mxu0 0
    %332 = vmatprep.subr.bf16.mxu0 0
    %333 = vmatpush1.bf16.msra.mxu0 0
    %334 = vmatprep.subr.bf16.mxu0 0
    %335 = vmatpush1.bf16.msra.mxu0 0
    %336 = vmatprep.subr.bf16.mxu0 0
    %337 = vmatpush1.bf16.msra.mxu0 0
    %338 = vmatprep.subr.bf16.mxu0 0
    %339 = vmatpush1.bf16.msra.mxu0 0
    %340 = vmatprep.subr.bf16.mxu0 0
    %341 = vmatpush1.bf16.msra.mxu0 0
    %342 = vmatprep.subr.bf16.mxu0 0
    %343 = vmatpush1.bf16.msra.mxu0 0
    %344 = vmatprep.subr.bf16.mxu0 0
    %345 = vmatpush1.bf16.msra.mxu0 0
    %346 = vmatprep.subr.bf16.mxu0 0
    %347 = vmatpush1.bf16.msra.mxu0 0
    %348 = vmatprep.mubr.bf16.mxu0 0
    %349 = vmatmul.mubr.bf16.gmra.mrb[0].mxu0 %v314
    %v350 = vpop.f32.mrb[0].mxu0
    %v351 = vadd.f32 0.0, %v350
    %v352 = vpop.f32.mrb[0].mxu0
    %v353 = vpop.f32.mrb[0].mxu0
    %v354 = vpop.f32.mrb[0].mxu0
    %355 = vdwg.mxu0
    %v357 = vrot.slane %v351, 7
    %v359 = vadd.f32 %v161, %v357
    %v360 = vxor.u32 %v359, 2147483648
    %v361 = vmul.f32 %v360, 1.442695
    %v362 = vpow.pop %v361
    %v363 = vadd.f32 %v362, 1.0
    %v364 = vrcp.pop %v363
    %v365 = vmul.f32 1.0, %v364
    %v366 = vtanh.pop %v359
    %v368 = vrot.slane %v289, 7
    %v370 = vmul.f32 %v365, %v368
    %372 = vrot.lane.b32.xlu0 %v366, 64
    %v373 = vpop.permute.xlu0 %372
    %v375 = vmul.f32 %v365, %v373
    %377 = vrot.lane.b32.xlu0 %v375, 32
    %v378 = vpop.permute.xlu0 %377
    %v380 = vadd.f32 %v370, %v378
    %v381 = vtanh.pop %v380
    %383 = vrot.lane.b32.xlu0 %v381, 64
    %v384 = vpop.permute.xlu0 %383
    %v386 = vmul.f32 %v365, %v384
    %388 = vrot.lane.b32.xlu0 %v386, 32
    %v389 = vpop.permute.xlu0 %388
    %391 = vrot.lane.b32.xlu0 %v386, 64
    %v392 = vpop.permute.xlu0 %391
    %v394 = vsel %vm227, %v389, %v392
    %v395 = vlaneseq
    %v396 = vshrl.u32 %v395, 7
    %v397 = vsub.s32 1, %v396
    %v398 = vrot.slane %v394, %v397
    %v399 = vsel %vm186, %v398, %v308
    %v400 = vpack.c.bf16 %v386, %v386
    %v402 = vshrl.u32 %v400, 16
    %404 = vrot.lane.b32.xlu0 %v402, 32
    %v405 = vpop.permute.xlu0 %404
    %v407 = vsel %vm227, %v405, 0
    %409 = vmatprep.subr.bf16.mxu0 0
    %410 = vmatpush1.bf16.msra.mxu0 %v223
    %411 = vmatprep.subr.bf16.mxu0 0
    %412 = vmatpush1.bf16.msra.mxu0 %v224
    %413 = vmatprep.subr.bf16.mxu0 0
    %414 = vmatpush1.bf16.msra.mxu0 0
    %415 = vmatprep.subr.bf16.mxu0 0
    %416 = vmatpush1.bf16.msra.mxu0 0
    %417 = vmatprep.subr.bf16.mxu0 0
    %418 = vmatpush1.bf16.msra.mxu0 0
    %419 = vmatprep.subr.bf16.mxu0 0
    %420 = vmatpush1.bf16.msra.mxu0 0
    %421 = vmatprep.subr.bf16.mxu0 0
    %422 = vmatpush1.bf16.msra.mxu0 0
    %423 = vmatprep.subr.bf16.mxu0 0
    %424 = vmatpush1.bf16.msra.mxu0 0
    %425 = vmatprep.subr.bf16.mxu0 0
    %426 = vmatpush1.bf16.msra.mxu0 0
    %427 = vmatprep.subr.bf16.mxu0 0
    %428 = vmatpush1.bf16.msra.mxu0 0
    %429 = vmatprep.subr.bf16.mxu0 0
    %430 = vmatpush1.bf16.msra.mxu0 0
    %431 = vmatprep.subr.bf16.mxu0 0
    %432 = vmatpush1.bf16.msra.mxu0 0
    %433 = vmatprep.subr.bf16.mxu0 0
    %434 = vmatpush1.bf16.msra.mxu0 0
    %435 = vmatprep.subr.bf16.mxu0 0
    %436 = vmatpush1.bf16.msra.mxu0 0
    %437 = vmatprep.subr.bf16.mxu0 0
    %438 = vmatpush1.bf16.msra.mxu0 0
    %439 = vmatprep.subr.bf16.mxu0 0
    %440 = vmatpush1.bf16.msra.mxu0 0
    %441 = vmatprep.mubr.bf16.mxu0 0
    %442 = vmatmul.mubr.bf16.gmra.mrb[0].mxu0 %v407
    %v443 = vpop.f32.mrb[0].mxu0
    %v444 = vadd.f32 0.0, %v443
    %v445 = vpop.f32.mrb[0].mxu0
    %v446 = vpop.f32.mrb[0].mxu0
    %v447 = vpop.f32.mrb[0].mxu0
    %448 = vdwg.mxu0
    %v450 = vrot.slane %v444, 6
    %v452 = vadd.f32 %v161, %v450
    %v453 = vxor.u32 %v452, 2147483648
    %v454 = vmul.f32 %v453, 1.442695
    %v455 = vpow.pop %v454
    %v456 = vadd.f32 %v455, 1.0
    %v457 = vrcp.pop %v456
    %v458 = vmul.f32 1.0, %v457
    %v459 = vtanh.pop %v452
    %v461 = vrot.slane %v380, 7
    %v463 = vmul.f32 %v458, %v461
    %465 = vrot.lane.b32.xlu0 %v459, 64
    %v466 = vpop.permute.xlu0 %465
    %v468 = vmul.f32 %v458, %v466
    %470 = vrot.lane.b32.xlu0 %v468, 32
    %v471 = vpop.permute.xlu0 %470
    %v473 = vadd.f32 %v463, %v471
    %v474 = vtanh.pop %v473
    %476 = vrot.lane.b32.xlu0 %v474, 64
    %v477 = vpop.permute.xlu0 %476
    %v479 = vmul.f32 %v458, %v477
    %481 = vrot.lane.b32.xlu0 %v479, 32
    %v482 = vpop.permute.xlu0 %481
    %484 = vrot.lane.b32.xlu0 %v479, 64
    %v485 = vpop.permute.xlu0 %484
    %v487 = vsel %vm227, %v482, %v485
    %v488 = vlaneseq
    %v489 = vshrl.u32 %v488, 7
    %v490 = vsub.s32 2, %v489
    %v491 = vrot.slane %v487, %v490
    %v492 = vsel %vm192, %v491, %v399
    %v493 = vpack.c.bf16 %v479, %v479
    %v495 = vrot.slane %v493, 1
    %496 = vrot.lane.b32.xlu0 %v495, 32
    %v497 = vpop.permute.xlu0 %496
    %v499 = vsel %vm227, %v497, 0
    %501 = vmatprep.subr.bf16.mxu0 0
    %502 = vmatpush1.bf16.msra.mxu0 %v223
    %503 = vmatprep.subr.bf16.mxu0 0
    %504 = vmatpush1.bf16.msra.mxu0 %v224
    %505 = vmatprep.subr.bf16.mxu0 0
    %506 = vmatpush1.bf16.msra.mxu0 0
    %507 = vmatprep.subr.bf16.mxu0 0
    %508 = vmatpush1.bf16.msra.mxu0 0
    %509 = vmatprep.subr.bf16.mxu0 0
    %510 = vmatpush1.bf16.msra.mxu0 0
    %511 = vmatprep.subr.bf16.mxu0 0
    %512 = vmatpush1.bf16.msra.mxu0 0
    %513 = vmatprep.subr.bf16.mxu0 0
    %514 = vmatpush1.bf16.msra.mxu0 0
    %515 = vmatprep.subr.bf16.mxu0 0
    %516 = vmatpush1.bf16.msra.mxu0 0
    %517 = vmatprep.subr.bf16.mxu0 0
    %518 = vmatpush1.bf16.msra.mxu0 0
    %519 = vmatprep.subr.bf16.mxu0 0
    %520 = vmatpush1.bf16.msra.mxu0 0
    %521 = vmatprep.subr.bf16.mxu0 0
    %522 = vmatpush1.bf16.msra.mxu0 0
    %523 = vmatprep.subr.bf16.mxu0 0
    %524 = vmatpush1.bf16.msra.mxu0 0
    %525 = vmatprep.subr.bf16.mxu0 0
    %526 = vmatpush1.bf16.msra.mxu0 0
    %527 = vmatprep.subr.bf16.mxu0 0
    %528 = vmatpush1.bf16.msra.mxu0 0
    %529 = vmatprep.subr.bf16.mxu0 0
    %530 = vmatpush1.bf16.msra.mxu0 0
    %531 = vmatprep.subr.bf16.mxu0 0
    %532 = vmatpush1.bf16.msra.mxu0 0
    %533 = vmatprep.mubr.bf16.mxu0 0
    %534 = vmatmul.mubr.bf16.gmra.mrb[0].mxu0 %v499
    %v535 = vpop.f32.mrb[0].mxu0
    %v536 = vadd.f32 0.0, %v535
    %v537 = vpop.f32.mrb[0].mxu0
    %v538 = vpop.f32.mrb[0].mxu0
    %v539 = vpop.f32.mrb[0].mxu0
    %540 = vdwg.mxu0
    %v542 = vrot.slane %v536, 5
    %v544 = vadd.f32 %v161, %v542
    %v545 = vxor.u32 %v544, 2147483648
    %v546 = vmul.f32 %v545, 1.442695
    %v547 = vpow.pop %v546
    %v548 = vadd.f32 %v547, 1.0
    %v549 = vrcp.pop %v548
    %v550 = vmul.f32 1.0, %v549
    %v551 = vtanh.pop %v544
    %v553 = vrot.slane %v473, 7
    %v555 = vmul.f32 %v550, %v553
    %557 = vrot.lane.b32.xlu0 %v551, 64
    %v558 = vpop.permute.xlu0 %557
    %v560 = vmul.f32 %v550, %v558
    %562 = vrot.lane.b32.xlu0 %v560, 32
    %v563 = vpop.permute.xlu0 %562
    %v565 = vadd.f32 %v555, %v563
    %v566 = vtanh.pop %v565
    %568 = vrot.lane.b32.xlu0 %v566, 64
    %v569 = vpop.permute.xlu0 %568
    %v571 = vmul.f32 %v550, %v569
    %573 = vrot.lane.b32.xlu0 %v571, 32
    %v574 = vpop.permute.xlu0 %573
    %576 = vrot.lane.b32.xlu0 %v571, 64
    %v577 = vpop.permute.xlu0 %576
    %v579 = vsel %vm227, %v574, %v577
    %v580 = vlaneseq
    %v581 = vshrl.u32 %v580, 7
    %v582 = vsub.s32 3, %v581
    %v583 = vrot.slane %v579, %v582
    %v584 = vsel %vm198, %v583, %v492
    %v585 = vpack.c.bf16 %v571, %v571
    %v587 = vshrl.u32 %v585, 16
    %v589 = vrot.slane %v587, 1
    %590 = vrot.lane.b32.xlu0 %v589, 32
    %v591 = vpop.permute.xlu0 %590
    %v593 = vsel %vm227, %v591, 0
    %595 = vmatprep.subr.bf16.mxu0 0
    %596 = vmatpush1.bf16.msra.mxu0 %v223
    %597 = vmatprep.subr.bf16.mxu0 0
    %598 = vmatpush1.bf16.msra.mxu0 %v224
    %599 = vmatprep.subr.bf16.mxu0 0
    %600 = vmatpush1.bf16.msra.mxu0 0
    %601 = vmatprep.subr.bf16.mxu0 0
    %602 = vmatpush1.bf16.msra.mxu0 0
    %603 = vmatprep.subr.bf16.mxu0 0
    %604 = vmatpush1.bf16.msra.mxu0 0
    %605 = vmatprep.subr.bf16.mxu0 0
    %606 = vmatpush1.bf16.msra.mxu0 0
    %607 = vmatprep.subr.bf16.mxu0 0
    %608 = vmatpush1.bf16.msra.mxu0 0
    %609 = vmatprep.subr.bf16.mxu0 0
    %610 = vmatpush1.bf16.msra.mxu0 0
    %611 = vmatprep.subr.bf16.mxu0 0
    %612 = vmatpush1.bf16.msra.mxu0 0
    %613 = vmatprep.subr.bf16.mxu0 0
    %614 = vmatpush1.bf16.msra.mxu0 0
    %615 = vmatprep.subr.bf16.mxu0 0
    %616 = vmatpush1.bf16.msra.mxu0 0
    %617 = vmatprep.subr.bf16.mxu0 0
    %618 = vmatpush1.bf16.msra.mxu0 0
    %619 = vmatprep.subr.bf16.mxu0 0
    %620 = vmatpush1.bf16.msra.mxu0 0
    %621 = vmatprep.subr.bf16.mxu0 0
    %622 = vmatpush1.bf16.msra.mxu0 0
    %623 = vmatprep.subr.bf16.mxu0 0
    %624 = vmatpush1.bf16.msra.mxu0 0
    %625 = vmatprep.subr.bf16.mxu0 0
    %626 = vmatpush1.bf16.msra.mxu0 0
    %627 = vmatprep.mubr.bf16.mxu0 0
    %628 = vmatmul.mubr.bf16.gmra.mrb[0].mxu0 %v593
    %v629 = vpop.f32.mrb[0].mxu0
    %v630 = vadd.f32 0.0, %v629
    %v631 = vpop.f32.mrb[0].mxu0
    %v632 = vpop.f32.mrb[0].mxu0
    %v633 = vpop.f32.mrb[0].mxu0
    %634 = vdwg.mxu0
    %v636 = vrot.slane %v630, 4
    %v638 = vadd.f32 %v161, %v636
    %v639 = vxor.u32 %v638, 2147483648
    %v640 = vmul.f32 %v639, 1.442695
    %v641 = vpow.pop %v640
    %v642 = vadd.f32 %v641, 1.0
    %v643 = vrcp.pop %v642
    %v644 = vmul.f32 1.0, %v643
    %v645 = vtanh.pop %v638
    %v647 = vrot.slane %v565, 7
    %v649 = vmul.f32 %v644, %v647
    %651 = vrot.lane.b32.xlu0 %v645, 64
    %v652 = vpop.permute.xlu0 %651
    %v654 = vmul.f32 %v644, %v652
    %656 = vrot.lane.b32.xlu0 %v654, 32
    %v657 = vpop.permute.xlu0 %656
    %v659 = vadd.f32 %v649, %v657
    %v660 = vtanh.pop %v659
    %662 = vrot.lane.b32.xlu0 %v660, 64
    %v663 = vpop.permute.xlu0 %662
    %v665 = vmul.f32 %v644, %v663
    %667 = vrot.lane.b32.xlu0 %v665, 32
    %v668 = vpop.permute.xlu0 %667
    %670 = vrot.lane.b32.xlu0 %v665, 64
    %v671 = vpop.permute.xlu0 %670
    %v673 = vsel %vm227, %v668, %v671
    %v674 = vlaneseq
    %v675 = vshrl.u32 %v674, 7
    %v676 = vsub.s32 4, %v675
    %v677 = vrot.slane %v673, %v676
    %v678 = vsel %vm202, %v677, %v584
    %v679 = vpack.c.bf16 %v665, %v665
    %v681 = vrot.slane %v679, 2
    %682 = vrot.lane.b32.xlu0 %v681, 32
    %v683 = vpop.permute.xlu0 %682
    %v685 = vsel %vm227, %v683, 0
    %687 = vmatprep.subr.bf16.mxu0 0
    %688 = vmatpush1.bf16.msra.mxu0 %v223
    %689 = vmatprep.subr.bf16.mxu0 0
    %690 = vmatpush1.bf16.msra.mxu0 %v224
    %691 = vmatprep.subr.bf16.mxu0 0
    %692 = vmatpush1.bf16.msra.mxu0 0
    %693 = vmatprep.subr.bf16.mxu0 0
    %694 = vmatpush1.bf16.msra.mxu0 0
    %695 = vmatprep.subr.bf16.mxu0 0
    %696 = vmatpush1.bf16.msra.mxu0 0
    %697 = vmatprep.subr.bf16.mxu0 0
    %698 = vmatpush1.bf16.msra.mxu0 0
    %699 = vmatprep.subr.bf16.mxu0 0
    %700 = vmatpush1.bf16.msra.mxu0 0
    %701 = vmatprep.subr.bf16.mxu0 0
    %702 = vmatpush1.bf16.msra.mxu0 0
    %703 = vmatprep.subr.bf16.mxu0 0
    %704 = vmatpush1.bf16.msra.mxu0 0
    %705 = vmatprep.subr.bf16.mxu0 0
    %706 = vmatpush1.bf16.msra.mxu0 0
    %707 = vmatprep.subr.bf16.mxu0 0
    %708 = vmatpush1.bf16.msra.mxu0 0
    %709 = vmatprep.subr.bf16.mxu0 0
    %710 = vmatpush1.bf16.msra.mxu0 0
    %711 = vmatprep.subr.bf16.mxu0 0
    %712 = vmatpush1.bf16.msra.mxu0 0
    %713 = vmatprep.subr.bf16.mxu0 0
    %714 = vmatpush1.bf16.msra.mxu0 0
    %715 = vmatprep.subr.bf16.mxu0 0
    %716 = vmatpush1.bf16.msra.mxu0 0
    %717 = vmatprep.subr.bf16.mxu0 0
    %718 = vmatpush1.bf16.msra.mxu0 0
    %719 = vmatprep.mubr.bf16.mxu0 0
    %720 = vmatmul.mubr.bf16.gmra.mrb[0].mxu0 %v685
    %v721 = vpop.f32.mrb[0].mxu0
    %v722 = vadd.f32 0.0, %v721
    %v723 = vpop.f32.mrb[0].mxu0
    %v724 = vpop.f32.mrb[0].mxu0
    %v725 = vpop.f32.mrb[0].mxu0
    %726 = vdwg.mxu0
    %v728 = vrot.slane %v722, 3
    %v730 = vadd.f32 %v161, %v728
    %v731 = vxor.u32 %v730, 2147483648
    %v732 = vmul.f32 %v731, 1.442695
    %v733 = vpow.pop %v732
    %v734 = vadd.f32 %v733, 1.0
    %v735 = vrcp.pop %v734
    %v736 = vmul.f32 1.0, %v735
    %v737 = vtanh.pop %v730
    %v739 = vrot.slane %v659, 7
    %v741 = vmul.f32 %v736, %v739
    %743 = vrot.lane.b32.xlu0 %v737, 64
    %v744 = vpop.permute.xlu0 %743
    %v746 = vmul.f32 %v736, %v744
    %748 = vrot.lane.b32.xlu0 %v746, 32
    %v749 = vpop.permute.xlu0 %748
    %v751 = vadd.f32 %v741, %v749
    %v752 = vtanh.pop %v751
    %754 = vrot.lane.b32.xlu0 %v752, 64
    %v755 = vpop.permute.xlu0 %754
    %v757 = vmul.f32 %v736, %v755
    %759 = vrot.lane.b32.xlu0 %v757, 32
    %v760 = vpop.permute.xlu0 %759
    %762 = vrot.lane.b32.xlu0 %v757, 64
    %v763 = vpop.permute.xlu0 %762
    %v765 = vsel %vm227, %v760, %v763
    %v766 = vlaneseq
    %v767 = vshrl.u32 %v766, 7
    %v768 = vsub.s32 5, %v767
    %v769 = vrot.slane %v765, %v768
    %v770 = vsel %vm206, %v769, %v678
    %v771 = vpack.c.bf16 %v757, %v757
    %v773 = vshrl.u32 %v771, 16
    %v775 = vrot.slane %v773, 2
    %776 = vrot.lane.b32.xlu0 %v775, 32
    %v777 = vpop.permute.xlu0 %776
    %v779 = vsel %vm227, %v777, 0
    %781 = vmatprep.subr.bf16.mxu0 0
    %782 = vmatpush1.bf16.msra.mxu0 %v223
    %783 = vmatprep.subr.bf16.mxu0 0
    %784 = vmatpush1.bf16.msra.mxu0 %v224
    %785 = vmatprep.subr.bf16.mxu0 0
    %786 = vmatpush1.bf16.msra.mxu0 0
    %787 = vmatprep.subr.bf16.mxu0 0
    %788 = vmatpush1.bf16.msra.mxu0 0
    %789 = vmatprep.subr.bf16.mxu0 0
    %790 = vmatpush1.bf16.msra.mxu0 0
    %791 = vmatprep.subr.bf16.mxu0 0
    %792 = vmatpush1.bf16.msra.mxu0 0
    %793 = vmatprep.subr.bf16.mxu0 0
    %794 = vmatpush1.bf16.msra.mxu0 0
    %795 = vmatprep.subr.bf16.mxu0 0
    %796 = vmatpush1.bf16.msra.mxu0 0
    %797 = vmatprep.subr.bf16.mxu0 0
    %798 = vmatpush1.bf16.msra.mxu0 0
    %799 = vmatprep.subr.bf16.mxu0 0
    %800 = vmatpush1.bf16.msra.mxu0 0
    %801 = vmatprep.subr.bf16.mxu0 0
    %802 = vmatpush1.bf16.msra.mxu0 0
    %803 = vmatprep.subr.bf16.mxu0 0
    %804 = vmatpush1.bf16.msra.mxu0 0
    %805 = vmatprep.subr.bf16.mxu0 0
    %806 = vmatpush1.bf16.msra.mxu0 0
    %807 = vmatprep.subr.bf16.mxu0 0
    %808 = vmatpush1.bf16.msra.mxu0 0
    %809 = vmatprep.subr.bf16.mxu0 0
    %810 = vmatpush1.bf16.msra.mxu0 0
    %811 = vmatprep.subr.bf16.mxu0 0
    %812 = vmatpush1.bf16.msra.mxu0 0
    %813 = vmatprep.mubr.bf16.mxu0 0
    %814 = vmatmul.mubr.bf16.gmra.mrb[0].mxu0 %v779
    %v815 = vpop.f32.mrb[0].mxu0
    %v816 = vadd.f32 0.0, %v815
    %v817 = vpop.f32.mrb[0].mxu0
    %v818 = vpop.f32.mrb[0].mxu0
    %v819 = vpop.f32.mrb[0].mxu0
    %820 = vdwg.mxu0
    %v822 = vrot.slane %v816, 2
    %v824 = vadd.f32 %v161, %v822
    %v825 = vxor.u32 %v824, 2147483648
    %v826 = vmul.f32 %v825, 1.442695
    %v827 = vpow.pop %v826
    %v828 = vadd.f32 %v827, 1.0
    %v829 = vrcp.pop %v828
    %v830 = vmul.f32 1.0, %v829
    %v831 = vtanh.pop %v824
    %v833 = vrot.slane %v751, 7
    %v835 = vmul.f32 %v830, %v833
    %837 = vrot.lane.b32.xlu0 %v831, 64
    %v838 = vpop.permute.xlu0 %837
    %v840 = vmul.f32 %v830, %v838
    %842 = vrot.lane.b32.xlu0 %v840, 32
    %v843 = vpop.permute.xlu0 %842
    %v845 = vadd.f32 %v835, %v843
    %v846 = vtanh.pop %v845
    %848 = vrot.lane.b32.xlu0 %v846, 64
    %v849 = vpop.permute.xlu0 %848
    %v851 = vmul.f32 %v830, %v849
    %853 = vrot.lane.b32.xlu0 %v851, 32
    %v854 = vpop.permute.xlu0 %853
    %856 = vrot.lane.b32.xlu0 %v851, 64
    %v857 = vpop.permute.xlu0 %856
    %v859 = vsel %vm227, %v854, %v857
    %v860 = vlaneseq
    %v861 = vshrl.u32 %v860, 7
    %v862 = vsub.s32 6, %v861
    %v863 = vrot.slane %v859, %v862
    %v864 = vsel %vm210, %v863, %v770
    %v865 = vpack.c.bf16 %v851, %v851
    %v867 = vrot.slane %v865, 3
    %868 = vrot.lane.b32.xlu0 %v867, 32
    %v869 = vpop.permute.xlu0 %868
    %v871 = vsel %vm227, %v869, 0
    %873 = vmatprep.subr.bf16.mxu0 0
    %874 = vmatpush1.bf16.msra.mxu0 %v223
    %875 = vmatprep.subr.bf16.mxu0 0
    %876 = vmatpush1.bf16.msra.mxu0 %v224
    %877 = vmatprep.subr.bf16.mxu0 0
    %878 = vmatpush1.bf16.msra.mxu0 0
    %879 = vmatprep.subr.bf16.mxu0 0
    %880 = vmatpush1.bf16.msra.mxu0 0
    %881 = vmatprep.subr.bf16.mxu0 0
    %882 = vmatpush1.bf16.msra.mxu0 0
    %883 = vmatprep.subr.bf16.mxu0 0
    %884 = vmatpush1.bf16.msra.mxu0 0
    %885 = vmatprep.subr.bf16.mxu0 0
    %886 = vmatpush1.bf16.msra.mxu0 0
    %887 = vmatprep.subr.bf16.mxu0 0
    %888 = vmatpush1.bf16.msra.mxu0 0
    %889 = vmatprep.subr.bf16.mxu0 0
    %890 = vmatpush1.bf16.msra.mxu0 0
    %891 = vmatprep.subr.bf16.mxu0 0
    %892 = vmatpush1.bf16.msra.mxu0 0
    %893 = vmatprep.subr.bf16.mxu0 0
    %894 = vmatpush1.bf16.msra.mxu0 0
    %895 = vmatprep.subr.bf16.mxu0 0
    %896 = vmatpush1.bf16.msra.mxu0 0
    %897 = vmatprep.subr.bf16.mxu0 0
    %898 = vmatpush1.bf16.msra.mxu0 0
    %899 = vmatprep.subr.bf16.mxu0 0
    %900 = vmatpush1.bf16.msra.mxu0 0
    %901 = vmatprep.subr.bf16.mxu0 0
    %902 = vmatpush1.bf16.msra.mxu0 0
    %903 = vmatprep.subr.bf16.mxu0 0
    %904 = vmatpush1.bf16.msra.mxu0 0
    %905 = vmatprep.mubr.bf16.mxu0 0
    %906 = vmatmul.mubr.bf16.gmra.mrb[0].mxu0 %v871
    %v907 = vpop.f32.mrb[0].mxu0
    %v908 = vadd.f32 0.0, %v907
    %v909 = vpop.f32.mrb[0].mxu0
    %v910 = vpop.f32.mrb[0].mxu0
    %v911 = vpop.f32.mrb[0].mxu0
    %912 = vdwg.mxu0
    %v914 = vrot.slane %v908, 1
    %v916 = vadd.f32 %v161, %v914
    %v917 = vxor.u32 %v916, 2147483648
    %v918 = vmul.f32 %v917, 1.442695
    %v919 = vpow.pop %v918
    %v920 = vadd.f32 %v919, 1.0
    %v921 = vrcp.pop %v920
    %v922 = vmul.f32 1.0, %v921
    %v923 = vtanh.pop %v916
    %v925 = vrot.slane %v845, 7
    %v927 = vmul.f32 %v922, %v925
    %929 = vrot.lane.b32.xlu0 %v923, 64
    %v930 = vpop.permute.xlu0 %929
    %v932 = vmul.f32 %v922, %v930
    %934 = vrot.lane.b32.xlu0 %v932, 32
    %v935 = vpop.permute.xlu0 %934
    %v937 = vadd.f32 %v927, %v935
    %v938 = vtanh.pop %v937
    %940 = vrot.lane.b32.xlu0 %v938, 64
    %v941 = vpop.permute.xlu0 %940
    %v943 = vmul.f32 %v922, %v941
    %945 = vrot.lane.b32.xlu0 %v943, 32
    %v946 = vpop.permute.xlu0 %945
    %948 = vrot.lane.b32.xlu0 %v943, 64
    %v949 = vpop.permute.xlu0 %948
    %v951 = vsel %vm227, %v946, %v949
    %v952 = vlaneseq
    %v953 = vshrl.u32 %v952, 7
    %v954 = vsub.s32 7, %v953
    %v955 = vrot.slane %v951, %v954
    %v956 = vsel %vm214, %v955, %v864
    %v957 = vpack.c.bf16 %v956, %v956
    %v958 = vld [vmem:[%s2] sm:$0xf]
    %v959 = vld [vmem:[%s2 + $0x4] sm:$0xf]
    %v960 = vld [vmem:[%s2 + $0x8] sm:$0xf]
    %v961 = vld [vmem:[%s2 + $0xc] sm:$0xf]
    %v962 = vld [vmem:[%s2 + $0x10] sm:$0xf]
    %v963 = vld [vmem:[%s2 + $0x14] sm:$0xf]
    %v964 = vld [vmem:[%s2 + $0x18] sm:$0xf]
    %v965 = vld [vmem:[%s2 + $0x1c] sm:$0xf]
    %v966 = vld [vmem:[%s6] sm:$0x1]
    %v968 = vlaneseq
    %v969 = vshrl.u32 %v968, 7
    %v970 = vsub.s32 0, %v969
    %v971 = vrot.slane %v966, %v970
    %v981 = vunpack.c.l.b16 %v958
    %v982 = vunpack.c.l.b16 %v959
    %v983 = vunpack.c.l.b16 %v960
    %v984 = vunpack.c.l.b16 %v961
    %v985 = vunpack.c.l.b16 %v962
    %v986 = vunpack.c.l.b16 %v963
    %v987 = vunpack.c.l.b16 %v964
    %v988 = vunpack.c.l.b16 %v965
    %v989 = vpack.c.b16 %v982, %v981
    %v990 = vpack.c.b16 %v984, %v983
    %v991 = vpack.c.b16 %v986, %v985
    %v992 = vpack.c.b16 %v988, %v987
    %v998 = vsel %vm122, %v957, 0
    %1000 = vmatprep.subr.bf16.mxu0 0
    %1001 = vmatpush1.bf16.msra.mxu0 %v989
    %1002 = vmatprep.subr.bf16.mxu0 0
    %1003 = vmatpush1.bf16.msra.mxu0 %v990
    %1004 = vmatprep.subr.bf16.mxu0 0
    %1005 = vmatpush1.bf16.msra.mxu0 %v991
    %1006 = vmatprep.subr.bf16.mxu0 0
    %1007 = vmatpush1.bf16.msra.mxu0 %v992
    %1008 = vmatprep.subr.bf16.mxu0 0
    %1009 = vmatpush1.bf16.msra.mxu0 0
    %1010 = vmatprep.subr.bf16.mxu0 0
    %1011 = vmatpush1.bf16.msra.mxu0 0
    %1012 = vmatprep.subr.bf16.mxu0 0
    %1013 = vmatpush1.bf16.msra.mxu0 0
    %1014 = vmatprep.subr.bf16.mxu0 0
    %1015 = vmatpush1.bf16.msra.mxu0 0
    %1016 = vmatprep.subr.bf16.mxu0 0
    %1017 = vmatpush1.bf16.msra.mxu0 0
    %1018 = vmatprep.subr.bf16.mxu0 0
    %1019 = vmatpush1.bf16.msra.mxu0 0
    %1020 = vmatprep.subr.bf16.mxu0 0
    %1021 = vmatpush1.bf16.msra.mxu0 0
    %1022 = vmatprep.subr.bf16.mxu0 0
    %1023 = vmatpush1.bf16.msra.mxu0 0
    %1024 = vmatprep.subr.bf16.mxu0 0
    %1025 = vmatpush1.bf16.msra.mxu0 0
    %1026 = vmatprep.subr.bf16.mxu0 0
    %1027 = vmatpush1.bf16.msra.mxu0 0
    %1028 = vmatprep.subr.bf16.mxu0 0
    %1029 = vmatpush1.bf16.msra.mxu0 0
    %1030 = vmatprep.subr.bf16.mxu0 0
    %1031 = vmatpush1.bf16.msra.mxu0 0
    %1032 = vmatprep.mubr.bf16.mxu0 0
    %1033 = vmatmul.mubr.bf16.gmra.mrb[0].mxu0 %v998
    %v1034 = vpop.f32.mrb[0].mxu0
    %v1035 = vadd.f32 %v971, %v1034
    %v1036 = vpop.f32.mrb[0].mxu0
    %v1037 = vpop.f32.mrb[0].mxu0
    %v1038 = vpop.f32.mrb[0].mxu0
    %1039 = vdwg.mxu0
    %vm1040 = vmand %vm170, %vm171
    %vm1041 = vmor %vm1040, %vm177
    %vm1042 = vmand %vm181, %vm171
    %vm1043 = vmor %vm1042, %vm184
    %vm1044 = vmand %vm187, %vm171
    %vm1045 = vmor %vm1044, %vm190
    %vm1046 = vmand %vm193, %vm171
    %vm1047 = vmor %vm1046, %vm196
    %vm1048 = vmand %vm195, %vm171
    %vm1049 = vmor %vm1048, %vm200
    %vm1050 = vmand %vm189, %vm171
    %vm1051 = vmor %vm1050, %vm204
    %vm1052 = vmand %vm183, %vm171
    %vm1053 = vmor %vm1052, %vm208
    %vm1054 = vmand %vm175, %vm171
    %vm1055 = vmor %vm1054, %vm212
    %v1060 = vunpack.c.l.b16 %v77
    %v1061 = vunpack.c.l.b16 %v78
    %v1062 = vunpack.c.l.b16 %v79
    %v1063 = vunpack.c.l.b16 %v80
    %v1064 = vpack.c.b16 %v1061, %v1060
    %v1065 = vpack.c.b16 %v1063, %v1062
    %1068 = vmatprep.subr.bf16.mxu0 0
    %1069 = vmatpush1.bf16.msra.mxu0 %v1064
    %1070 = vmatprep.subr.bf16.mxu0 0
    %1071 = vmatpush1.bf16.msra.mxu0 %v1065
    %1072 = vmatprep.subr.bf16.mxu0 0
    %1073 = vmatpush1.bf16.msra.mxu0 0
    %1074 = vmatprep.subr.bf16.mxu0 0
    %1075 = vmatpush1.bf16.msra.mxu0 0
    %1076 = vmatprep.subr.bf16.mxu0 0
    %1077 = vmatpush1.bf16.msra.mxu0 0
    %1078 = vmatprep.subr.bf16.mxu0 0
    %1079 = vmatpush1.bf16.msra.mxu0 0
    %1080 = vmatprep.subr.bf16.mxu0 0
    %1081 = vmatpush1.bf16.msra.mxu0 0
    %1082 = vmatprep.subr.bf16.mxu0 0
    %1083 = vmatpush1.bf16.msra.mxu0 0
    %1084 = vmatprep.subr.bf16.mxu0 0
    %1085 = vmatpush1.bf16.msra.mxu0 0
    %1086 = vmatprep.subr.bf16.mxu0 0
    %1087 = vmatpush1.bf16.msra.mxu0 0
    %1088 = vmatprep.subr.bf16.mxu0 0
    %1089 = vmatpush1.bf16.msra.mxu0 0
    %1090 = vmatprep.subr.bf16.mxu0 0
    %1091 = vmatpush1.bf16.msra.mxu0 0
    %1092 = vmatprep.subr.bf16.mxu0 0
    %1093 = vmatpush1.bf16.msra.mxu0 0
    %1094 = vmatprep.subr.bf16.mxu0 0
    %1095 = vmatpush1.bf16.msra.mxu0 0
    %1096 = vmatprep.subr.bf16.mxu0 0
    %1097 = vmatpush1.bf16.msra.mxu0 0
    %1098 = vmatprep.subr.bf16.mxu0 0
    %1099 = vmatpush1.bf16.msra.mxu0 0
    %1100 = vmatprep.mubr.bf16.mxu0 0
    %1101 = vmatmul.mubr.bf16.gmra.mrb[0].mxu0 %v229
    %v1102 = vpop.f32.mrb[0].mxu0
    %v1103 = vadd.f32 0.0, %v1102
    %v1104 = vpop.f32.mrb[0].mxu0
    %v1105 = vpop.f32.mrb[0].mxu0
    %v1106 = vpop.f32.mrb[0].mxu0
    %1107 = vdwg.mxu0
    %v1108 = vadd.f32 %v1035, %v1103
    %v1109 = vxor.u32 %v1108, 2147483648
    %v1110 = vmul.f32 %v1109, 1.442695
    %v1111 = vpow.pop %v1110
    %v1112 = vadd.f32 %v1111, 1.0
    %v1113 = vrcp.pop %v1112
    %v1114 = vmul.f32 1.0, %v1113
    %v1115 = vtanh.pop %v1108
    %v1116 = vmul.f32 %v1114, 0.0
    %1118 = vrot.lane.b32.xlu0 %v1115, 64
    %v1119 = vpop.permute.xlu0 %1118
    %v1121 = vmul.f32 %v1114, %v1119
    %1123 = vrot.lane.b32.xlu0 %v1121, 32
    %v1124 = vpop.permute.xlu0 %1123
    %v1126 = vadd.f32 %v1116, %v1124
    %v1127 = vtanh.pop %v1126
    %1129 = vrot.lane.b32.xlu0 %v1127, 64
    %v1130 = vpop.permute.xlu0 %1129
    %v1132 = vmul.f32 %v1114, %v1130
    %v1133 = vlaneseq
    %v1134 = vshrl.u32 %v1133, 7
    %v1135 = vsub.s32 0, %v1134
    %v1136 = vrot.slane %v1132, %v1135
    %1138 = vrot.lane.b32.xlu0 %v1136, 32
    %v1139 = vpop.permute.xlu0 %1138
    %v1141 = vsel %vm1041, %v1139, 0.0
    %v1142 = vpack.c.bf16 %v1132, %v1132
    %1144 = vrot.lane.b32.xlu0 %v1142, 32
    %v1145 = vpop.permute.xlu0 %1144
    %v1147 = vsel %vm227, %v1145, 0
    %1149 = vmatprep.subr.bf16.mxu0 0
    %1150 = vmatpush1.bf16.msra.mxu0 %v1064
    %1151 = vmatprep.subr.bf16.mxu0 0
    %1152 = vmatpush1.bf16.msra.mxu0 %v1065
    %1153 = vmatprep.subr.bf16.mxu0 0
    %1154 = vmatpush1.bf16.msra.mxu0 0
    %1155 = vmatprep.subr.bf16.mxu0 0
    %1156 = vmatpush1.bf16.msra.mxu0 0
    %1157 = vmatprep.subr.bf16.mxu0 0
    %1158 = vmatpush1.bf16.msra.mxu0 0
    %1159 = vmatprep.subr.bf16.mxu0 0
    %1160 = vmatpush1.bf16.msra.mxu0 0
    %1161 = vmatprep.subr.bf16.mxu0 0
    %1162 = vmatpush1.bf16.msra.mxu0 0
    %1163 = vmatprep.subr.bf16.mxu0 0
    %1164 = vmatpush1.bf16.msra.mxu0 0
    %1165 = vmatprep.subr.bf16.mxu0 0
    %1166 = vmatpush1.bf16.msra.mxu0 0
    %1167 = vmatprep.subr.bf16.mxu0 0
    %1168 = vmatpush1.bf16.msra.mxu0 0
    %1169 = vmatprep.subr.bf16.mxu0 0
    %1170 = vmatpush1.bf16.msra.mxu0 0
    %1171 = vmatprep.subr.bf16.mxu0 0
    %1172 = vmatpush1.bf16.msra.mxu0 0
    %1173 = vmatprep.subr.bf16.mxu0 0
    %1174 = vmatpush1.bf16.msra.mxu0 0
    %1175 = vmatprep.subr.bf16.mxu0 0
    %1176 = vmatpush1.bf16.msra.mxu0 0
    %1177 = vmatprep.subr.bf16.mxu0 0
    %1178 = vmatpush1.bf16.msra.mxu0 0
    %1179 = vmatprep.subr.bf16.mxu0 0
    %1180 = vmatpush1.bf16.msra.mxu0 0
    %1181 = vmatprep.mubr.bf16.mxu0 0
    %1182 = vmatmul.mubr.bf16.gmra.mrb[0].mxu0 %v1147
    %v1183 = vpop.f32.mrb[0].mxu0
    %v1184 = vadd.f32 0.0, %v1183
    %v1185 = vpop.f32.mrb[0].mxu0
    %v1186 = vpop.f32.mrb[0].mxu0
    %v1187 = vpop.f32.mrb[0].mxu0
    %1188 = vdwg.mxu0
    %v1190 = vrot.slane %v1184, 7
    %v1192 = vadd.f32 %v1035, %v1190
    %v1193 = vxor.u32 %v1192, 2147483648
    %v1194 = vmul.f32 %v1193, 1.442695
    %v1195 = vpow.pop %v1194
    %v1196 = vadd.f32 %v1195, 1.0
    %v1197 = vrcp.pop %v1196
    %v1198 = vmul.f32 1.0, %v1197
    %v1199 = vtanh.pop %v1192
    %v1201 = vrot.slane %v1126, 7
    %v1203 = vmul.f32 %v1198, %v1201
    %1205 = vrot.lane.b32.xlu0 %v1199, 64
    %v1206 = vpop.permute.xlu0 %1205
    %v1208 = vmul.f32 %v1198, %v1206
    %1210 = vrot.lane.b32.xlu0 %v1208, 32
    %v1211 = vpop.permute.xlu0 %1210
    %v1213 = vadd.f32 %v1203, %v1211
    %v1214 = vtanh.pop %v1213
    %1216 = vrot.lane.b32.xlu0 %v1214, 64
    %v1217 = vpop.permute.xlu0 %1216
    %v1219 = vmul.f32 %v1198, %v1217
    %v1220 = vlaneseq
    %v1221 = vshrl.u32 %v1220, 7
    %v1222 = vsub.s32 1, %v1221
    %v1223 = vrot.slane %v1219, %v1222
    %1225 = vrot.lane.b32.xlu0 %v1223, 32
    %v1226 = vpop.permute.xlu0 %1225
    %v1228 = vsel %vm1043, %v1226, %v1141
    %v1229 = vpack.c.bf16 %v1219, %v1219
    %v1231 = vshrl.u32 %v1229, 16
    %1233 = vrot.lane.b32.xlu0 %v1231, 32
    %v1234 = vpop.permute.xlu0 %1233
    %v1236 = vsel %vm227, %v1234, 0
    %1238 = vmatprep.subr.bf16.mxu0 0
    %1239 = vmatpush1.bf16.msra.mxu0 %v1064
    %1240 = vmatprep.subr.bf16.mxu0 0
    %1241 = vmatpush1.bf16.msra.mxu0 %v1065
    %1242 = vmatprep.subr.bf16.mxu0 0
    %1243 = vmatpush1.bf16.msra.mxu0 0
    %1244 = vmatprep.subr.bf16.mxu0 0
    %1245 = vmatpush1.bf16.msra.mxu0 0
    %1246 = vmatprep.subr.bf16.mxu0 0
    %1247 = vmatpush1.bf16.msra.mxu0 0
    %1248 = vmatprep.subr.bf16.mxu0 0
    %1249 = vmatpush1.bf16.msra.mxu0 0
    %1250 = vmatprep.subr.bf16.mxu0 0
    %1251 = vmatpush1.bf16.msra.mxu0 0
    %1252 = vmatprep.subr.bf16.mxu0 0
    %1253 = vmatpush1.bf16.msra.mxu0 0
    %1254 = vmatprep.subr.bf16.mxu0 0
    %1255 = vmatpush1.bf16.msra.mxu0 0
    %1256 = vmatprep.subr.bf16.mxu0 0
    %1257 = vmatpush1.bf16.msra.mxu0 0
    %1258 = vmatprep.subr.bf16.mxu0 0
    %1259 = vmatpush1.bf16.msra.mxu0 0
    %1260 = vmatprep.subr.bf16.mxu0 0
    %1261 = vmatpush1.bf16.msra.mxu0 0
    %1262 = vmatprep.subr.bf16.mxu0 0
    %1263 = vmatpush1.bf16.msra.mxu0 0
    %1264 = vmatprep.subr.bf16.mxu0 0
    %1265 = vmatpush1.bf16.msra.mxu0 0
    %1266 = vmatprep.subr.bf16.mxu0 0
    %1267 = vmatpush1.bf16.msra.mxu0 0
    %1268 = vmatprep.subr.bf16.mxu0 0
    %1269 = vmatpush1.bf16.msra.mxu0 0
    %1270 = vmatprep.mubr.bf16.mxu0 0
    %1271 = vmatmul.mubr.bf16.gmra.mrb[0].mxu0 %v1236
    %v1272 = vpop.f32.mrb[0].mxu0
    %v1273 = vadd.f32 0.0, %v1272
    %v1274 = vpop.f32.mrb[0].mxu0
    %v1275 = vpop.f32.mrb[0].mxu0
    %v1276 = vpop.f32.mrb[0].mxu0
    %1277 = vdwg.mxu0
    %v1279 = vrot.slane %v1273, 6
    %v1281 = vadd.f32 %v1035, %v1279
    %v1282 = vxor.u32 %v1281, 2147483648
    %v1283 = vmul.f32 %v1282, 1.442695
    %v1284 = vpow.pop %v1283
    %v1285 = vadd.f32 %v1284, 1.0
    %v1286 = vrcp.pop %v1285
    %v1287 = vmul.f32 1.0, %v1286
    %v1288 = vtanh.pop %v1281
    %v1290 = vrot.slane %v1213, 7
    %v1292 = vmul.f32 %v1287, %v1290
    %1294 = vrot.lane.b32.xlu0 %v1288, 64
    %v1295 = vpop.permute.xlu0 %1294
    %v1297 = vmul.f32 %v1287, %v1295
    %1299 = vrot.lane.b32.xlu0 %v1297, 32
    %v1300 = vpop.permute.xlu0 %1299
    %v1302 = vadd.f32 %v1292, %v1300
    %v1303 = vtanh.pop %v1302
    %1305 = vrot.lane.b32.xlu0 %v1303, 64
    %v1306 = vpop.permute.xlu0 %1305
    %v1308 = vmul.f32 %v1287, %v1306
    %v1309 = vlaneseq
    %v1310 = vshrl.u32 %v1309, 7
    %v1311 = vsub.s32 2, %v1310
    %v1312 = vrot.slane %v1308, %v1311
    %1314 = vrot.lane.b32.xlu0 %v1312, 32
    %v1315 = vpop.permute.xlu0 %1314
    %v1317 = vsel %vm1045, %v1315, %v1228
    %v1318 = vpack.c.bf16 %v1308, %v1308
    %v1320 = vrot.slane %v1318, 1
    %1321 = vrot.lane.b32.xlu0 %v1320, 32
    %v1322 = vpop.permute.xlu0 %1321
    %v1324 = vsel %vm227, %v1322, 0
    %1326 = vmatprep.subr.bf16.mxu0 0
    %1327 = vmatpush1.bf16.msra.mxu0 %v1064
    %1328 = vmatprep.subr.bf16.mxu0 0
    %1329 = vmatpush1.bf16.msra.mxu0 %v1065
    %1330 = vmatprep.subr.bf16.mxu0 0
    %1331 = vmatpush1.bf16.msra.mxu0 0
    %1332 = vmatprep.subr.bf16.mxu0 0
    %1333 = vmatpush1.bf16.msra.mxu0 0
    %1334 = vmatprep.subr.bf16.mxu0 0
    %1335 = vmatpush1.bf16.msra.mxu0 0
    %1336 = vmatprep.subr.bf16.mxu0 0
    %1337 = vmatpush1.bf16.msra.mxu0 0
    %1338 = vmatprep.subr.bf16.mxu0 0
    %1339 = vmatpush1.bf16.msra.mxu0 0
    %1340 = vmatprep.subr.bf16.mxu0 0
    %1341 = vmatpush1.bf16.msra.mxu0 0
    %1342 = vmatprep.subr.bf16.mxu0 0
    %1343 = vmatpush1.bf16.msra.mxu0 0
    %1344 = vmatprep.subr.bf16.mxu0 0
    %1345 = vmatpush1.bf16.msra.mxu0 0
    %1346 = vmatprep.subr.bf16.mxu0 0
    %1347 = vmatpush1.bf16.msra.mxu0 0
    %1348 = vmatprep.subr.bf16.mxu0 0
    %1349 = vmatpush1.bf16.msra.mxu0 0
    %1350 = vmatprep.subr.bf16.mxu0 0
    %1351 = vmatpush1.bf16.msra.mxu0 0
    %1352 = vmatprep.subr.bf16.mxu0 0
    %1353 = vmatpush1.bf16.msra.mxu0 0
    %1354 = vmatprep.subr.bf16.mxu0 0
    %1355 = vmatpush1.bf16.msra.mxu0 0
    %1356 = vmatprep.subr.bf16.mxu0 0
    %1357 = vmatpush1.bf16.msra.mxu0 0
    %1358 = vmatprep.mubr.bf16.mxu0 0
    %1359 = vmatmul.mubr.bf16.gmra.mrb[0].mxu0 %v1324
    %v1360 = vpop.f32.mrb[0].mxu0
    %v1361 = vadd.f32 0.0, %v1360
    %v1362 = vpop.f32.mrb[0].mxu0
    %v1363 = vpop.f32.mrb[0].mxu0
    %v1364 = vpop.f32.mrb[0].mxu0
    %1365 = vdwg.mxu0
    %v1367 = vrot.slane %v1361, 5
    %v1369 = vadd.f32 %v1035, %v1367
    %v1370 = vxor.u32 %v1369, 2147483648
    %v1371 = vmul.f32 %v1370, 1.442695
    %v1372 = vpow.pop %v1371
    %v1373 = vadd.f32 %v1372, 1.0
    %v1374 = vrcp.pop %v1373
    %v1375 = vmul.f32 1.0, %v1374
    %v1376 = vtanh.pop %v1369
    %v1378 = vrot.slane %v1302, 7
    %v1380 = vmul.f32 %v1375, %v1378
    %1382 = vrot.lane.b32.xlu0 %v1376, 64
    %v1383 = vpop.permute.xlu0 %1382
    %v1385 = vmul.f32 %v1375, %v1383
    %1387 = vrot.lane.b32.xlu0 %v1385, 32
    %v1388 = vpop.permute.xlu0 %1387
    %v1390 = vadd.f32 %v1380, %v1388
    %v1391 = vtanh.pop %v1390
    %1393 = vrot.lane.b32.xlu0 %v1391, 64
    %v1394 = vpop.permute.xlu0 %1393
    %v1396 = vmul.f32 %v1375, %v1394
    %v1397 = vlaneseq
    %v1398 = vshrl.u32 %v1397, 7
    %v1399 = vsub.s32 3, %v1398
    %v1400 = vrot.slane %v1396, %v1399
    %1402 = vrot.lane.b32.xlu0 %v1400, 32
    %v1403 = vpop.permute.xlu0 %1402
    %v1405 = vsel %vm1047, %v1403, %v1317
    %v1406 = vpack.c.bf16 %v1396, %v1396
    %v1408 = vshrl.u32 %v1406, 16
    %v1410 = vrot.slane %v1408, 1
    %1411 = vrot.lane.b32.xlu0 %v1410, 32
    %v1412 = vpop.permute.xlu0 %1411
    %v1414 = vsel %vm227, %v1412, 0
    %1416 = vmatprep.subr.bf16.mxu0 0
    %1417 = vmatpush1.bf16.msra.mxu0 %v1064
    %1418 = vmatprep.subr.bf16.mxu0 0
    %1419 = vmatpush1.bf16.msra.mxu0 %v1065
    %1420 = vmatprep.subr.bf16.mxu0 0
    %1421 = vmatpush1.bf16.msra.mxu0 0
    %1422 = vmatprep.subr.bf16.mxu0 0
    %1423 = vmatpush1.bf16.msra.mxu0 0
    %1424 = vmatprep.subr.bf16.mxu0 0
    %1425 = vmatpush1.bf16.msra.mxu0 0
    %1426 = vmatprep.subr.bf16.mxu0 0
    %1427 = vmatpush1.bf16.msra.mxu0 0
    %1428 = vmatprep.subr.bf16.mxu0 0
    %1429 = vmatpush1.bf16.msra.mxu0 0
    %1430 = vmatprep.subr.bf16.mxu0 0
    %1431 = vmatpush1.bf16.msra.mxu0 0
    %1432 = vmatprep.subr.bf16.mxu0 0
    %1433 = vmatpush1.bf16.msra.mxu0 0
    %1434 = vmatprep.subr.bf16.mxu0 0
    %1435 = vmatpush1.bf16.msra.mxu0 0
    %1436 = vmatprep.subr.bf16.mxu0 0
    %1437 = vmatpush1.bf16.msra.mxu0 0
    %1438 = vmatprep.subr.bf16.mxu0 0
    %1439 = vmatpush1.bf16.msra.mxu0 0
    %1440 = vmatprep.subr.bf16.mxu0 0
    %1441 = vmatpush1.bf16.msra.mxu0 0
    %1442 = vmatprep.subr.bf16.mxu0 0
    %1443 = vmatpush1.bf16.msra.mxu0 0
    %1444 = vmatprep.subr.bf16.mxu0 0
    %1445 = vmatpush1.bf16.msra.mxu0 0
    %1446 = vmatprep.subr.bf16.mxu0 0
    %1447 = vmatpush1.bf16.msra.mxu0 0
    %1448 = vmatprep.mubr.bf16.mxu0 0
    %1449 = vmatmul.mubr.bf16.gmra.mrb[0].mxu0 %v1414
    %v1450 = vpop.f32.mrb[0].mxu0
    %v1451 = vadd.f32 0.0, %v1450
    %v1452 = vpop.f32.mrb[0].mxu0
    %v1453 = vpop.f32.mrb[0].mxu0
    %v1454 = vpop.f32.mrb[0].mxu0
    %1455 = vdwg.mxu0
    %v1457 = vrot.slane %v1451, 4
    %v1459 = vadd.f32 %v1035, %v1457
    %v1460 = vxor.u32 %v1459, 2147483648
    %v1461 = vmul.f32 %v1460, 1.442695
    %v1462 = vpow.pop %v1461
    %v1463 = vadd.f32 %v1462, 1.0
    %v1464 = vrcp.pop %v1463
    %v1465 = vmul.f32 1.0, %v1464
    %v1466 = vtanh.pop %v1459
    %v1468 = vrot.slane %v1390, 7
    %v1470 = vmul.f32 %v1465, %v1468
    %1472 = vrot.lane.b32.xlu0 %v1466, 64
    %v1473 = vpop.permute.xlu0 %1472
    %v1475 = vmul.f32 %v1465, %v1473
    %1477 = vrot.lane.b32.xlu0 %v1475, 32
    %v1478 = vpop.permute.xlu0 %1477
    %v1480 = vadd.f32 %v1470, %v1478
    %v1481 = vtanh.pop %v1480
    %1483 = vrot.lane.b32.xlu0 %v1481, 64
    %v1484 = vpop.permute.xlu0 %1483
    %v1486 = vmul.f32 %v1465, %v1484
    %v1487 = vlaneseq
    %v1488 = vshrl.u32 %v1487, 7
    %v1489 = vsub.s32 4, %v1488
    %v1490 = vrot.slane %v1486, %v1489
    %1492 = vrot.lane.b32.xlu0 %v1490, 32
    %v1493 = vpop.permute.xlu0 %1492
    %v1495 = vsel %vm1049, %v1493, %v1405
    %v1496 = vpack.c.bf16 %v1486, %v1486
    %v1498 = vrot.slane %v1496, 2
    %1499 = vrot.lane.b32.xlu0 %v1498, 32
    %v1500 = vpop.permute.xlu0 %1499
    %v1502 = vsel %vm227, %v1500, 0
    %1504 = vmatprep.subr.bf16.mxu0 0
    %1505 = vmatpush1.bf16.msra.mxu0 %v1064
    %1506 = vmatprep.subr.bf16.mxu0 0
    %1507 = vmatpush1.bf16.msra.mxu0 %v1065
    %1508 = vmatprep.subr.bf16.mxu0 0
    %1509 = vmatpush1.bf16.msra.mxu0 0
    %1510 = vmatprep.subr.bf16.mxu0 0
    %1511 = vmatpush1.bf16.msra.mxu0 0
    %1512 = vmatprep.subr.bf16.mxu0 0
    %1513 = vmatpush1.bf16.msra.mxu0 0
    %1514 = vmatprep.subr.bf16.mxu0 0
    %1515 = vmatpush1.bf16.msra.mxu0 0
    %1516 = vmatprep.subr.bf16.mxu0 0
    %1517 = vmatpush1.bf16.msra.mxu0 0
    %1518 = vmatprep.subr.bf16.mxu0 0
    %1519 = vmatpush1.bf16.msra.mxu0 0
    %1520 = vmatprep.subr.bf16.mxu0 0
    %1521 = vmatpush1.bf16.msra.mxu0 0
    %1522 = vmatprep.subr.bf16.mxu0 0
    %1523 = vmatpush1.bf16.msra.mxu0 0
    %1524 = vmatprep.subr.bf16.mxu0 0
    %1525 = vmatpush1.bf16.msra.mxu0 0
    %1526 = vmatprep.subr.bf16.mxu0 0
    %1527 = vmatpush1.bf16.msra.mxu0 0
    %1528 = vmatprep.subr.bf16.mxu0 0
    %1529 = vmatpush1.bf16.msra.mxu0 0
    %1530 = vmatprep.subr.bf16.mxu0 0
    %1531 = vmatpush1.bf16.msra.mxu0 0
    %1532 = vmatprep.subr.bf16.mxu0 0
    %1533 = vmatpush1.bf16.msra.mxu0 0
    %1534 = vmatprep.subr.bf16.mxu0 0
    %1535 = vmatpush1.bf16.msra.mxu0 0
    %1536 = vmatprep.mubr.bf16.mxu0 0
    %1537 = vmatmul.mubr.bf16.gmra.mrb[0].mxu0 %v1502
    %v1538 = vpop.f32.mrb[0].mxu0
    %v1539 = vadd.f32 0.0, %v1538
    %v1540 = vpop.f32.mrb[0].mxu0
    %v1541 = vpop.f32.mrb[0].mxu0
    %v1542 = vpop.f32.mrb[0].mxu0
    %1543 = vdwg.mxu0
    %v1545 = vrot.slane %v1539, 3
    %v1547 = vadd.f32 %v1035, %v1545
    %v1548 = vxor.u32 %v1547, 2147483648
    %v1549 = vmul.f32 %v1548, 1.442695
    %v1550 = vpow.pop %v1549
    %v1551 = vadd.f32 %v1550, 1.0
    %v1552 = vrcp.pop %v1551
    %v1553 = vmul.f32 1.0, %v1552
    %v1554 = vtanh.pop %v1547
    %v1556 = vrot.slane %v1480, 7
    %v1558 = vmul.f32 %v1553, %v1556
    %1560 = vrot.lane.b32.xlu0 %v1554, 64
    %v1561 = vpop.permute.xlu0 %1560
    %v1563 = vmul.f32 %v1553, %v1561
    %1565 = vrot.lane.b32.xlu0 %v1563, 32
    %v1566 = vpop.permute.xlu0 %1565
    %v1568 = vadd.f32 %v1558, %v1566
    %v1569 = vtanh.pop %v1568
    %1571 = vrot.lane.b32.xlu0 %v1569, 64
    %v1572 = vpop.permute.xlu0 %1571
    %v1574 = vmul.f32 %v1553, %v1572
    %v1575 = vlaneseq
    %v1576 = vshrl.u32 %v1575, 7
    %v1577 = vsub.s32 5, %v1576
    %v1578 = vrot.slane %v1574, %v1577
    %1580 = vrot.lane.b32.xlu0 %v1578, 32
    %v1581 = vpop.permute.xlu0 %1580
    %v1583 = vsel %vm1051, %v1581, %v1495
    %v1584 = vpack.c.bf16 %v1574, %v1574
    %v1586 = vshrl.u32 %v1584, 16
    %v1588 = vrot.slane %v1586, 2
    %1589 = vrot.lane.b32.xlu0 %v1588, 32
    %v1590 = vpop.permute.xlu0 %1589
    %v1592 = vsel %vm227, %v1590, 0
    %1594 = vmatprep.subr.bf16.mxu0 0
    %1595 = vmatpush1.bf16.msra.mxu0 %v1064
    %1596 = vmatprep.subr.bf16.mxu0 0
    %1597 = vmatpush1.bf16.msra.mxu0 %v1065
    %1598 = vmatprep.subr.bf16.mxu0 0
    %1599 = vmatpush1.bf16.msra.mxu0 0
    %1600 = vmatprep.subr.bf16.mxu0 0
    %1601 = vmatpush1.bf16.msra.mxu0 0
    %1602 = vmatprep.subr.bf16.mxu0 0
    %1603 = vmatpush1.bf16.msra.mxu0 0
    %1604 = vmatprep.subr.bf16.mxu0 0
    %1605 = vmatpush1.bf16.msra.mxu0 0
    %1606 = vmatprep.subr.bf16.mxu0 0
    %1607 = vmatpush1.bf16.msra.mxu0 0
    %1608 = vmatprep.subr.bf16.mxu0 0
    %1609 = vmatpush1.bf16.msra.mxu0 0
    %1610 = vmatprep.subr.bf16.mxu0 0
    %1611 = vmatpush1.bf16.msra.mxu0 0
    %1612 = vmatprep.subr.bf16.mxu0 0
    %1613 = vmatpush1.bf16.msra.mxu0 0
    %1614 = vmatprep.subr.bf16.mxu0 0
    %1615 = vmatpush1.bf16.msra.mxu0 0
    %1616 = vmatprep.subr.bf16.mxu0 0
    %1617 = vmatpush1.bf16.msra.mxu0 0
    %1618 = vmatprep.subr.bf16.mxu0 0
    %1619 = vmatpush1.bf16.msra.mxu0 0
    %1620 = vmatprep.subr.bf16.mxu0 0
    %1621 = vmatpush1.bf16.msra.mxu0 0
    %1622 = vmatprep.subr.bf16.mxu0 0
    %1623 = vmatpush1.bf16.msra.mxu0 0
    %1624 = vmatprep.subr.bf16.mxu0 0
    %1625 = vmatpush1.bf16.msra.mxu0 0
    %1626 = vmatprep.mubr.bf16.mxu0 0
    %1627 = vmatmul.mubr.bf16.gmra.mrb[0].mxu0 %v1592
    %v1628 = vpop.f32.mrb[0].mxu0
    %v1629 = vadd.f32 0.0, %v1628
    %v1630 = vpop.f32.mrb[0].mxu0
    %v1631 = vpop.f32.mrb[0].mxu0
    %v1632 = vpop.f32.mrb[0].mxu0
    %1633 = vdwg.mxu0
    %v1635 = vrot.slane %v1629, 2
    %v1637 = vadd.f32 %v1035, %v1635
    %v1638 = vxor.u32 %v1637, 2147483648
    %v1639 = vmul.f32 %v1638, 1.442695
    %v1640 = vpow.pop %v1639
    %v1641 = vadd.f32 %v1640, 1.0
    %v1642 = vrcp.pop %v1641
    %v1643 = vmul.f32 1.0, %v1642
    %v1644 = vtanh.pop %v1637
    %v1646 = vrot.slane %v1568, 7
    %v1648 = vmul.f32 %v1643, %v1646
    %1650 = vrot.lane.b32.xlu0 %v1644, 64
    %v1651 = vpop.permute.xlu0 %1650
    %v1653 = vmul.f32 %v1643, %v1651
    %1655 = vrot.lane.b32.xlu0 %v1653, 32
    %v1656 = vpop.permute.xlu0 %1655
    %v1658 = vadd.f32 %v1648, %v1656
    %v1659 = vtanh.pop %v1658
    %1661 = vrot.lane.b32.xlu0 %v1659, 64
    %v1662 = vpop.permute.xlu0 %1661
    %v1664 = vmul.f32 %v1643, %v1662
    %v1665 = vlaneseq
    %v1666 = vshrl.u32 %v1665, 7
    %v1667 = vsub.s32 6, %v1666
    %v1668 = vrot.slane %v1664, %v1667
    %1670 = vrot.lane.b32.xlu0 %v1668, 32
    %v1671 = vpop.permute.xlu0 %1670
    %v1673 = vsel %vm1053, %v1671, %v1583
    %v1674 = vpack.c.bf16 %v1664, %v1664
    %v1676 = vrot.slane %v1674, 3
    %1677 = vrot.lane.b32.xlu0 %v1676, 32
    %v1678 = vpop.permute.xlu0 %1677
    %v1680 = vsel %vm227, %v1678, 0
    %1682 = vmatprep.subr.bf16.mxu0 0
    %1683 = vmatpush1.bf16.msra.mxu0 %v1064
    %1684 = vmatprep.subr.bf16.mxu0 0
    %1685 = vmatpush1.bf16.msra.mxu0 %v1065
    %1686 = vmatprep.subr.bf16.mxu0 0
    %1687 = vmatpush1.bf16.msra.mxu0 0
    %1688 = vmatprep.subr.bf16.mxu0 0
    %1689 = vmatpush1.bf16.msra.mxu0 0
    %1690 = vmatprep.subr.bf16.mxu0 0
    %1691 = vmatpush1.bf16.msra.mxu0 0
    %1692 = vmatprep.subr.bf16.mxu0 0
    %1693 = vmatpush1.bf16.msra.mxu0 0
    %1694 = vmatprep.subr.bf16.mxu0 0
    %1695 = vmatpush1.bf16.msra.mxu0 0
    %1696 = vmatprep.subr.bf16.mxu0 0
    %1697 = vmatpush1.bf16.msra.mxu0 0
    %1698 = vmatprep.subr.bf16.mxu0 0
    %1699 = vmatpush1.bf16.msra.mxu0 0
    %1700 = vmatprep.subr.bf16.mxu0 0
    %1701 = vmatpush1.bf16.msra.mxu0 0
    %1702 = vmatprep.subr.bf16.mxu0 0
    %1703 = vmatpush1.bf16.msra.mxu0 0
    %1704 = vmatprep.subr.bf16.mxu0 0
    %1705 = vmatpush1.bf16.msra.mxu0 0
    %1706 = vmatprep.subr.bf16.mxu0 0
    %1707 = vmatpush1.bf16.msra.mxu0 0
    %1708 = vmatprep.subr.bf16.mxu0 0
    %1709 = vmatpush1.bf16.msra.mxu0 0
    %1710 = vmatprep.subr.bf16.mxu0 0
    %1711 = vmatpush1.bf16.msra.mxu0 0
    %1712 = vmatprep.subr.bf16.mxu0 0
    %1713 = vmatpush1.bf16.msra.mxu0 0
    %1714 = vmatprep.mubr.bf16.mxu0 0
    %1715 = vmatmul.mubr.bf16.gmra.mrb[0].mxu0 %v1680
    %v1716 = vpop.f32.mrb[0].mxu0
    %v1717 = vadd.f32 0.0, %v1716
    %v1718 = vpop.f32.mrb[0].mxu0
    %v1719 = vpop.f32.mrb[0].mxu0
    %v1720 = vpop.f32.mrb[0].mxu0
    %1721 = vdwg.mxu0
    %v1723 = vrot.slane %v1717, 1
    %v1725 = vadd.f32 %v1035, %v1723
    %v1726 = vxor.u32 %v1725, 2147483648
    %v1727 = vmul.f32 %v1726, 1.442695
    %v1728 = vpow.pop %v1727
    %v1729 = vadd.f32 %v1728, 1.0
    %v1730 = vrcp.pop %v1729
    %v1731 = vmul.f32 1.0, %v1730
    %v1732 = vtanh.pop %v1725
    %v1734 = vrot.slane %v1658, 7
    %v1736 = vmul.f32 %v1731, %v1734
    %1738 = vrot.lane.b32.xlu0 %v1732, 64
    %v1739 = vpop.permute.xlu0 %1738
    %v1741 = vmul.f32 %v1731, %v1739
    %1743 = vrot.lane.b32.xlu0 %v1741, 32
    %v1744 = vpop.permute.xlu0 %1743
    %v1746 = vadd.f32 %v1736, %v1744
    %v1747 = vtanh.pop %v1746
    %1749 = vrot.lane.b32.xlu0 %v1747, 64
    %v1750 = vpop.permute.xlu0 %1749
    %v1752 = vmul.f32 %v1731, %v1750
    %v1753 = vlaneseq
    %v1754 = vshrl.u32 %v1753, 7
    %v1755 = vsub.s32 7, %v1754
    %v1756 = vrot.slane %v1752, %v1755
    %1758 = vrot.lane.b32.xlu0 %v1756, 32
    %v1759 = vpop.permute.xlu0 %1758
    %v1761 = vsel %vm1055, %v1759, %v1673
    %v1762 = vpack.c.bf16 %v1761, %v1761
    %v1763 = vld [vmem:[%s7] sm:$0xf]
    %v1764 = vld [vmem:[%s7 + $0x4] sm:$0xf]
    %v1765 = vld [vmem:[%s7 + $0x8] sm:$0xf]
    %v1766 = vld [vmem:[%s7 + $0xc] sm:$0xf]
    %v1767 = vld [vmem:[%s8] sm:$0x1]
    %v1769 = vlaneseq
    %v1770 = vshrl.u32 %v1769, 7
    %v1771 = vsub.s32 0, %v1770
    %v1772 = vrot.slane %v1767, %v1771
    %v1778 = vunpack.c.l.b16 %v1763
    %v1779 = vunpack.c.l.b16 %v1764
    %v1780 = vunpack.c.l.b16 %v1765
    %v1781 = vunpack.c.l.b16 %v1766
    %v1782 = vpack.c.b16 %v1779, %v1778
    %v1783 = vpack.c.b16 %v1781, %v1780
    %v1787 = vsel %vm227, %v1762, 0
    %1789 = vmatprep.subr.bf16.mxu0 0
    %1790 = vmatpush1.bf16.msra.mxu0 %v1782
    %1791 = vmatprep.subr.bf16.mxu0 0
    %1792 = vmatpush1.bf16.msra.mxu0 %v1783
    %1793 = vmatprep.subr.bf16.mxu0 0
    %1794 = vmatpush1.bf16.msra.mxu0 0
    %1795 = vmatprep.subr.bf16.mxu0 0
    %1796 = vmatpush1.bf16.msra.mxu0 0
    %1797 = vmatprep.subr.bf16.mxu0 0
    %1798 = vmatpush1.bf16.msra.mxu0 0
    %1799 = vmatprep.subr.bf16.mxu0 0
    %1800 = vmatpush1.bf16.msra.mxu0 0
    %1801 = vmatprep.subr.bf16.mxu0 0
    %1802 = vmatpush1.bf16.msra.mxu0 0
    %1803 = vmatprep.subr.bf16.mxu0 0
    %1804 = vmatpush1.bf16.msra.mxu0 0
    %1805 = vmatprep.subr.bf16.mxu0 0
    %1806 = vmatpush1.bf16.msra.mxu0 0
    %1807 = vmatprep.subr.bf16.mxu0 0
    %1808 = vmatpush1.bf16.msra.mxu0 0
    %1809 = vmatprep.subr.bf16.mxu0 0
    %1810 = vmatpush1.bf16.msra.mxu0 0
    %1811 = vmatprep.subr.bf16.mxu0 0
    %1812 = vmatpush1.bf16.msra.mxu0 0
    %1813 = vmatprep.subr.bf16.mxu0 0
    %1814 = vmatpush1.bf16.msra.mxu0 0
    %1815 = vmatprep.subr.bf16.mxu0 0
    %1816 = vmatpush1.bf16.msra.mxu0 0
    %1817 = vmatprep.subr.bf16.mxu0 0
    %1818 = vmatpush1.bf16.msra.mxu0 0
    %1819 = vmatprep.subr.bf16.mxu0 0
    %1820 = vmatpush1.bf16.msra.mxu0 0
    %1821 = vmatprep.mubr.bf16.mxu0 0
    %1822 = vmatmul.mubr.bf16.gmra.mrb[0].mxu0 %v1787
    %v1823 = vpop.f32.mrb[0].mxu0
    %v1824 = vadd.f32 %v1772, %v1823
    %v1825 = vpop.f32.mrb[0].mxu0
    %v1826 = vpop.f32.mrb[0].mxu0
    %v1827 = vpop.f32.mrb[0].mxu0
    %1828 = vdwg.mxu0
    %vm1829 = vcmp.eq.s32.totalorder %v169, %v167
    %v1830 = vcvt.s32.f32 %v169
    %v1831 = vcvt.s32.f32 %v167
    %v1832 = vlaneseq
    %v1833 = vshrl.u32 %v1832, 7
    %v1834 = vsub.s32 0, %v1833
    %v1835 = vrot.slane %v1824, %v1834
    %v1836 = vsel %vm1829, %v1835, 0.0
    %vm1837 = vcmask 36864
    %v1838 = vsel %vm1837, %v1836, 0.0
    %1839 = vadd.xlane.f32.xlu0 %v1838
    %v1840 = vpop.xlane.xlu0 %1839
    %v1841 = vlaneseq
    %v1842 = vshrl.u32 %v1841, 7
    %v1843 = vsub.s32 2, %v1842
    %v1844 = vrot.slane %v1824, %v1843
    %v1845 = vsel %vm1829, %v1844, 0.0
    %v1846 = vsel %vm1837, %v1845, 0.0
    %1847 = vadd.xlane.f32.xlu0 %v1846
    %v1848 = vpop.xlane.xlu0 %1847
    %v1849 = vlaneseq
    %v1850 = vshrl.u32 %v1849, 7
    %v1851 = vsub.s32 4, %v1850
    %v1852 = vrot.slane %v1824, %v1851
    %v1853 = vsel %vm1829, %v1852, 0.0
    %v1854 = vsel %vm1837, %v1853, 0.0
    %1855 = vadd.xlane.f32.xlu0 %v1854
    %v1856 = vpop.xlane.xlu0 %1855
    %v1857 = vlaneseq
    %v1858 = vshrl.u32 %v1857, 7
    %v1859 = vsub.s32 6, %v1858
    %v1860 = vrot.slane %v1824, %v1859
    %v1861 = vsel %vm1829, %v1860, 0.0
    %v1862 = vsel %vm1837, %v1861, 0.0
    %1863 = vadd.xlane.f32.xlu0 %v1862
    %v1864 = vpop.xlane.xlu0 %1863
    %vm1865 = vcmp.eq.s32.totalorder %v169, 3
    %v1866 = vsel %vm1865, 0.0, -10000.0
    %v1867 = vadd.f32 %v1866, %v81
    %v1868 = vsel %vm1837, %v1867, -inf
    %1869 = vmax.xlane.f32.xlu0 %v1868
    %v1870 = vpop.xlane.xlu0 %1869
    %v1871 = vadd.f32 %v1870, %v1840
    %v1872 = vadd.f32 %v1871, %v82
    %v1873 = vsel %vm1837, %v1872, -inf
    %v1874 = vrot.slane %v1873, 4
    %v1875 = vmax.f32 %v1873, %v1874
    %v1876 = vrot.slane %v1875, 2
    %v1877 = vmax.f32 %v1875, %v1876
    %v1878 = vrot.slane %v1877, 1
    %v1879 = vmax.f32 %v1877, %v1878
    %vm1880 = vcmp.eq.f32.partialorder %v1872, %v1879
    %v1881 = vsel %vm1880, %v1831, 5.0
    %v1882 = vsel %vm1837, %v1881, inf
    %v1883 = vrot.slane %v1882, 4
    %v1884 = vmin.f32 %v1882, %v1883
    %v1885 = vrot.slane %v1884, 2
    %v1886 = vmin.f32 %v1884, %v1885
    %v1887 = vrot.slane %v1886, 1
    %v1888 = vmin.f32 %v1886, %v1887
    %v1889 = vcvt.f32.s32.to.zero.pseudo %v1888
    %v1890 = vadd.f32 %v1879, %v1824
    %v1891 = vlaneseq
    %v1892 = vshrl.u32 %v1891, 7
    %v1893 = vsub.s32 1, %v1892
    %v1894 = vrot.slane %v1890, %v1893
    %v1895 = vadd.f32 %v1894, %v81
    %v1896 = vsel %vm1837, %v1895, -inf
    %1897 = vmax.xlane.f32.xlu0 %v1896
    %v1898 = vpop.xlane.xlu0 %1897
    %vm1899 = vcmp.eq.f32.partialorder %v1895, %v1898
    %v1900 = vsel %vm1899, %v1830, 5.0
    %v1901 = vsel %vm1837, %v1900, inf
    %1902 = vmin.xlane.f32.xlu0 %v1901
    %v1903 = vpop.xlane.xlu0 %1902
    %v1904 = vcvt.f32.s32.to.zero.pseudo %v1903
    %v1905 = vadd.f32 %v1898, %v1848
    %v1906 = vadd.f32 %v1905, %v82
    %v1907 = vsel %vm1837, %v1906, -inf
    %v1908 = vrot.slane %v1907, 4
    %v1909 = vmax.f32 %v1907, %v1908
    %v1910 = vrot.slane %v1909, 2
    %v1911 = vmax.f32 %v1909, %v1910
    %v1912 = vrot.slane %v1911, 1
    %v1913 = vmax.f32 %v1911, %v1912
    %vm1914 = vcmp.eq.f32.partialorder %v1906, %v1913
    %v1915 = vsel %vm1914, %v1831, 5.0
    %v1916 = vsel %vm1837, %v1915, inf
    %v1917 = vrot.slane %v1916, 4
    %v1918 = vmin.f32 %v1916, %v1917
    %v1919 = vrot.slane %v1918, 2
    %v1920 = vmin.f32 %v1918, %v1919
    %v1921 = vrot.slane %v1920, 1
    %v1922 = vmin.f32 %v1920, %v1921
    %v1923 = vcvt.f32.s32.to.zero.pseudo %v1922
    %v1924 = vadd.f32 %v1913, %v1824
    %v1925 = vlaneseq
    %v1926 = vshrl.u32 %v1925, 7
    %v1927 = vsub.s32 3, %v1926
    %v1928 = vrot.slane %v1924, %v1927
    %v1929 = vadd.f32 %v1928, %v81
    %v1930 = vsel %vm1837, %v1929, -inf
    %1931 = vmax.xlane.f32.xlu0 %v1930
    %v1932 = vpop.xlane.xlu0 %1931
    %vm1933 = vcmp.eq.f32.partialorder %v1929, %v1932
    %v1934 = vsel %vm1933, %v1830, 5.0
    %v1935 = vsel %vm1837, %v1934, inf
    %1936 = vmin.xlane.f32.xlu0 %v1935
    %v1937 = vpop.xlane.xlu0 %1936
    %v1938 = vcvt.f32.s32.to.zero.pseudo %v1937
    %v1939 = vadd.f32 %v1932, %v1856
    %v1940 = vadd.f32 %v1939, %v82
    %v1941 = vsel %vm1837, %v1940, -inf
    %v1942 = vrot.slane %v1941, 4
    %v1943 = vmax.f32 %v1941, %v1942
    %v1944 = vrot.slane %v1943, 2
    %v1945 = vmax.f32 %v1943, %v1944
    %v1946 = vrot.slane %v1945, 1
    %v1947 = vmax.f32 %v1945, %v1946
    %vm1948 = vcmp.eq.f32.partialorder %v1940, %v1947
    %v1949 = vsel %vm1948, %v1831, 5.0
    %v1950 = vsel %vm1837, %v1949, inf
    %v1951 = vrot.slane %v1950, 4
    %v1952 = vmin.f32 %v1950, %v1951
    %v1953 = vrot.slane %v1952, 2
    %v1954 = vmin.f32 %v1952, %v1953
    %v1955 = vrot.slane %v1954, 1
    %v1956 = vmin.f32 %v1954, %v1955
    %v1957 = vcvt.f32.s32.to.zero.pseudo %v1956
    %v1958 = vadd.f32 %v1947, %v1824
    %v1959 = vlaneseq
    %v1960 = vshrl.u32 %v1959, 7
    %v1961 = vsub.s32 5, %v1960
    %v1962 = vrot.slane %v1958, %v1961
    %v1963 = vadd.f32 %v1962, %v81
    %v1964 = vsel %vm1837, %v1963, -inf
    %1965 = vmax.xlane.f32.xlu0 %v1964
    %v1966 = vpop.xlane.xlu0 %1965
    %vm1967 = vcmp.eq.f32.partialorder %v1963, %v1966
    %v1968 = vsel %vm1967, %v1830, 5.0
    %v1969 = vsel %vm1837, %v1968, inf
    %1970 = vmin.xlane.f32.xlu0 %v1969
    %v1971 = vpop.xlane.xlu0 %1970
    %v1972 = vcvt.f32.s32.to.zero.pseudo %v1971
    %v1973 = vadd.f32 %v1966, %v1864
    %v1974 = vadd.f32 %v1973, %v82
    %v1975 = vsel %vm1837, %v1974, -inf
    %v1976 = vrot.slane %v1975, 4
    %v1977 = vmax.f32 %v1975, %v1976
    %v1978 = vrot.slane %v1977, 2
    %v1979 = vmax.f32 %v1977, %v1978
    %v1980 = vrot.slane %v1979, 1
    %v1981 = vmax.f32 %v1979, %v1980
    %vm1982 = vcmp.eq.f32.partialorder %v1974, %v1981
    %v1983 = vsel %vm1982, %v1831, 5.0
    %v1984 = vsel %vm1837, %v1983, inf
    %v1985 = vrot.slane %v1984, 4
    %v1986 = vmin.f32 %v1984, %v1985
    %v1987 = vrot.slane %v1986, 2
    %v1988 = vmin.f32 %v1986, %v1987
    %v1989 = vrot.slane %v1988, 1
    %v1990 = vmin.f32 %v1988, %v1989
    %v1991 = vcvt.f32.s32.to.zero.pseudo %v1990
    %v1992 = vadd.f32 %v1981, %v1824
    %v1994 = vrot.slane %v81, 5
    %v1996 = vadd.f32 %v1992, %v1994
    %vm1997 = vcmask 39943
    %v1998 = vsel %vm1997, %v1996, -inf
    %1999 = vmax.xlane.f32.xlu0 %v1998
    %v2000 = vpop.xlane.xlu0 %1999
    %vm2001 = vcmp.eq.f32.partialorder %v1996, %v2000
    %v2002 = vsel %vm2001, %v1830, 5.0
    %v2003 = vsel %vm1997, %v2002, inf
    %2004 = vmin.xlane.f32.xlu0 %v2003
    %v2005 = vpop.xlane.xlu0 %2004
    %v2006 = vcvt.f32.s32.to.zero.pseudo %v2005
    %vm2007 = vcmp.eq.s32.totalorder %v169, 7
    %v2008 = vsel %vm2007, %v2006, 0
    %vm2009 = vcmp.eq.s32.totalorder %v169, %v2006
    %v2010 = vsel %vm2009, %v1991, 0
    %v2011 = vsel %vm1997, %v2010, 0
    %v2012 = vand.u32 %v2011, 65535
    %v2013 = vshrl.u32 %v2011, 16
    %v2014 = vcvt.s32.f32 %v2012
    %v2015 = vcvt.s32.f32 %v2013
    %2016 = vadd.xlane.f32.xlu0 %v2014
    %v2017 = vpop.xlane.xlu0 %2016
    %2018 = vadd.xlane.f32.xlu0 %v2015
    %v2019 = vpop.xlane.xlu0 %2018
    %v2020 = vcvt.f32.s32 %v2017
    %v2021 = vcvt.f32.s32 %v2019
    %v2022 = vshll.u32 %v2021, 16
    %v2023 = vadd.s32 %v2022, %v2020
    %vm2024 = vcmp.eq.s32.totalorder %v169, 6
    %v2025 = vsel %vm2024, %v2023, %v2008
    %v2026 = vlaneseq
    %v2027 = vshrl.u32 %v2026, 7
    %v2028 = vsub.s32 7, %v2027
    %v2029 = vrot.slane %v2023, %v2028
    %vm2030 = vcmp.eq.s32.totalorder %v167, %v2029
    %v2031 = vsel %vm2030, %v1972, 0
    %vm2032 = vcmask 1044480
    %v2033 = vsel %vm2032, %v2031, 0
    %v2034 = vrot.slane %v2033, 4
    %v2035 = vadd.s32 %v2033, %v2034
    %v2036 = vrot.slane %v2035, 2
    %v2037 = vadd.s32 %v2035, %v2036
    %v2038 = vrot.slane %v2037, 1
    %v2039 = vadd.s32 %v2037, %v2038
    %vm2040 = vcmp.eq.s32.totalorder %v169, 5
    %v2041 = vsel %vm2040, %v2039, %v2025
    %vm2042 = vcmp.eq.s32.totalorder %v169, %v2039
    %v2043 = vsel %vm2042, %v1957, 0
    %vm2044 = vcmask 39936
    %v2045 = vsel %vm2044, %v2043, 0
    %v2046 = vand.u32 %v2045, 65535
    %v2047 = vshrl.u32 %v2045, 16
    %v2048 = vcvt.s32.f32 %v2046
    %v2049 = vcvt.s32.f32 %v2047
    %2050 = vadd.xlane.f32.xlu0 %v2048
    %v2051 = vpop.xlane.xlu0 %2050
    %2052 = vadd.xlane.f32.xlu0 %v2049
    %v2053 = vpop.xlane.xlu0 %2052
    %v2054 = vcvt.f32.s32 %v2051
    %v2055 = vcvt.f32.s32 %v2053
    %v2056 = vshll.u32 %v2055, 16
    %v2057 = vadd.s32 %v2056, %v2054
    %vm2058 = vcmp.eq.s32.totalorder %v169, 4
    %v2059 = vsel %vm2058, %v2057, %v2041
    %vm2060 = vcmp.eq.s32.totalorder %v167, %v2057
    %v2061 = vsel %vm2060, %v1938, 0
    %v2062 = vsel %vm2032, %v2061, 0
    %v2063 = vrot.slane %v2062, 4
    %v2064 = vadd.s32 %v2062, %v2063
    %v2065 = vrot.slane %v2064, 2
    %v2066 = vadd.s32 %v2064, %v2065
    %v2067 = vrot.slane %v2066, 1
    %v2068 = vadd.s32 %v2066, %v2067
    %v2069 = vsel %vm1865, %v2068, %v2059
    %vm2070 = vcmp.eq.s32.totalorder %v169, %v2068
    %v2071 = vsel %vm2070, %v1923, 0
    %v2072 = vsel %vm2044, %v2071, 0
    %v2073 = vand.u32 %v2072, 65535
    %v2074 = vshrl.u32 %v2072, 16
    %v2075 = vcvt.s32.f32 %v2073
    %v2076 = vcvt.s32.f32 %v2074
    %2077 = vadd.xlane.f32.xlu0 %v2075
    %v2078 = vpop.xlane.xlu0 %2077
    %2079 = vadd.xlane.f32.xlu0 %v2076
    %v2080 = vpop.xlane.xlu0 %2079
    %v2081 = vcvt.f32.s32 %v2078
    %v2082 = vcvt.f32.s32 %v2080
    %v2083 = vshll.u32 %v2082, 16
    %v2084 = vadd.s32 %v2083, %v2081
    %vm2085 = vcmp.eq.s32.totalorder %v169, 2
    %v2086 = vsel %vm2085, %v2084, %v2069
    %vm2087 = vcmp.eq.s32.totalorder %v167, %v2084
    %v2088 = vsel %vm2087, %v1904, 0
    %v2089 = vsel %vm2032, %v2088, 0
    %v2090 = vrot.slane %v2089, 4
    %v2091 = vadd.s32 %v2089, %v2090
    %v2092 = vrot.slane %v2091, 2
    %v2093 = vadd.s32 %v2091, %v2092
    %v2094 = vrot.slane %v2093, 1
    %v2095 = vadd.s32 %v2093, %v2094
    %vm2096 = vcmp.eq.s32.totalorder %v169, 1
    %v2097 = vsel %vm2096, %v2095, %v2086
    %vm2098 = vcmp.eq.s32.totalorder %v169, %v2095
    %v2099 = vsel %vm2098, %v1889, 0
    %v2100 = vsel %vm2044, %v2099, 0
    %v2101 = vand.u32 %v2100, 65535
    %v2102 = vshrl.u32 %v2100, 16
    %v2103 = vcvt.s32.f32 %v2101
    %v2104 = vcvt.s32.f32 %v2102
    %2105 = vadd.xlane.f32.xlu0 %v2103
    %v2106 = vpop.xlane.xlu0 %2105
    %2107 = vadd.xlane.f32.xlu0 %v2104
    %v2108 = vpop.xlane.xlu0 %2107
    %v2109 = vcvt.f32.s32 %v2106
    %v2110 = vcvt.f32.s32 %v2108
    %v2111 = vshll.u32 %v2110, 16
    %v2112 = vadd.s32 %v2111, %v2109
    %vm2113 = vcmp.eq.s32.totalorder %v169, 0
    %v2114 = vsel %vm2113, %v2112, %v2097
    %vm2115 = vcmask 64519
    %2116 = vst.msk [vmem:[#allocation7 - $0x7] sm:$0x80] %vm2115, %v2114
    %vm2117 = vcmask 7175
    %2118 = vst.msk [vmem:[#allocation8 - $0x7] sm:$0x80] %vm2117, %v2000
    // Predicated region
    $region54: #{bilstm_crf_forward.1} parent=1 // pred_check
      _
    $region55: #{bilstm_crf_forward.1} parent=1 // pred_check_branch
      %2120 = sbr.rel (0) target = $region57
    $region56: #{bilstm_crf_forward.1} parent=1 // pred_region
      %s2122 = ssub.s32 16, 16
      %2123 = vsyncadd [#allocation4], %s2122
      %s2125 = sshll.u32 [#allocation7], 4
      %s2126 = int_to_ptr.vmem [resolvable:$true] %s2125
      %2128 = dma.vmem_to_hbm [thread:$0]  %s2126, 16, %s11, [#allocation4]
    $region57: #{bilstm_crf_forward.1} parent=1 // pred_fallthru
      _
    // Predicated region
    $region58: #{bilstm_crf_forward.1} parent=1 // pred_check
      _
    $region59: #{bilstm_crf_forward.1} parent=1 // pred_check_branch
      %2130 = sbr.rel (0) target = $region61
    $region60: #{bilstm_crf_forward.1} parent=1 // pred_region
      %s2132 = ssub.s32 16, 16
      %2133 = vsyncadd [#allocation9], %s2132
      %s2135 = sshll.u32 [#allocation8], 4
      %s2136 = int_to_ptr.vmem [resolvable:$true] %s2135
      %2138 = dma.vmem_to_hbm [thread:$0]  %s2136, 16, %s12, [#allocation9]
    $region61: #{bilstm_crf_forward.1} parent=1 // pred_fallthru
      _
    // Predicated region
    $region62: #{bilstm_crf_forward.1} parent=1 // pred_check
      _
    $region63: #{bilstm_crf_forward.1} parent=1 // pred_check_branch
      %2140 = sbr.rel (0) target = $region65
    $region64: #{bilstm_crf_forward.1} parent=1 // pred_region
      %2141 = dma.done [#allocation4], 16
    $region65: #{bilstm_crf_forward.1} parent=1 // pred_fallthru
      _
    // Predicated region
    $region66: #{bilstm_crf_forward.1} parent=1 // pred_check
      _
    $region67: #{bilstm_crf_forward.1} parent=1 // pred_check_branch
      %2143 = sbr.rel (0) target = $region69
    $region68: #{bilstm_crf_forward.1} parent=1 // pred_region
      %2144 = dma.done [#allocation9], 16
    $region69: #{bilstm_crf_forward.1} parent=1 // pred_fallthru
      _
    %2145 = vsyncpa [#allocation3], 1
    %2146 = vsyncpa [#allocation6], 1
    %2147 = vsyncpa [#allocation4], 1
    %2148 = vsyncpa [#allocation9], 1

</llo_original>
